<compile_context>
chip_gen: v7x
topology: tpu7x:2x2x1
jax: 0.10.0
libtpu: 0.0.40
codegen_flags: <defaults>
</compile_context>

<pallas_src>
import math
import functools

import jax
import jax.numpy as jnp
from jax.experimental import pallas as pl
from jax.experimental.pallas import tpu as pltpu

_EPS = 1e-5


def _tile_m(M, target=512):
    """Largest multiple-of-8 divisor of M that is <= target (falls back to M)."""
    if M <= target:
        return M
    t = target - (target % 8)
    while t >= 8:
        if M % t == 0:
            return t
        t -= 8
    return M


# ----------------------------------------------------------------------------
# Kernel 1: patch embed = im2col-matmul + bias + LayerNorm (tiled over tokens)
# ----------------------------------------------------------------------------

def pallas_patch_embed(cols, w, b, ln_g, ln_b):
    M, K = cols.shape
    N = w.shape[1]
    tm = _tile_m(M)

    def kernel(x_ref, w_ref, b_ref, g_ref, be_ref, o_ref):
        acc = jnp.dot(x_ref[...], w_ref[...], preferred_element_type=jnp.float32)
        acc = acc + b_ref[...]
        mu = jnp.mean(acc, axis=-1, keepdims=True)
        var = jnp.mean(jnp.square(acc - mu), axis=-1, keepdims=True)
        o_ref[...] = ((acc - mu) * jax.lax.rsqrt(var + _EPS) * g_ref[...]
                      + be_ref[...]).astype(o_ref.dtype)

    return pl.pallas_call(
        kernel,
        out_shape=jax.ShapeDtypeStruct((M, N), jnp.bfloat16),
        grid=(M // tm,),
        in_specs=[
            pl.BlockSpec((tm, K), lambda i: (i, 0)),
            pl.BlockSpec((K, N), lambda i: (0, 0)),
            pl.BlockSpec((1, N), lambda i: (0, 0)),
            pl.BlockSpec((1, N), lambda i: (0, 0)),
            pl.BlockSpec((1, N), lambda i: (0, 0)),
        ],
        out_specs=pl.BlockSpec((tm, N), lambda i: (i, 0)),
        compiler_params=pltpu.CompilerParams(dimension_semantics=("parallel",)),
    )(cols.astype(jnp.bfloat16), w, b, ln_g, ln_b)


# ----------------------------------------------------------------------------
# Kernel 2: LN1 + fused 3x depthwise 3x3 conv (q,k,v) + folded BN affine
#   Reads x once, pads inside VMEM, writes one lane-dense (B, H, W, 3C) output.
# ----------------------------------------------------------------------------

def pallas_ln_dwconv_qkv(x_sp, ln_g, ln_b, dw, bn_scale, bn_shift):
    B, H, W, C = x_sp.shape

    def kernel(x_ref, g_ref, be_ref, dw_ref, s_ref, t_ref, o_ref, pad_ref):
        xv = x_ref[0].astype(jnp.float32)                          # (H, W, C)
        mu = jnp.mean(xv, axis=-1, keepdims=True)
        var = jnp.mean(jnp.square(xv - mu), axis=-1, keepdims=True)
        xn = (xv - mu) * jax.lax.rsqrt(var + _EPS) * g_ref[...] + be_ref[...]

        # zero-padded copy built in VMEM scratch (no padded HBM tensor, x read once)
        pad_ref[...] = jnp.zeros((H + 2, W + 2, C), jnp.float32)
        pad_ref[pl.ds(1, H), pl.ds(1, W), :] = xn

        wq = dw_ref[0]                                             # (9, C)
        wk = dw_ref[1]
        wv = dw_ref[2]
        acc_q = jnp.zeros((H, W, C), jnp.float32)
        acc_k = jnp.zeros((H, W, C), jnp.float32)
        acc_v = jnp.zeros((H, W, C), jnp.float32)
        for dy in range(3):
            for dx in range(3):
                xs = pad_ref[pl.ds(dy, H), pl.ds(dx, W), :]
                t = dy * 3 + dx
                acc_q = acc_q + xs * wq[t:t + 1, :]
                acc_k = acc_k + xs * wk[t:t + 1, :]
                acc_v = acc_v + xs * wv[t:t + 1, :]

        scale = s_ref[...]
        shift = t_ref[...]
        out = jnp.concatenate([acc_q * scale + shift,
                               acc_k * scale + shift,
                               acc_v * scale + shift], axis=-1)    # (H, W, 3C)
        o_ref[0] = out.astype(o_ref.dtype)

    return pl.pallas_call(
        kernel,
        out_shape=jax.ShapeDtypeStruct((B, H, W, 3 * C), jnp.bfloat16),
        grid=(B,),
        in_specs=[
            pl.BlockSpec((1, H, W, C), lambda b: (b, 0, 0, 0)),
            pl.BlockSpec((1, C), lambda b: (0, 0)),
            pl.BlockSpec((1, C), lambda b: (0, 0)),
            pl.BlockSpec((3, 9, C), lambda b: (0, 0, 0)),
            pl.BlockSpec((1, C), lambda b: (0, 0)),
            pl.BlockSpec((1, C), lambda b: (0, 0)),
        ],
        out_specs=pl.BlockSpec((1, H, W, 3 * C), lambda b: (b, 0, 0, 0)),
        scratch_shapes=[pltpu.VMEM((H + 2, W + 2, C), jnp.float32)],
        compiler_params=pltpu.CompilerParams(dimension_semantics=("parallel",)),
    )(x_sp, ln_g, ln_b, dw, bn_scale, bn_shift)


# ----------------------------------------------------------------------------
# Kernel 3: q/k/v linear + multi-head attention + output proj + residual
#   Lane-dense (N, 3C)/(N, C) layout; heads sliced in-kernel (no XLA transposes).
# ----------------------------------------------------------------------------

def pallas_attn_block(qkv, tok, wqkv, bqkv, wo, bo, num_heads):
    B, N, C3 = qkv.shape
    C = C3 // 3
    dh = C // num_heads
    scale = dh ** -0.5
    # TODO(synk): full N x N scores kept resident per (batch); for very large N this
    # should switch to flash-style KV tiling with an online softmax.

    def kernel(qkv_ref, tok_ref, wqkv_ref, bqkv_ref, wo_ref, bo_ref, o_ref):
        qkv_v = qkv_ref[0]                                         # (N, 3C) bf16

        def proj(idx):
            xi = qkv_v[:, idx * C:(idx + 1) * C]
            return jnp.dot(xi, wqkv_ref[idx],
                           preferred_element_type=jnp.float32) + bqkv_ref[idx]

        q = proj(0) * scale          # pre-scale q (N*C work instead of N*N)
        k = proj(1)
        v = proj(2)

        heads = []
        for h in range(num_heads):
            sl = slice(h * dh, (h + 1) * dh)
            qh = q[:, sl].astype(jnp.bfloat16)
            kh = k[:, sl].astype(jnp.bfloat16)
            vh = v[:, sl].astype(jnp.bfloat16)
            s = jax.lax.dot_general(qh, kh, (((1,), (1,)), ((), ())),
                                    preferred_element_type=jnp.float32)   # (N, N)
            s = s - jnp.max(s, axis=-1, keepdims=True)
            p = jnp.exp(s)
            p = p * pl.reciprocal(jnp.sum(p, axis=-1, keepdims=True), approx=True)
            heads.append(jnp.dot(p.astype(jnp.bfloat16), vh,
                                 preferred_element_type=jnp.float32))
        o = jnp.concatenate(heads, axis=-1)                        # (N, C) f32

        out = jnp.dot(o.astype(jnp.bfloat16), wo_ref[...],
                      preferred_element_type=jnp.float32) + bo_ref[...]
        o_ref[0] = (out + tok_ref[0].astype(jnp.float32)).astype(o_ref.dtype)

    return pl.pallas_call(
        kernel,
        out_shape=jax.ShapeDtypeStruct((B, N, C), jnp.bfloat16),
        grid=(B,),
        in_specs=[
            pl.BlockSpec((1, N, 3 * C), lambda b: (b, 0, 0)),
            pl.BlockSpec((1, N, C), lambda b: (b, 0, 0)),
            pl.BlockSpec((3, C, C), lambda b: (0, 0, 0)),
            pl.BlockSpec((3, 1, C), lambda b: (0, 0, 0)),
            pl.BlockSpec((C, C), lambda b: (0, 0)),
            pl.BlockSpec((1, C), lambda b: (0, 0)),
        ],
        out_specs=pl.BlockSpec((1, N, C), lambda b: (b, 0, 0)),
        compiler_params=pltpu.CompilerParams(dimension_semantics=("parallel",)),
    )(qkv, tok, wqkv, bqkv, wo, bo)


# ----------------------------------------------------------------------------
# Kernel 4: LN2 + fc1 + GELU + fc2 + residual (tiled over tokens)
# ----------------------------------------------------------------------------

def pallas_mlp_block(tok, ln_g, ln_b, w1, b1, w2, b2):
    M, C = tok.shape
    Hd = w1.shape[1]
    tm = _tile_m(M)

    def kernel(x_ref, g_ref, be_ref, w1_ref, b1_ref, w2_ref, b2_ref, o_ref):
        xv = x_ref[...].astype(jnp.float32)
        mu = jnp.mean(xv, axis=-1, keepdims=True)
        var = jnp.mean(jnp.square(xv - mu), axis=-1, keepdims=True)
        xn = (xv - mu) * jax.lax.rsqrt(var + _EPS) * g_ref[...] + be_ref[...]
        h = jnp.dot(xn.astype(jnp.bfloat16), w1_ref[...],
                    preferred_element_type=jnp.float32) + b1_ref[...]
        # TODO(synk): PyTorch nn.GELU default is the exact erf form; tanh approximation
        # is used because tanh is guaranteed to lower on the TPU EUP.
        c = jnp.float32(math.sqrt(2.0 / math.pi))
        h = 0.5 * h * (1.0 + jnp.tanh(c * (h + 0.044715 * h * h * h)))
        y = jnp.dot(h.astype(jnp.bfloat16), w2_ref[...],
                    preferred_element_type=jnp.float32) + b2_ref[...]
        o_ref[...] = (y + xv).astype(o_ref.dtype)

    return pl.pallas_call(
        kernel,
        out_shape=jax.ShapeDtypeStruct((M, C), jnp.bfloat16),
        grid=(M // tm,),
        in_specs=[
            pl.BlockSpec((tm, C), lambda i: (i, 0)),
            pl.BlockSpec((1, C), lambda i: (0, 0)),
            pl.BlockSpec((1, C), lambda i: (0, 0)),
            pl.BlockSpec((C, Hd), lambda i: (0, 0)),
            pl.BlockSpec((1, Hd), lambda i: (0, 0)),
            pl.BlockSpec((Hd, C), lambda i: (0, 0)),
            pl.BlockSpec((1, C), lambda i: (0, 0)),
        ],
        out_specs=pl.BlockSpec((tm, C), lambda i: (i, 0)),
        compiler_params=pltpu.CompilerParams(dimension_semantics=("parallel",)),
    )(tok, ln_g, ln_b, w1, b1, w2, b2)


# ----------------------------------------------------------------------------
# Kernel 5: final LayerNorm (tiled over tokens, f32 output)
# ----------------------------------------------------------------------------

def pallas_layernorm(x, g, b):
    M, C = x.shape
    tm = _tile_m(M)

    def kernel(x_ref, g_ref, b_ref, o_ref):
        xv = x_ref[...].astype(jnp.float32)
        mu = jnp.mean(xv, axis=-1, keepdims=True)
        var = jnp.mean(jnp.square(xv - mu), axis=-1, keepdims=True)
        o_ref[...] = (xv - mu) * jax.lax.rsqrt(var + _EPS) * g_ref[...] + b_ref[...]

    return pl.pallas_call(
        kernel,
        out_shape=jax.ShapeDtypeStruct((M, C), jnp.float32),
        grid=(M // tm,),
        in_specs=[
            pl.BlockSpec((tm, C), lambda i: (i, 0)),
            pl.BlockSpec((1, C), lambda i: (0, 0)),
            pl.BlockSpec((1, C), lambda i: (0, 0)),
        ],
        out_specs=pl.BlockSpec((tm, C), lambda i: (i, 0)),
        compiler_params=pltpu.CompilerParams(dimension_semantics=("parallel",)),
    )(x, g, b)


# ----------------------------------------------------------------------------
# Glue: im2col for the strided patch-embed convolution (XLA-level, one-time)
# ----------------------------------------------------------------------------

def im2col_3x3(x_nhwc, stride, pad):
    B, H, W, Cin = x_nhwc.shape
    Ho = (H + 2 * pad - 3) // stride + 1
    Wo = (W + 2 * pad - 3) // stride + 1
    xp = jnp.pad(x_nhwc, ((0, 0), (pad, pad), (pad, pad), (0, 0)))
    cols = []
    for dy in range(3):
        for dx in range(3):
            cols.append(xp[:, dy:dy + stride * Ho:stride, dx:dx + stride * Wo:stride, :])
    cols = jnp.concatenate(cols, axis=-1)           # (B, Ho, Wo, 9*Cin), order (kh, kw, cin)
    return cols.reshape(B * Ho * Wo, 9 * Cin), Ho, Wo


# ----------------------------------------------------------------------------
# Parameter construction (deterministic, synthetic); weights in bf16, LN/bias in f32
# ----------------------------------------------------------------------------

def init_params(key, in_chans, embed_dim, depth, num_heads, mlp_ratio=4):
    C = embed_dim
    hidden = C * mlp_ratio
    keys = jax.random.split(key, 8 * depth + 8)
    ki = iter(range(len(keys)))

    def nrm(shape, scale=0.02, dtype=jnp.bfloat16):
        return (scale * jax.random.normal(keys[next(ki)], shape)).astype(dtype)

    ones_c = jnp.ones((1, C), jnp.float32)
    zeros_c = jnp.zeros((1, C), jnp.float32)
    # BatchNorm (eval mode, fresh running stats) folds to a per-channel affine:
    bn_scale = jnp.full((1, C), 1.0 / math.sqrt(1.0 + 1e-5), jnp.float32)
    bn_shift = jnp.zeros((1, C), jnp.float32)

    params = {
        "pe_w": nrm((9 * in_chans, C)),                 # (kh, kw, cin)-major rows
        "pe_b": zeros_c,
        "pe_ln_g": ones_c, "pe_ln_b": zeros_c,
        "norm_g": ones_c, "norm_b": zeros_c,
        "blocks": [],
    }
    for _ in range(depth):
        blk = {
            "ln1_g": ones_c, "ln1_b": zeros_c,
            "dw": nrm((3, 9, C), dtype=jnp.float32),    # stacked q/k/v depthwise taps
            "bn_scale": bn_scale, "bn_shift": bn_shift,
            "wqkv": nrm((3, C, C)), "bqkv": jnp.zeros((3, 1, C), jnp.float32),
            "wo": nrm((C, C)), "bo": zeros_c,
            "ln2_g": ones_c, "ln2_b": zeros_c,
            "w1": nrm((C, hidden)), "b1": jnp.zeros((1, hidden), jnp.float32),
            "w2": nrm((hidden, C)), "b2": zeros_c,
        }
        params["blocks"].append(blk)
    return params


# ----------------------------------------------------------------------------
# Forward pass (mirrors CvTStage.forward)
# ----------------------------------------------------------------------------

def cvt_block_forward(tok, B, H, W, p, num_heads):
    N = H * W
    C = tok.shape[-1]

    # LN1 + q/k/v depthwise conv projections + BN affine (one kernel, x read once)
    qkv_sp = pallas_ln_dwconv_qkv(tok.reshape(B, H, W, C),
                                  p["ln1_g"], p["ln1_b"], p["dw"],
                                  p["bn_scale"], p["bn_shift"])
    # q/k/v linear + MHA + out-proj + residual (one kernel per batch, lane-dense)
    tok3 = pallas_attn_block(qkv_sp.reshape(B, N, 3 * C), tok.reshape(B, N, C),
                             p["wqkv"], p["bqkv"], p["wo"], p["bo"], num_heads)
    # LN2 + MLP + residual (one kernel, tiled over tokens)
    tok = pallas_mlp_block(tok3.reshape(B * N, C), p["ln2_g"], p["ln2_b"],
                           p["w1"], p["b1"], p["w2"], p["b2"])
    return tok


@functools.partial(jax.jit, static_argnames=("num_heads",))
def cvt_stage_forward(x_nchw, params, num_heads=2):
    B = x_nchw.shape[0]
    x_nhwc = jnp.transpose(x_nchw, (0, 2, 3, 1)).astype(jnp.float32)

    # patch_embed: Conv2d(k=3, s=2, p=1) via im2col + fused matmul/bias/LayerNorm kernel
    cols, H, W = im2col_3x3(x_nhwc, stride=2, pad=1)
    tok = pallas_patch_embed(cols, params["pe_w"], params["pe_b"],
                             params["pe_ln_g"], params["pe_ln_b"])    # (B*N, C) bf16

    for blk in params["blocks"]:
        tok = cvt_block_forward(tok, B, H, W, blk, num_heads)

    out = pallas_layernorm(tok, params["norm_g"], params["norm_b"])   # f32
    C = out.shape[-1]
    return out.reshape(B, H * W, C), (H, W)


# ----------------------------------------------------------------------------

if __name__ == "__main__":
    key = jax.random.PRNGKey(0)
    k_x, k_p = jax.random.split(key)

    B, Cin, Hin, Win = 2, 4, 16, 16
    embed_dim, depth, num_heads = 32, 2, 2

    x = jax.random.normal(k_x, (B, Cin, Hin, Win), dtype=jnp.float32)
    params = init_params(k_p, Cin, embed_dim, depth, num_heads)

    (out, (H, W)) = cvt_stage_forward(x, params, num_heads=num_heads)
    out = jax.block_until_ready(out)

    assert out.shape == (B, H * W, embed_dim), out.shape
    assert bool(jnp.all(jnp.isfinite(out)))
    print("KERNEL_OK")
</pallas_src>

<mosaic_0001>
module attributes {stable_mosaic.version = 11 : i64} {
  func.func @kernel(%arg0: i32, %arg1: memref<128x36xbf16, #tpu.memory_space<vmem>>, %arg2: memref<36x32xbf16, #tpu.memory_space<vmem>>, %arg3: memref<1x32xf32, #tpu.memory_space<vmem>>, %arg4: memref<1x32xf32, #tpu.memory_space<vmem>>, %arg5: memref<1x32xf32, #tpu.memory_space<vmem>>, %arg6: memref<128x32xbf16, #tpu.memory_space<vmem>>) attributes {dimension_semantics = [#tpu.dimension_semantics<parallel>], iteration_bounds = array<i64: 1>, scalar_prefetch = 0 : i64, scratch_operands = 0 : i64, tpu.core_type = #tpu.core_type<tc>, window_params = [{transform_indices = @transform_0, window_bounds = array<i64: 128, 36>}, {pipeline_mode = #tpu.pipeline_mode<synchronous>, transform_indices = @transform_1, window_bounds = array<i64: 36, 32>}, {pipeline_mode = #tpu.pipeline_mode<synchronous>, transform_indices = @transform_2, window_bounds = array<i64: 1, 32>}, {pipeline_mode = #tpu.pipeline_mode<synchronous>, transform_indices = @transform_3, window_bounds = array<i64: 1, 32>}, {pipeline_mode = #tpu.pipeline_mode<synchronous>, transform_indices = @transform_4, window_bounds = array<i64: 1, 32>}, {transform_indices = @transform_5, window_bounds = array<i64: 128, 32>}]} {
    %c0 = arith.constant 0 : index
    %c0_0 = arith.constant 0 : index
    %0 = vector.load %arg1[%c0, %c0_0] : memref<128x36xbf16, #tpu.memory_space<vmem>>, vector<128x36xbf16>
    %c0_1 = arith.constant 0 : index
    %c0_2 = arith.constant 0 : index
    %1 = vector.load %arg2[%c0_1, %c0_2] : memref<36x32xbf16, #tpu.memory_space<vmem>>, vector<36x32xbf16>
    %cst = arith.constant dense<0.000000e+00> : vector<128x32xf32>
    %2 = tpu.matmul %0, %1, %cst {dimension_numbers = #tpu.dot_dimension_numbers<[1], [0], [0], [1], [0, 0, 1, 1], [], []>} : vector<128x36xbf16>, vector<36x32xbf16>, vector<128x32xf32> -> vector<128x32xf32>
    %c0_3 = arith.constant 0 : index
    %c0_4 = arith.constant 0 : index
    %3 = vector.load %arg3[%c0_3, %c0_4] : memref<1x32xf32, #tpu.memory_space<vmem>>, vector<1x32xf32>
    %4 = vector.broadcast %3 : vector<1x32xf32> to vector<128x32xf32>
    %5 = arith.addf %2, %4 : vector<128x32xf32>
    %cst_5 = arith.constant dense<0.000000e+00> : vector<128xf32>
    %6 = vector.multi_reduction <add>, %5, %cst_5 [1] : vector<128x32xf32> to vector<128xf32>
    %7 = vector.shape_cast %6 : vector<128xf32> to vector<128x1xf32>
    %cst_6 = arith.constant 3.200000e+01 : f32
    %8 = vector.broadcast %cst_6 : f32 to vector<128x1xf32>
    %9 = arith.divf %7, %8 : vector<128x1xf32>
    %10 = vector.broadcast %9 : vector<128x1xf32> to vector<128x32xf32>
    %11 = arith.subf %5, %10 : vector<128x32xf32>
    %12 = arith.mulf %11, %11 : vector<128x32xf32>
    %cst_7 = arith.constant dense<0.000000e+00> : vector<128xf32>
    %13 = vector.multi_reduction <add>, %12, %cst_7 [1] : vector<128x32xf32> to vector<128xf32>
    %14 = vector.shape_cast %13 : vector<128xf32> to vector<128x1xf32>
    %cst_8 = arith.constant 3.200000e+01 : f32
    %15 = vector.broadcast %cst_8 : f32 to vector<128x1xf32>
    %16 = arith.divf %14, %15 : vector<128x1xf32>
    %17 = vector.broadcast %9 : vector<128x1xf32> to vector<128x32xf32>
    %18 = arith.subf %5, %17 : vector<128x32xf32>
    %cst_9 = arith.constant 9.99999974E-6 : f32
    %19 = vector.broadcast %cst_9 : f32 to vector<128x1xf32>
    %20 = arith.addf %16, %19 : vector<128x1xf32>
    %21 = math.rsqrt %20 : vector<128x1xf32>
    %22 = vector.broadcast %21 : vector<128x1xf32> to vector<128x32xf32>
    %23 = arith.mulf %18, %22 : vector<128x32xf32>
    %c0_10 = arith.constant 0 : index
    %c0_11 = arith.constant 0 : index
    %24 = vector.load %arg4[%c0_10, %c0_11] : memref<1x32xf32, #tpu.memory_space<vmem>>, vector<1x32xf32>
    %25 = vector.broadcast %24 : vector<1x32xf32> to vector<128x32xf32>
    %26 = arith.mulf %23, %25 : vector<128x32xf32>
    %c0_12 = arith.constant 0 : index
    %c0_13 = arith.constant 0 : index
    %27 = vector.load %arg5[%c0_12, %c0_13] : memref<1x32xf32, #tpu.memory_space<vmem>>, vector<1x32xf32>
    %28 = vector.broadcast %27 : vector<1x32xf32> to vector<128x32xf32>
    %29 = arith.addf %26, %28 : vector<128x32xf32>
    %30 = arith.truncf %29 : vector<128x32xf32> to vector<128x32xbf16>
    %c0_14 = arith.constant 0 : index
    %c0_15 = arith.constant 0 : index
    %31 = vector.load %arg6[%c0_14, %c0_15] : memref<128x32xbf16, #tpu.memory_space<vmem>>, vector<128x32xbf16>
    tpu.vector_store %arg6[%c0_14, %c0_15], %30 {strides = array<i32>} : memref<128x32xbf16, #tpu.memory_space<vmem>>, vector<128x32xbf16>,
    return
  }
  func.func @transform_0(%arg0: i32) -> (i32, i32) {
    %c0_i32 = arith.constant 0 : i32
    %c0_i32_0 = arith.constant 0 : i32
    return %arg0, %c0_i32 : i32, i32
  }
  func.func @transform_1(%arg0: i32) -> (i32, i32) {
    %c0_i32 = arith.constant 0 : i32
    %c0_i32_0 = arith.constant 0 : i32
    %c0_i32_1 = arith.constant 0 : i32
    return %c0_i32, %c0_i32_0 : i32, i32
  }
  func.func @transform_2(%arg0: i32) -> (i32, i32) {
    %c0_i32 = arith.constant 0 : i32
    %c0_i32_0 = arith.constant 0 : i32
    %c0_i32_1 = arith.constant 0 : i32
    return %c0_i32, %c0_i32_0 : i32, i32
  }
  func.func @transform_3(%arg0: i32) -> (i32, i32) {
    %c0_i32 = arith.constant 0 : i32
    %c0_i32_0 = arith.constant 0 : i32
    %c0_i32_1 = arith.constant 0 : i32
    return %c0_i32, %c0_i32_0 : i32, i32
  }
  func.func @transform_4(%arg0: i32) -> (i32, i32) {
    %c0_i32 = arith.constant 0 : i32
    %c0_i32_0 = arith.constant 0 : i32
    %c0_i32_1 = arith.constant 0 : i32
    return %c0_i32, %c0_i32_0 : i32, i32
  }
  func.func @transform_5(%arg0: i32) -> (i32, i32) {
    %c0_i32 = arith.constant 0 : i32
    %c0_i32_0 = arith.constant 0 : i32
    return %arg0, %c0_i32 : i32, i32
  }
}

module attributes {stable_mosaic.version = 11 : i64} {
  func.func @kernel(%arg0: i32, %arg1: memref<1x64x96xbf16, #tpu.memory_space<vmem>>, %arg2: memref<1x64x32xbf16, #tpu.memory_space<vmem>>, %arg3: memref<3x32x32xbf16, #tpu.memory_space<vmem>>, %arg4: memref<3x1x32xf32, #tpu.memory_space<vmem>>, %arg5: memref<32x32xbf16, #tpu.memory_space<vmem>>, %arg6: memref<1x32xf32, #tpu.memory_space<vmem>>, %arg7: memref<1x64x32xbf16, #tpu.memory_space<vmem>>) attributes {dimension_semantics = [#tpu.dimension_semantics<parallel>], iteration_bounds = array<i64: 2>, scalar_prefetch = 0 : i64, scratch_operands = 0 : i64, tpu.core_type = #tpu.core_type<tc>, window_params = [{transform_indices = @transform_0, window_bounds = array<i64: 1, 64, 96>}, {transform_indices = @transform_1, window_bounds = array<i64: 1, 64, 32>}, {pipeline_mode = #tpu.pipeline_mode<synchronous>, transform_indices = @transform_2, window_bounds = array<i64: 3, 32, 32>}, {pipeline_mode = #tpu.pipeline_mode<synchronous>, transform_indices = @transform_3, window_bounds = array<i64: 3, 1, 32>}, {pipeline_mode = #tpu.pipeline_mode<synchronous>, transform_indices = @transform_4, window_bounds = array<i64: 32, 32>}, {pipeline_mode = #tpu.pipeline_mode<synchronous>, transform_indices = @transform_5, window_bounds = array<i64: 1, 32>}, {transform_indices = @transform_6, window_bounds = array<i64: 1, 64, 32>}]} {
    %c0 = arith.constant 0 : index
    %c0_0 = arith.constant 0 : index
    %c0_1 = arith.constant 0 : index
    %0 = vector.load %arg1[%c0, %c0_0, %c0_1] : memref<1x64x96xbf16, #tpu.memory_space<vmem>>, vector<1x64x96xbf16>
    %1 = vector.shape_cast %0 : vector<1x64x96xbf16> to vector<64x96xbf16>
    %2 = vector.extract_strided_slice %1 {offsets = [0, 0], sizes = [64, 32], strides = [1, 1]} : vector<64x96xbf16> to vector<64x32xbf16>
    %c0_2 = arith.constant 0 : index
    %c0_3 = arith.constant 0 : index
    %c0_4 = arith.constant 0 : index
    %3 = vector.load %arg3[%c0_2, %c0_3, %c0_4] : memref<3x32x32xbf16, #tpu.memory_space<vmem>>, vector<1x32x32xbf16>
    %4 = vector.shape_cast %3 : vector<1x32x32xbf16> to vector<32x32xbf16>
    %cst = arith.constant dense<0.000000e+00> : vector<64x32xf32>
    %5 = tpu.matmul %2, %4, %cst {dimension_numbers = #tpu.dot_dimension_numbers<[1], [0], [0], [1], [0, 0, 1, 1], [], []>} : vector<64x32xbf16>, vector<32x32xbf16>, vector<64x32xf32> -> vector<64x32xf32>
    %c0_5 = arith.constant 0 : index
    %c0_6 = arith.constant 0 : index
    %c0_7 = arith.constant 0 : index
    %6 = vector.load %arg4[%c0_5, %c0_6, %c0_7] : memref<3x1x32xf32, #tpu.memory_space<vmem>>, vector<1x1x32xf32>
    %7 = vector.shape_cast %6 : vector<1x1x32xf32> to vector<1x32xf32>
    %8 = vector.broadcast %7 : vector<1x32xf32> to vector<64x32xf32>
    %9 = arith.addf %5, %8 : vector<64x32xf32>
    %cst_8 = arith.constant 2.500000e-01 : f32
    %10 = vector.broadcast %cst_8 : f32 to vector<64x32xf32>
    %11 = arith.mulf %9, %10 : vector<64x32xf32>
    %12 = vector.extract_strided_slice %1 {offsets = [0, 32], sizes = [64, 32], strides = [1, 1]} : vector<64x96xbf16> to vector<64x32xbf16>
    %c1 = arith.constant 1 : index
    %c0_9 = arith.constant 0 : index
    %c0_10 = arith.constant 0 : index
    %13 = vector.load %arg3[%c1, %c0_9, %c0_10] : memref<3x32x32xbf16, #tpu.memory_space<vmem>>, vector<1x32x32xbf16>
    %14 = vector.shape_cast %13 : vector<1x32x32xbf16> to vector<32x32xbf16>
    %cst_11 = arith.constant dense<0.000000e+00> : vector<64x32xf32>
    %15 = tpu.matmul %12, %14, %cst_11 {dimension_numbers = #tpu.dot_dimension_numbers<[1], [0], [0], [1], [0, 0, 1, 1], [], []>} : vector<64x32xbf16>, vector<32x32xbf16>, vector<64x32xf32> -> vector<64x32xf32>
    %c1_12 = arith.constant 1 : index
    %c0_13 = arith.constant 0 : index
    %c0_14 = arith.constant 0 : index
    %16 = vector.load %arg4[%c1_12, %c0_13, %c0_14] : memref<3x1x32xf32, #tpu.memory_space<vmem>>, vector<1x1x32xf32>
    %17 = vector.shape_cast %16 : vector<1x1x32xf32> to vector<1x32xf32>
    %18 = vector.broadcast %17 : vector<1x32xf32> to vector<64x32xf32>
    %19 = arith.addf %15, %18 : vector<64x32xf32>
    %20 = vector.extract_strided_slice %1 {offsets = [0, 64], sizes = [64, 32], strides = [1, 1]} : vector<64x96xbf16> to vector<64x32xbf16>
    %c2 = arith.constant 2 : index
    %c0_15 = arith.constant 0 : index
    %c0_16 = arith.constant 0 : index
    %21 = vector.load %arg3[%c2, %c0_15, %c0_16] : memref<3x32x32xbf16, #tpu.memory_space<vmem>>, vector<1x32x32xbf16>
    %22 = vector.shape_cast %21 : vector<1x32x32xbf16> to vector<32x32xbf16>
    %cst_17 = arith.constant dense<0.000000e+00> : vector<64x32xf32>
    %23 = tpu.matmul %20, %22, %cst_17 {dimension_numbers = #tpu.dot_dimension_numbers<[1], [0], [0], [1], [0, 0, 1, 1], [], []>} : vector<64x32xbf16>, vector<32x32xbf16>, vector<64x32xf32> -> vector<64x32xf32>
    %c2_18 = arith.constant 2 : index
    %c0_19 = arith.constant 0 : index
    %c0_20 = arith.constant 0 : index
    %24 = vector.load %arg4[%c2_18, %c0_19, %c0_20] : memref<3x1x32xf32, #tpu.memory_space<vmem>>, vector<1x1x32xf32>
    %25 = vector.shape_cast %24 : vector<1x1x32xf32> to vector<1x32xf32>
    %26 = vector.broadcast %25 : vector<1x32xf32> to vector<64x32xf32>
    %27 = arith.addf %23, %26 : vector<64x32xf32>
    %28 = vector.extract_strided_slice %11 {offsets = [0, 0], sizes = [64, 16], strides = [1, 1]} : vector<64x32xf32> to vector<64x16xf32>
    %29 = arith.truncf %28 : vector<64x16xf32> to vector<64x16xbf16>
    %30 = vector.extract_strided_slice %19 {offsets = [0, 0], sizes = [64, 16], strides = [1, 1]} : vector<64x32xf32> to vector<64x16xf32>
    %31 = arith.truncf %30 : vector<64x16xf32> to vector<64x16xbf16>
    %32 = vector.extract_strided_slice %27 {offsets = [0, 0], sizes = [64, 16], strides = [1, 1]} : vector<64x32xf32> to vector<64x16xf32>
    %33 = arith.truncf %32 : vector<64x16xf32> to vector<64x16xbf16>
    %cst_21 = arith.constant dense<0.000000e+00> : vector<64x64xf32>
    %34 = tpu.matmul %29, %31, %cst_21 {dimension_numbers = #tpu.dot_dimension_numbers<[1], [1], [0], [0], [0, 0, 1, 0], [], []>} : vector<64x16xbf16>, vector<64x16xbf16>, vector<64x64xf32> -> vector<64x64xf32>
    %cst_22 = arith.constant dense<0xFF800000> : vector<64xf32>
    %35 = vector.multi_reduction <maximumf>, %34, %cst_22 [1] : vector<64x64xf32> to vector<64xf32>
    %36 = vector.shape_cast %35 : vector<64xf32> to vector<64x1xf32>
    %37 = vector.broadcast %36 : vector<64x1xf32> to vector<64x64xf32>
    %38 = arith.subf %34, %37 : vector<64x64xf32>
    %39 = math.exp %38 : vector<64x64xf32>
    %cst_23 = arith.constant dense<0.000000e+00> : vector<64xf32>
    %40 = vector.multi_reduction <add>, %39, %cst_23 [1] : vector<64x64xf32> to vector<64xf32>
    %41 = vector.shape_cast %40 : vector<64xf32> to vector<64x1xf32>
    %42 = tpu.reciprocal %41 {approx = true} : vector<64x1xf32> -> vector<64x1xf32>
    %43 = vector.broadcast %42 : vector<64x1xf32> to vector<64x64xf32>
    %44 = arith.mulf %39, %43 : vector<64x64xf32>
    %45 = arith.truncf %44 : vector<64x64xf32> to vector<64x64xbf16>
    %cst_24 = arith.constant dense<0.000000e+00> : vector<64x16xf32>
    %46 = tpu.matmul %45, %33, %cst_24 {dimension_numbers = #tpu.dot_dimension_numbers<[1], [0], [0], [1], [0, 0, 1, 1], [], []>} : vector<64x64xbf16>, vector<64x16xbf16>, vector<64x16xf32> -> vector<64x16xf32>
    %47 = vector.extract_strided_slice %11 {offsets = [0, 16], sizes = [64, 16], strides = [1, 1]} : vector<64x32xf32> to vector<64x16xf32>
    %48 = arith.truncf %47 : vector<64x16xf32> to vector<64x16xbf16>
    %49 = vector.extract_strided_slice %19 {offsets = [0, 16], sizes = [64, 16], strides = [1, 1]} : vector<64x32xf32> to vector<64x16xf32>
    %50 = arith.truncf %49 : vector<64x16xf32> to vector<64x16xbf16>
    %51 = vector.extract_strided_slice %27 {offsets = [0, 16], sizes = [64, 16], strides = [1, 1]} : vector<64x32xf32> to vector<64x16xf32>
    %52 = arith.truncf %51 : vector<64x16xf32> to vector<64x16xbf16>
    %cst_25 = arith.constant dense<0.000000e+00> : vector<64x64xf32>
    %53 = tpu.matmul %48, %50, %cst_25 {dimension_numbers = #tpu.dot_dimension_numbers<[1], [1], [0], [0], [0, 0, 1, 0], [], []>} : vector<64x16xbf16>, vector<64x16xbf16>, vector<64x64xf32> -> vector<64x64xf32>
    %cst_26 = arith.constant dense<0xFF800000> : vector<64xf32>
    %54 = vector.multi_reduction <maximumf>, %53, %cst_26 [1] : vector<64x64xf32> to vector<64xf32>
    %55 = vector.shape_cast %54 : vector<64xf32> to vector<64x1xf32>
    %56 = vector.broadcast %55 : vector<64x1xf32> to vector<64x64xf32>
    %57 = arith.subf %53, %56 : vector<64x64xf32>
    %58 = math.exp %57 : vector<64x64xf32>
    %cst_27 = arith.constant dense<0.000000e+00> : vector<64xf32>
    %59 = vector.multi_reduction <add>, %58, %cst_27 [1] : vector<64x64xf32> to vector<64xf32>
    %60 = vector.shape_cast %59 : vector<64xf32> to vector<64x1xf32>
    %61 = tpu.reciprocal %60 {approx = true} : vector<64x1xf32> -> vector<64x1xf32>
    %62 = vector.broadcast %61 : vector<64x1xf32> to vector<64x64xf32>
    %63 = arith.mulf %58, %62 : vector<64x64xf32>
    %64 = arith.truncf %63 : vector<64x64xf32> to vector<64x64xbf16>
    %cst_28 = arith.constant dense<0.000000e+00> : vector<64x16xf32>
    %65 = tpu.matmul %64, %52, %cst_28 {dimension_numbers = #tpu.dot_dimension_numbers<[1], [0], [0], [1], [0, 0, 1, 1], [], []>} : vector<64x64xbf16>, vector<64x16xbf16>, vector<64x16xf32> -> vector<64x16xf32>
    %66 = tpu.concatenate %46, %65 in 1 : vector<64x16xf32>, vector<64x16xf32> -> vector<64x32xf32>
    %67 = arith.truncf %66 : vector<64x32xf32> to vector<64x32xbf16>
    %c0_29 = arith.constant 0 : index
    %c0_30 = arith.constant 0 : index
    %68 = vector.load %arg5[%c0_29, %c0_30] : memref<32x32xbf16, #tpu.memory_space<vmem>>, vector<32x32xbf16>
    %cst_31 = arith.constant dense<0.000000e+00> : vector<64x32xf32>
    %69 = tpu.matmul %67, %68, %cst_31 {dimension_numbers = #tpu.dot_dimension_numbers<[1], [0], [0], [1], [0, 0, 1, 1], [], []>} : vector<64x32xbf16>, vector<32x32xbf16>, vector<64x32xf32> -> vector<64x32xf32>
    %c0_32 = arith.constant 0 : index
    %c0_33 = arith.constant 0 : index
    %70 = vector.load %arg6[%c0_32, %c0_33] : memref<1x32xf32, #tpu.memory_space<vmem>>, vector<1x32xf32>
    %71 = vector.broadcast %70 : vector<1x32xf32> to vector<64x32xf32>
    %72 = arith.addf %69, %71 : vector<64x32xf32>
    %c0_34 = arith.constant 0 : index
    %c0_35 = arith.constant 0 : index
    %c0_36 = arith.constant 0 : index
    %73 = vector.load %arg2[%c0_34, %c0_35, %c0_36] : memref<1x64x32xbf16, #tpu.memory_space<vmem>>, vector<1x64x32xbf16>
    %74 = vector.shape_cast %73 : vector<1x64x32xbf16> to vector<64x32xbf16>
    %75 = arith.extf %74 : vector<64x32xbf16> to vector<64x32xf32>
    %76 = arith.addf %72, %75 : vector<64x32xf32>
    %77 = arith.truncf %76 : vector<64x32xf32> to vector<64x32xbf16>
    %c0_37 = arith.constant 0 : index
    %c0_38 = arith.constant 0 : index
    %c0_39 = arith.constant 0 : index
    %78 = vector.load %arg7[%c0_37, %c0_38, %c0_39] : memref<1x64x32xbf16, #tpu.memory_space<vmem>>, vector<1x64x32xbf16>
    %79 = vector.shape_cast %78 : vector<1x64x32xbf16> to vector<64x32xbf16>
    %80 = vector.shape_cast %77 : vector<64x32xbf16> to vector<1x64x32xbf16>
    tpu.vector_store %arg7[%c0_37, %c0_38, %c0_39], %80 {strides = array<i32>} : memref<1x64x32xbf16, #tpu.memory_space<vmem>>, vector<1x64x32xbf16>,
    return
  }
  func.func @transform_0(%arg0: i32) -> (i32, i32, i32) {
    %c0_i32 = arith.constant 0 : i32
    %c0_i32_0 = arith.constant 0 : i32
    %c0_i32_1 = arith.constant 0 : i32
    return %arg0, %c0_i32, %c0_i32_0 : i32, i32, i32
  }
  func.func @transform_1(%arg0: i32) -> (i32, i32, i32) {
    %c0_i32 = arith.constant 0 : i32
    %c0_i32_0 = arith.constant 0 : i32
    %c0_i32_1 = arith.constant 0 : i32
    return %arg0, %c0_i32, %c0_i32_0 : i32, i32, i32
  }
  func.func @transform_2(%arg0: i32) -> (i32, i32, i32) {
    %c0_i32 = arith.constant 0 : i32
    %c0_i32_0 = arith.constant 0 : i32
    %c0_i32_1 = arith.constant 0 : i32
    %c0_i32_2 = arith.constant 0 : i32
    return %c0_i32, %c0_i32_0, %c0_i32_1 : i32, i32, i32
  }
  func.func @transform_3(%arg0: i32) -> (i32, i32, i32) {
    %c0_i32 = arith.constant 0 : i32
    %c0_i32_0 = arith.constant 0 : i32
    %c0_i32_1 = arith.constant 0 : i32
    %c0_i32_2 = arith.constant 0 : i32
    return %c0_i32, %c0_i32_0, %c0_i32_1 : i32, i32, i32
  }
  func.func @transform_4(%arg0: i32) -> (i32, i32) {
    %c0_i32 = arith.constant 0 : i32
    %c0_i32_0 = arith.constant 0 : i32
    %c0_i32_1 = arith.constant 0 : i32
    return %c0_i32, %c0_i32_0 : i32, i32
  }
  func.func @transform_5(%arg0: i32) -> (i32, i32) {
    %c0_i32 = arith.constant 0 : i32
    %c0_i32_0 = arith.constant 0 : i32
    %c0_i32_1 = arith.constant 0 : i32
    return %c0_i32, %c0_i32_0 : i32, i32
  }
  func.func @transform_6(%arg0: i32) -> (i32, i32, i32) {
    %c0_i32 = arith.constant 0 : i32
    %c0_i32_0 = arith.constant 0 : i32
    %c0_i32_1 = arith.constant 0 : i32
    return %arg0, %c0_i32, %c0_i32_0 : i32, i32, i32
  }
}

module attributes {stable_mosaic.version = 11 : i64} {
  func.func @kernel(%arg0: i32, %arg1: memref<1x8x8x32xbf16, #tpu.memory_space<vmem>>, %arg2: memref<1x32xf32, #tpu.memory_space<vmem>>, %arg3: memref<1x32xf32, #tpu.memory_space<vmem>>, %arg4: memref<3x9x32xf32, #tpu.memory_space<vmem>>, %arg5: memref<1x32xf32, #tpu.memory_space<vmem>>, %arg6: memref<1x32xf32, #tpu.memory_space<vmem>>, %arg7: memref<1x8x8x96xbf16, #tpu.memory_space<vmem>>, %arg8: memref<10x10x32xf32, #tpu.memory_space<vmem>>) attributes {dimension_semantics = [#tpu.dimension_semantics<parallel>], iteration_bounds = array<i64: 2>, scalar_prefetch = 0 : i64, scratch_operands = 1 : i64, tpu.core_type = #tpu.core_type<tc>, window_params = [{transform_indices = @transform_0, window_bounds = array<i64: 1, 8, 8, 32>}, {pipeline_mode = #tpu.pipeline_mode<synchronous>, transform_indices = @transform_1, window_bounds = array<i64: 1, 32>}, {pipeline_mode = #tpu.pipeline_mode<synchronous>, transform_indices = @transform_2, window_bounds = array<i64: 1, 32>}, {pipeline_mode = #tpu.pipeline_mode<synchronous>, transform_indices = @transform_3, window_bounds = array<i64: 3, 9, 32>}, {pipeline_mode = #tpu.pipeline_mode<synchronous>, transform_indices = @transform_4, window_bounds = array<i64: 1, 32>}, {pipeline_mode = #tpu.pipeline_mode<synchronous>, transform_indices = @transform_5, window_bounds = array<i64: 1, 32>}, {transform_indices = @transform_6, window_bounds = array<i64: 1, 8, 8, 96>}]} {
    %c0 = arith.constant 0 : index
    %c0_0 = arith.constant 0 : index
    %c0_1 = arith.constant 0 : index
    %c0_2 = arith.constant 0 : index
    %0 = vector.load %arg1[%c0, %c0_0, %c0_1, %c0_2] : memref<1x8x8x32xbf16, #tpu.memory_space<vmem>>, vector<1x8x8x32xbf16>
    %1 = vector.shape_cast %0 : vector<1x8x8x32xbf16> to vector<8x8x32xbf16>
    %2 = arith.extf %1 : vector<8x8x32xbf16> to vector<8x8x32xf32>
    %cst = arith.constant dense<0.000000e+00> : vector<8x8xf32>
    %3 = vector.multi_reduction <add>, %2, %cst [2] : vector<8x8x32xf32> to vector<8x8xf32>
    %4 = vector.shape_cast %3 : vector<8x8xf32> to vector<8x8x1xf32>
    %cst_3 = arith.constant 3.200000e+01 : f32
    %5 = vector.broadcast %cst_3 : f32 to vector<8x8x1xf32>
    %6 = arith.divf %4, %5 : vector<8x8x1xf32>
    %7 = vector.broadcast %6 : vector<8x8x1xf32> to vector<8x8x32xf32>
    %8 = arith.subf %2, %7 : vector<8x8x32xf32>
    %9 = arith.mulf %8, %8 : vector<8x8x32xf32>
    %cst_4 = arith.constant dense<0.000000e+00> : vector<8x8xf32>
    %10 = vector.multi_reduction <add>, %9, %cst_4 [2] : vector<8x8x32xf32> to vector<8x8xf32>
    %11 = vector.shape_cast %10 : vector<8x8xf32> to vector<8x8x1xf32>
    %cst_5 = arith.constant 3.200000e+01 : f32
    %12 = vector.broadcast %cst_5 : f32 to vector<8x8x1xf32>
    %13 = arith.divf %11, %12 : vector<8x8x1xf32>
    %14 = vector.broadcast %6 : vector<8x8x1xf32> to vector<8x8x32xf32>
    %15 = arith.subf %2, %14 : vector<8x8x32xf32>
    %cst_6 = arith.constant 9.99999974E-6 : f32
    %16 = vector.broadcast %cst_6 : f32 to vector<8x8x1xf32>
    %17 = arith.addf %13, %16 : vector<8x8x1xf32>
    %18 = math.rsqrt %17 : vector<8x8x1xf32>
    %19 = vector.broadcast %18 : vector<8x8x1xf32> to vector<8x8x32xf32>
    %20 = arith.mulf %15, %19 : vector<8x8x32xf32>
    %c0_7 = arith.constant 0 : index
    %c0_8 = arith.constant 0 : index
    %21 = vector.load %arg2[%c0_7, %c0_8] : memref<1x32xf32, #tpu.memory_space<vmem>>, vector<1x32xf32>
    %22 = vector.shape_cast %21 : vector<1x32xf32> to vector<1x1x32xf32>
    %23 = vector.broadcast %22 : vector<1x1x32xf32> to vector<8x8x32xf32>
    %24 = arith.mulf %20, %23 : vector<8x8x32xf32>
    %c0_9 = arith.constant 0 : index
    %c0_10 = arith.constant 0 : index
    %25 = vector.load %arg3[%c0_9, %c0_10] : memref<1x32xf32, #tpu.memory_space<vmem>>, vector<1x32xf32>
    %26 = vector.shape_cast %25 : vector<1x32xf32> to vector<1x1x32xf32>
    %27 = vector.broadcast %26 : vector<1x1x32xf32> to vector<8x8x32xf32>
    %28 = arith.addf %24, %27 : vector<8x8x32xf32>
    %cst_11 = arith.constant 0.000000e+00 : f32
    %29 = vector.broadcast %cst_11 : f32 to vector<10x10x32xf32>
    %c0_12 = arith.constant 0 : index
    %c0_13 = arith.constant 0 : index
    %c0_14 = arith.constant 0 : index
    %30 = vector.load %arg8[%c0_12, %c0_13, %c0_14] : memref<10x10x32xf32, #tpu.memory_space<vmem>>, vector<10x10x32xf32>
    tpu.vector_store %arg8[%c0_12, %c0_13, %c0_14], %29 {strides = array<i32>} : memref<10x10x32xf32, #tpu.memory_space<vmem>>, vector<10x10x32xf32>,
    %c1 = arith.constant 1 : index
    %c1_15 = arith.constant 1 : index
    %c0_16 = arith.constant 0 : index
    %31 = vector.load %arg8[%c1, %c1_15, %c0_16] : memref<10x10x32xf32, #tpu.memory_space<vmem>>, vector<8x8x32xf32>
    tpu.vector_store %arg8[%c1, %c1_15, %c0_16], %28 {strides = array<i32>} : memref<10x10x32xf32, #tpu.memory_space<vmem>>, vector<8x8x32xf32>,
    %c0_17 = arith.constant 0 : index
    %c0_18 = arith.constant 0 : index
    %c0_19 = arith.constant 0 : index
    %32 = vector.load %arg4[%c0_17, %c0_18, %c0_19] : memref<3x9x32xf32, #tpu.memory_space<vmem>>, vector<1x9x32xf32>
    %33 = vector.shape_cast %32 : vector<1x9x32xf32> to vector<9x32xf32>
    %c1_20 = arith.constant 1 : index
    %c0_21 = arith.constant 0 : index
    %c0_22 = arith.constant 0 : index
    %34 = vector.load %arg4[%c1_20, %c0_21, %c0_22] : memref<3x9x32xf32, #tpu.memory_space<vmem>>, vector<1x9x32xf32>
    %35 = vector.shape_cast %34 : vector<1x9x32xf32> to vector<9x32xf32>
    %c2 = arith.constant 2 : index
    %c0_23 = arith.constant 0 : index
    %c0_24 = arith.constant 0 : index
    %36 = vector.load %arg4[%c2, %c0_23, %c0_24] : memref<3x9x32xf32, #tpu.memory_space<vmem>>, vector<1x9x32xf32>
    %37 = vector.shape_cast %36 : vector<1x9x32xf32> to vector<9x32xf32>
    %cst_25 = arith.constant 0.000000e+00 : f32
    %38 = vector.broadcast %cst_25 : f32 to vector<8x8x32xf32>
    %cst_26 = arith.constant 0.000000e+00 : f32
    %39 = vector.broadcast %cst_26 : f32 to vector<8x8x32xf32>
    %cst_27 = arith.constant 0.000000e+00 : f32
    %40 = vector.broadcast %cst_27 : f32 to vector<8x8x32xf32>
    %c0_28 = arith.constant 0 : index
    %c0_29 = arith.constant 0 : index
    %c0_30 = arith.constant 0 : index
    %41 = vector.load %arg8[%c0_28, %c0_29, %c0_30] : memref<10x10x32xf32, #tpu.memory_space<vmem>>, vector<8x8x32xf32>
    %42 = vector.extract_strided_slice %33 {offsets = [0, 0], sizes = [1, 32], strides = [1, 1]} : vector<9x32xf32> to vector<1x32xf32>
    %43 = vector.shape_cast %42 : vector<1x32xf32> to vector<1x1x32xf32>
    %44 = vector.broadcast %43 : vector<1x1x32xf32> to vector<8x8x32xf32>
    %45 = arith.mulf %41, %44 : vector<8x8x32xf32>
    %46 = arith.addf %38, %45 : vector<8x8x32xf32>
    %47 = vector.extract_strided_slice %35 {offsets = [0, 0], sizes = [1, 32], strides = [1, 1]} : vector<9x32xf32> to vector<1x32xf32>
    %48 = vector.shape_cast %47 : vector<1x32xf32> to vector<1x1x32xf32>
    %49 = vector.broadcast %48 : vector<1x1x32xf32> to vector<8x8x32xf32>
    %50 = arith.mulf %41, %49 : vector<8x8x32xf32>
    %51 = arith.addf %39, %50 : vector<8x8x32xf32>
    %52 = vector.extract_strided_slice %37 {offsets = [0, 0], sizes = [1, 32], strides = [1, 1]} : vector<9x32xf32> to vector<1x32xf32>
    %53 = vector.shape_cast %52 : vector<1x32xf32> to vector<1x1x32xf32>
    %54 = vector.broadcast %53 : vector<1x1x32xf32> to vector<8x8x32xf32>
    %55 = arith.mulf %41, %54 : vector<8x8x32xf32>
    %56 = arith.addf %40, %55 : vector<8x8x32xf32>
    %c0_31 = arith.constant 0 : index
    %c1_32 = arith.constant 1 : index
    %c0_33 = arith.constant 0 : index
    %57 = vector.load %arg8[%c0_31, %c1_32, %c0_33] : memref<10x10x32xf32, #tpu.memory_space<vmem>>, vector<8x8x32xf32>
    %58 = vector.extract_strided_slice %33 {offsets = [1, 0], sizes = [1, 32], strides = [1, 1]} : vector<9x32xf32> to vector<1x32xf32>
    %59 = vector.shape_cast %58 : vector<1x32xf32> to vector<1x1x32xf32>
    %60 = vector.broadcast %59 : vector<1x1x32xf32> to vector<8x8x32xf32>
    %61 = arith.mulf %57, %60 : vector<8x8x32xf32>
    %62 = arith.addf %46, %61 : vector<8x8x32xf32>
    %63 = vector.extract_strided_slice %35 {offsets = [1, 0], sizes = [1, 32], strides = [1, 1]} : vector<9x32xf32> to vector<1x32xf32>
    %64 = vector.shape_cast %63 : vector<1x32xf32> to vector<1x1x32xf32>
    %65 = vector.broadcast %64 : vector<1x1x32xf32> to vector<8x8x32xf32>
    %66 = arith.mulf %57, %65 : vector<8x8x32xf32>
    %67 = arith.addf %51, %66 : vector<8x8x32xf32>
    %68 = vector.extract_strided_slice %37 {offsets = [1, 0], sizes = [1, 32], strides = [1, 1]} : vector<9x32xf32> to vector<1x32xf32>
    %69 = vector.shape_cast %68 : vector<1x32xf32> to vector<1x1x32xf32>
    %70 = vector.broadcast %69 : vector<1x1x32xf32> to vector<8x8x32xf32>
    %71 = arith.mulf %57, %70 : vector<8x8x32xf32>
    %72 = arith.addf %56, %71 : vector<8x8x32xf32>
    %c0_34 = arith.constant 0 : index
    %c2_35 = arith.constant 2 : index
    %c0_36 = arith.constant 0 : index
    %73 = vector.load %arg8[%c0_34, %c2_35, %c0_36] : memref<10x10x32xf32, #tpu.memory_space<vmem>>, vector<8x8x32xf32>
    %74 = vector.extract_strided_slice %33 {offsets = [2, 0], sizes = [1, 32], strides = [1, 1]} : vector<9x32xf32> to vector<1x32xf32>
    %75 = vector.shape_cast %74 : vector<1x32xf32> to vector<1x1x32xf32>
    %76 = vector.broadcast %75 : vector<1x1x32xf32> to vector<8x8x32xf32>
    %77 = arith.mulf %73, %76 : vector<8x8x32xf32>
    %78 = arith.addf %62, %77 : vector<8x8x32xf32>
    %79 = vector.extract_strided_slice %35 {offsets = [2, 0], sizes = [1, 32], strides = [1, 1]} : vector<9x32xf32> to vector<1x32xf32>
    %80 = vector.shape_cast %79 : vector<1x32xf32> to vector<1x1x32xf32>
    %81 = vector.broadcast %80 : vector<1x1x32xf32> to vector<8x8x32xf32>
    %82 = arith.mulf %73, %81 : vector<8x8x32xf32>
    %83 = arith.addf %67, %82 : vector<8x8x32xf32>
    %84 = vector.extract_strided_slice %37 {offsets = [2, 0], sizes = [1, 32], strides = [1, 1]} : vector<9x32xf32> to vector<1x32xf32>
    %85 = vector.shape_cast %84 : vector<1x32xf32> to vector<1x1x32xf32>
    %86 = vector.broadcast %85 : vector<1x1x32xf32> to vector<8x8x32xf32>
    %87 = arith.mulf %73, %86 : vector<8x8x32xf32>
    %88 = arith.addf %72, %87 : vector<8x8x32xf32>
    %c1_37 = arith.constant 1 : index
    %c0_38 = arith.constant 0 : index
    %c0_39 = arith.constant 0 : index
    %89 = vector.load %arg8[%c1_37, %c0_38, %c0_39] : memref<10x10x32xf32, #tpu.memory_space<vmem>>, vector<8x8x32xf32>
    %90 = vector.extract_strided_slice %33 {offsets = [3, 0], sizes = [1, 32], strides = [1, 1]} : vector<9x32xf32> to vector<1x32xf32>
    %91 = vector.shape_cast %90 : vector<1x32xf32> to vector<1x1x32xf32>
    %92 = vector.broadcast %91 : vector<1x1x32xf32> to vector<8x8x32xf32>
    %93 = arith.mulf %89, %92 : vector<8x8x32xf32>
    %94 = arith.addf %78, %93 : vector<8x8x32xf32>
    %95 = vector.extract_strided_slice %35 {offsets = [3, 0], sizes = [1, 32], strides = [1, 1]} : vector<9x32xf32> to vector<1x32xf32>
    %96 = vector.shape_cast %95 : vector<1x32xf32> to vector<1x1x32xf32>
    %97 = vector.broadcast %96 : vector<1x1x32xf32> to vector<8x8x32xf32>
    %98 = arith.mulf %89, %97 : vector<8x8x32xf32>
    %99 = arith.addf %83, %98 : vector<8x8x32xf32>
    %100 = vector.extract_strided_slice %37 {offsets = [3, 0], sizes = [1, 32], strides = [1, 1]} : vector<9x32xf32> to vector<1x32xf32>
    %101 = vector.shape_cast %100 : vector<1x32xf32> to vector<1x1x32xf32>
    %102 = vector.broadcast %101 : vector<1x1x32xf32> to vector<8x8x32xf32>
    %103 = arith.mulf %89, %102 : vector<8x8x32xf32>
    %104 = arith.addf %88, %103 : vector<8x8x32xf32>
    %c1_40 = arith.constant 1 : index
    %c1_41 = arith.constant 1 : index
    %c0_42 = arith.constant 0 : index
    %105 = vector.load %arg8[%c1_40, %c1_41, %c0_42] : memref<10x10x32xf32, #tpu.memory_space<vmem>>, vector<8x8x32xf32>
    %106 = vector.extract_strided_slice %33 {offsets = [4, 0], sizes = [1, 32], strides = [1, 1]} : vector<9x32xf32> to vector<1x32xf32>
    %107 = vector.shape_cast %106 : vector<1x32xf32> to vector<1x1x32xf32>
    %108 = vector.broadcast %107 : vector<1x1x32xf32> to vector<8x8x32xf32>
    %109 = arith.mulf %105, %108 : vector<8x8x32xf32>
    %110 = arith.addf %94, %109 : vector<8x8x32xf32>
    %111 = vector.extract_strided_slice %35 {offsets = [4, 0], sizes = [1, 32], strides = [1, 1]} : vector<9x32xf32> to vector<1x32xf32>
    %112 = vector.shape_cast %111 : vector<1x32xf32> to vector<1x1x32xf32>
    %113 = vector.broadcast %112 : vector<1x1x32xf32> to vector<8x8x32xf32>
    %114 = arith.mulf %105, %113 : vector<8x8x32xf32>
    %115 = arith.addf %99, %114 : vector<8x8x32xf32>
    %116 = vector.extract_strided_slice %37 {offsets = [4, 0], sizes = [1, 32], strides = [1, 1]} : vector<9x32xf32> to vector<1x32xf32>
    %117 = vector.shape_cast %116 : vector<1x32xf32> to vector<1x1x32xf32>
    %118 = vector.broadcast %117 : vector<1x1x32xf32> to vector<8x8x32xf32>
    %119 = arith.mulf %105, %118 : vector<8x8x32xf32>
    %120 = arith.addf %104, %119 : vector<8x8x32xf32>
    %c1_43 = arith.constant 1 : index
    %c2_44 = arith.constant 2 : index
    %c0_45 = arith.constant 0 : index
    %121 = vector.load %arg8[%c1_43, %c2_44, %c0_45] : memref<10x10x32xf32, #tpu.memory_space<vmem>>, vector<8x8x32xf32>
    %122 = vector.extract_strided_slice %33 {offsets = [5, 0], sizes = [1, 32], strides = [1, 1]} : vector<9x32xf32> to vector<1x32xf32>
    %123 = vector.shape_cast %122 : vector<1x32xf32> to vector<1x1x32xf32>
    %124 = vector.broadcast %123 : vector<1x1x32xf32> to vector<8x8x32xf32>
    %125 = arith.mulf %121, %124 : vector<8x8x32xf32>
    %126 = arith.addf %110, %125 : vector<8x8x32xf32>
    %127 = vector.extract_strided_slice %35 {offsets = [5, 0], sizes = [1, 32], strides = [1, 1]} : vector<9x32xf32> to vector<1x32xf32>
    %128 = vector.shape_cast %127 : vector<1x32xf32> to vector<1x1x32xf32>
    %129 = vector.broadcast %128 : vector<1x1x32xf32> to vector<8x8x32xf32>
    %130 = arith.mulf %121, %129 : vector<8x8x32xf32>
    %131 = arith.addf %115, %130 : vector<8x8x32xf32>
    %132 = vector.extract_strided_slice %37 {offsets = [5, 0], sizes = [1, 32], strides = [1, 1]} : vector<9x32xf32> to vector<1x32xf32>
    %133 = vector.shape_cast %132 : vector<1x32xf32> to vector<1x1x32xf32>
    %134 = vector.broadcast %133 : vector<1x1x32xf32> to vector<8x8x32xf32>
    %135 = arith.mulf %121, %134 : vector<8x8x32xf32>
    %136 = arith.addf %120, %135 : vector<8x8x32xf32>
    %c2_46 = arith.constant 2 : index
    %c0_47 = arith.constant 0 : index
    %c0_48 = arith.constant 0 : index
    %137 = vector.load %arg8[%c2_46, %c0_47, %c0_48] : memref<10x10x32xf32, #tpu.memory_space<vmem>>, vector<8x8x32xf32>
    %138 = vector.extract_strided_slice %33 {offsets = [6, 0], sizes = [1, 32], strides = [1, 1]} : vector<9x32xf32> to vector<1x32xf32>
    %139 = vector.shape_cast %138 : vector<1x32xf32> to vector<1x1x32xf32>
    %140 = vector.broadcast %139 : vector<1x1x32xf32> to vector<8x8x32xf32>
    %141 = arith.mulf %137, %140 : vector<8x8x32xf32>
    %142 = arith.addf %126, %141 : vector<8x8x32xf32>
    %143 = vector.extract_strided_slice %35 {offsets = [6, 0], sizes = [1, 32], strides = [1, 1]} : vector<9x32xf32> to vector<1x32xf32>
    %144 = vector.shape_cast %143 : vector<1x32xf32> to vector<1x1x32xf32>
    %145 = vector.broadcast %144 : vector<1x1x32xf32> to vector<8x8x32xf32>
    %146 = arith.mulf %137, %145 : vector<8x8x32xf32>
    %147 = arith.addf %131, %146 : vector<8x8x32xf32>
    %148 = vector.extract_strided_slice %37 {offsets = [6, 0], sizes = [1, 32], strides = [1, 1]} : vector<9x32xf32> to vector<1x32xf32>
    %149 = vector.shape_cast %148 : vector<1x32xf32> to vector<1x1x32xf32>
    %150 = vector.broadcast %149 : vector<1x1x32xf32> to vector<8x8x32xf32>
    %151 = arith.mulf %137, %150 : vector<8x8x32xf32>
    %152 = arith.addf %136, %151 : vector<8x8x32xf32>
    %c2_49 = arith.constant 2 : index
    %c1_50 = arith.constant 1 : index
    %c0_51 = arith.constant 0 : index
    %153 = vector.load %arg8[%c2_49, %c1_50, %c0_51] : memref<10x10x32xf32, #tpu.memory_space<vmem>>, vector<8x8x32xf32>
    %154 = vector.extract_strided_slice %33 {offsets = [7, 0], sizes = [1, 32], strides = [1, 1]} : vector<9x32xf32> to vector<1x32xf32>
    %155 = vector.shape_cast %154 : vector<1x32xf32> to vector<1x1x32xf32>
    %156 = vector.broadcast %155 : vector<1x1x32xf32> to vector<8x8x32xf32>
    %157 = arith.mulf %153, %156 : vector<8x8x32xf32>
    %158 = arith.addf %142, %157 : vector<8x8x32xf32>
    %159 = vector.extract_strided_slice %35 {offsets = [7, 0], sizes = [1, 32], strides = [1, 1]} : vector<9x32xf32> to vector<1x32xf32>
    %160 = vector.shape_cast %159 : vector<1x32xf32> to vector<1x1x32xf32>
    %161 = vector.broadcast %160 : vector<1x1x32xf32> to vector<8x8x32xf32>
    %162 = arith.mulf %153, %161 : vector<8x8x32xf32>
    %163 = arith.addf %147, %162 : vector<8x8x32xf32>
    %164 = vector.extract_strided_slice %37 {offsets = [7, 0], sizes = [1, 32], strides = [1, 1]} : vector<9x32xf32> to vector<1x32xf32>
    %165 = vector.shape_cast %164 : vector<1x32xf32> to vector<1x1x32xf32>
    %166 = vector.broadcast %165 : vector<1x1x32xf32> to vector<8x8x32xf32>
    %167 = arith.mulf %153, %166 : vector<8x8x32xf32>
    %168 = arith.addf %152, %167 : vector<8x8x32xf32>
    %c2_52 = arith.constant 2 : index
    %c2_53 = arith.constant 2 : index
    %c0_54 = arith.constant 0 : index
    %169 = vector.load %arg8[%c2_52, %c2_53, %c0_54] : memref<10x10x32xf32, #tpu.memory_space<vmem>>, vector<8x8x32xf32>
    %170 = vector.extract_strided_slice %33 {offsets = [8, 0], sizes = [1, 32], strides = [1, 1]} : vector<9x32xf32> to vector<1x32xf32>
    %171 = vector.shape_cast %170 : vector<1x32xf32> to vector<1x1x32xf32>
    %172 = vector.broadcast %171 : vector<1x1x32xf32> to vector<8x8x32xf32>
    %173 = arith.mulf %169, %172 : vector<8x8x32xf32>
    %174 = arith.addf %158, %173 : vector<8x8x32xf32>
    %175 = vector.extract_strided_slice %35 {offsets = [8, 0], sizes = [1, 32], strides = [1, 1]} : vector<9x32xf32> to vector<1x32xf32>
    %176 = vector.shape_cast %175 : vector<1x32xf32> to vector<1x1x32xf32>
    %177 = vector.broadcast %176 : vector<1x1x32xf32> to vector<8x8x32xf32>
    %178 = arith.mulf %169, %177 : vector<8x8x32xf32>
    %179 = arith.addf %163, %178 : vector<8x8x32xf32>
    %180 = vector.extract_strided_slice %37 {offsets = [8, 0], sizes = [1, 32], strides = [1, 1]} : vector<9x32xf32> to vector<1x32xf32>
    %181 = vector.shape_cast %180 : vector<1x32xf32> to vector<1x1x32xf32>
    %182 = vector.broadcast %181 : vector<1x1x32xf32> to vector<8x8x32xf32>
    %183 = arith.mulf %169, %182 : vector<8x8x32xf32>
    %184 = arith.addf %168, %183 : vector<8x8x32xf32>
    %c0_55 = arith.constant 0 : index
    %c0_56 = arith.constant 0 : index
    %185 = vector.load %arg5[%c0_55, %c0_56] : memref<1x32xf32, #tpu.memory_space<vmem>>, vector<1x32xf32>
    %c0_57 = arith.constant 0 : index
    %c0_58 = arith.constant 0 : index
    %186 = vector.load %arg6[%c0_57, %c0_58] : memref<1x32xf32, #tpu.memory_space<vmem>>, vector<1x32xf32>
    %187 = vector.shape_cast %185 : vector<1x32xf32> to vector<1x1x32xf32>
    %188 = vector.broadcast %187 : vector<1x1x32xf32> to vector<8x8x32xf32>
    %189 = arith.mulf %174, %188 : vector<8x8x32xf32>
    %190 = vector.shape_cast %186 : vector<1x32xf32> to vector<1x1x32xf32>
    %191 = vector.broadcast %190 : vector<1x1x32xf32> to vector<8x8x32xf32>
    %192 = arith.addf %189, %191 : vector<8x8x32xf32>
    %193 = vector.shape_cast %185 : vector<1x32xf32> to vector<1x1x32xf32>
    %194 = vector.broadcast %193 : vector<1x1x32xf32> to vector<8x8x32xf32>
    %195 = arith.mulf %179, %194 : vector<8x8x32xf32>
    %196 = vector.shape_cast %186 : vector<1x32xf32> to vector<1x1x32xf32>
    %197 = vector.broadcast %196 : vector<1x1x32xf32> to vector<8x8x32xf32>
    %198 = arith.addf %195, %197 : vector<8x8x32xf32>
    %199 = vector.shape_cast %185 : vector<1x32xf32> to vector<1x1x32xf32>
    %200 = vector.broadcast %199 : vector<1x1x32xf32> to vector<8x8x32xf32>
    %201 = arith.mulf %184, %200 : vector<8x8x32xf32>
    %202 = vector.shape_cast %186 : vector<1x32xf32> to vector<1x1x32xf32>
    %203 = vector.broadcast %202 : vector<1x1x32xf32> to vector<8x8x32xf32>
    %204 = arith.addf %201, %203 : vector<8x8x32xf32>
    %205 = tpu.concatenate %192, %198, %204 in 2 : vector<8x8x32xf32>, vector<8x8x32xf32>, vector<8x8x32xf32> -> vector<8x8x96xf32>
    %206 = arith.truncf %205 : vector<8x8x96xf32> to vector<8x8x96xbf16>
    %c0_59 = arith.constant 0 : index
    %c0_60 = arith.constant 0 : index
    %c0_61 = arith.constant 0 : index
    %c0_62 = arith.constant 0 : index
    %207 = vector.load %arg7[%c0_59, %c0_60, %c0_61, %c0_62] : memref<1x8x8x96xbf16, #tpu.memory_space<vmem>>, vector<1x8x8x96xbf16>
    %208 = vector.shape_cast %207 : vector<1x8x8x96xbf16> to vector<8x8x96xbf16>
    %209 = vector.shape_cast %206 : vector<8x8x96xbf16> to vector<1x8x8x96xbf16>
    tpu.vector_store %arg7[%c0_59, %c0_60, %c0_61, %c0_62], %209 {strides = array<i32>} : memref<1x8x8x96xbf16, #tpu.memory_space<vmem>>, vector<1x8x8x96xbf16>,
    return
  }
  func.func @transform_0(%arg0: i32) -> (i32, i32, i32, i32) {
    %c0_i32 = arith.constant 0 : i32
    %c0_i32_0 = arith.constant 0 : i32
    %c0_i32_1 = arith.constant 0 : i32
    %c0_i32_2 = arith.constant 0 : i32
    return %arg0, %c0_i32, %c0_i32_0, %c0_i32_1 : i32, i32, i32, i32
  }
  func.func @transform_1(%arg0: i32) -> (i32, i32) {
    %c0_i32 = arith.constant 0 : i32
    %c0_i32_0 = arith.constant 0 : i32
    %c0_i32_1 = arith.constant 0 : i32
    return %c0_i32, %c0_i32_0 : i32, i32
  }
  func.func @transform_2(%arg0: i32) -> (i32, i32) {
    %c0_i32 = arith.constant 0 : i32
    %c0_i32_0 = arith.constant 0 : i32
    %c0_i32_1 = arith.constant 0 : i32
    return %c0_i32, %c0_i32_0 : i32, i32
  }
  func.func @transform_3(%arg0: i32) -> (i32, i32, i32) {
    %c0_i32 = arith.constant 0 : i32
    %c0_i32_0 = arith.constant 0 : i32
    %c0_i32_1 = arith.constant 0 : i32
    %c0_i32_2 = arith.constant 0 : i32
    return %c0_i32, %c0_i32_0, %c0_i32_1 : i32, i32, i32
  }
  func.func @transform_4(%arg0: i32) -> (i32, i32) {
    %c0_i32 = arith.constant 0 : i32
    %c0_i32_0 = arith.constant 0 : i32
    %c0_i32_1 = arith.constant 0 : i32
    return %c0_i32, %c0_i32_0 : i32, i32
  }
  func.func @transform_5(%arg0: i32) -> (i32, i32) {
    %c0_i32 = arith.constant 0 : i32
    %c0_i32_0 = arith.constant 0 : i32
    %c0_i32_1 = arith.constant 0 : i32
    return %c0_i32, %c0_i32_0 : i32, i32
  }
  func.func @transform_6(%arg0: i32) -> (i32, i32, i32, i32) {
    %c0_i32 = arith.constant 0 : i32
    %c0_i32_0 = arith.constant 0 : i32
    %c0_i32_1 = arith.constant 0 : i32
    %c0_i32_2 = arith.constant 0 : i32
    return %arg0, %c0_i32, %c0_i32_0, %c0_i32_1 : i32, i32, i32, i32
  }
}

module attributes {stable_mosaic.version = 11 : i64} {
  func.func @kernel(%arg0: i32, %arg1: memref<128x32xbf16, #tpu.memory_space<vmem>>, %arg2: memref<1x32xf32, #tpu.memory_space<vmem>>, %arg3: memref<1x32xf32, #tpu.memory_space<vmem>>, %arg4: memref<32x128xbf16, #tpu.memory_space<vmem>>, %arg5: memref<1x128xf32, #tpu.memory_space<vmem>>, %arg6: memref<128x32xbf16, #tpu.memory_space<vmem>>, %arg7: memref<1x32xf32, #tpu.memory_space<vmem>>, %arg8: memref<128x32xbf16, #tpu.memory_space<vmem>>) attributes {dimension_semantics = [#tpu.dimension_semantics<parallel>], iteration_bounds = array<i64: 1>, scalar_prefetch = 0 : i64, scratch_operands = 0 : i64, tpu.core_type = #tpu.core_type<tc>, window_params = [{transform_indices = @transform_0, window_bounds = array<i64: 128, 32>}, {pipeline_mode = #tpu.pipeline_mode<synchronous>, transform_indices = @transform_1, window_bounds = array<i64: 1, 32>}, {pipeline_mode = #tpu.pipeline_mode<synchronous>, transform_indices = @transform_2, window_bounds = array<i64: 1, 32>}, {pipeline_mode = #tpu.pipeline_mode<synchronous>, transform_indices = @transform_3, window_bounds = array<i64: 32, 128>}, {pipeline_mode = #tpu.pipeline_mode<synchronous>, transform_indices = @transform_4, window_bounds = array<i64: 1, 128>}, {pipeline_mode = #tpu.pipeline_mode<synchronous>, transform_indices = @transform_5, window_bounds = array<i64: 128, 32>}, {pipeline_mode = #tpu.pipeline_mode<synchronous>, transform_indices = @transform_6, window_bounds = array<i64: 1, 32>}, {transform_indices = @transform_7, window_bounds = array<i64: 128, 32>}]} {
    %c0 = arith.constant 0 : index
    %c0_0 = arith.constant 0 : index
    %0 = vector.load %arg1[%c0, %c0_0] : memref<128x32xbf16, #tpu.memory_space<vmem>>, vector<128x32xbf16>
    %1 = arith.extf %0 : vector<128x32xbf16> to vector<128x32xf32>
    %cst = arith.constant dense<0.000000e+00> : vector<128xf32>
    %2 = vector.multi_reduction <add>, %1, %cst [1] : vector<128x32xf32> to vector<128xf32>
    %3 = vector.shape_cast %2 : vector<128xf32> to vector<128x1xf32>
    %cst_1 = arith.constant 3.200000e+01 : f32
    %4 = vector.broadcast %cst_1 : f32 to vector<128x1xf32>
    %5 = arith.divf %3, %4 : vector<128x1xf32>
    %6 = vector.broadcast %5 : vector<128x1xf32> to vector<128x32xf32>
    %7 = arith.subf %1, %6 : vector<128x32xf32>
    %8 = arith.mulf %7, %7 : vector<128x32xf32>
    %cst_2 = arith.constant dense<0.000000e+00> : vector<128xf32>
    %9 = vector.multi_reduction <add>, %8, %cst_2 [1] : vector<128x32xf32> to vector<128xf32>
    %10 = vector.shape_cast %9 : vector<128xf32> to vector<128x1xf32>
    %cst_3 = arith.constant 3.200000e+01 : f32
    %11 = vector.broadcast %cst_3 : f32 to vector<128x1xf32>
    %12 = arith.divf %10, %11 : vector<128x1xf32>
    %13 = vector.broadcast %5 : vector<128x1xf32> to vector<128x32xf32>
    %14 = arith.subf %1, %13 : vector<128x32xf32>
    %cst_4 = arith.constant 9.99999974E-6 : f32
    %15 = vector.broadcast %cst_4 : f32 to vector<128x1xf32>
    %16 = arith.addf %12, %15 : vector<128x1xf32>
    %17 = math.rsqrt %16 : vector<128x1xf32>
    %18 = vector.broadcast %17 : vector<128x1xf32> to vector<128x32xf32>
    %19 = arith.mulf %14, %18 : vector<128x32xf32>
    %c0_5 = arith.constant 0 : index
    %c0_6 = arith.constant 0 : index
    %20 = vector.load %arg2[%c0_5, %c0_6] : memref<1x32xf32, #tpu.memory_space<vmem>>, vector<1x32xf32>
    %21 = vector.broadcast %20 : vector<1x32xf32> to vector<128x32xf32>
    %22 = arith.mulf %19, %21 : vector<128x32xf32>
    %c0_7 = arith.constant 0 : index
    %c0_8 = arith.constant 0 : index
    %23 = vector.load %arg3[%c0_7, %c0_8] : memref<1x32xf32, #tpu.memory_space<vmem>>, vector<1x32xf32>
    %24 = vector.broadcast %23 : vector<1x32xf32> to vector<128x32xf32>
    %25 = arith.addf %22, %24 : vector<128x32xf32>
    %26 = arith.truncf %25 : vector<128x32xf32> to vector<128x32xbf16>
    %c0_9 = arith.constant 0 : index
    %c0_10 = arith.constant 0 : index
    %27 = vector.load %arg4[%c0_9, %c0_10] : memref<32x128xbf16, #tpu.memory_space<vmem>>, vector<32x128xbf16>
    %cst_11 = arith.constant dense<0.000000e+00> : vector<128x128xf32>
    %28 = tpu.matmul %26, %27, %cst_11 {dimension_numbers = #tpu.dot_dimension_numbers<[1], [0], [0], [1], [0, 0, 1, 1], [], []>} : vector<128x32xbf16>, vector<32x128xbf16>, vector<128x128xf32> -> vector<128x128xf32>
    %c0_12 = arith.constant 0 : index
    %c0_13 = arith.constant 0 : index
    %29 = vector.load %arg5[%c0_12, %c0_13] : memref<1x128xf32, #tpu.memory_space<vmem>>, vector<1x128xf32>
    %30 = vector.broadcast %29 : vector<1x128xf32> to vector<128x128xf32>
    %31 = arith.addf %28, %30 : vector<128x128xf32>
    %cst_14 = arith.constant 5.000000e-01 : f32
    %32 = vector.broadcast %cst_14 : f32 to vector<128x128xf32>
    %33 = arith.mulf %32, %31 : vector<128x128xf32>
    %cst_15 = arith.constant 4.471500e-02 : f32
    %34 = vector.broadcast %cst_15 : f32 to vector<128x128xf32>
    %35 = arith.mulf %34, %31 : vector<128x128xf32>
    %36 = arith.mulf %35, %31 : vector<128x128xf32>
    %37 = arith.mulf %36, %31 : vector<128x128xf32>
    %38 = arith.addf %31, %37 : vector<128x128xf32>
    %cst_16 = arith.constant 0.797884583 : f32
    %39 = vector.broadcast %cst_16 : f32 to vector<128x128xf32>
    %40 = arith.mulf %39, %38 : vector<128x128xf32>
    %41 = math.tanh %40 : vector<128x128xf32>
    %cst_17 = arith.constant 1.000000e+00 : f32
    %42 = vector.broadcast %cst_17 : f32 to vector<128x128xf32>
    %43 = arith.addf %42, %41 : vector<128x128xf32>
    %44 = arith.mulf %33, %43 : vector<128x128xf32>
    %45 = arith.truncf %44 : vector<128x128xf32> to vector<128x128xbf16>
    %c0_18 = arith.constant 0 : index
    %c0_19 = arith.constant 0 : index
    %46 = vector.load %arg6[%c0_18, %c0_19] : memref<128x32xbf16, #tpu.memory_space<vmem>>, vector<128x32xbf16>
    %cst_20 = arith.constant dense<0.000000e+00> : vector<128x32xf32>
    %47 = tpu.matmul %45, %46, %cst_20 {dimension_numbers = #tpu.dot_dimension_numbers<[1], [0], [0], [1], [0, 0, 1, 1], [], []>} : vector<128x128xbf16>, vector<128x32xbf16>, vector<128x32xf32> -> vector<128x32xf32>
    %c0_21 = arith.constant 0 : index
    %c0_22 = arith.constant 0 : index
    %48 = vector.load %arg7[%c0_21, %c0_22] : memref<1x32xf32, #tpu.memory_space<vmem>>, vector<1x32xf32>
    %49 = vector.broadcast %48 : vector<1x32xf32> to vector<128x32xf32>
    %50 = arith.addf %47, %49 : vector<128x32xf32>
    %51 = arith.addf %50, %1 : vector<128x32xf32>
    %52 = arith.truncf %51 : vector<128x32xf32> to vector<128x32xbf16>
    %c0_23 = arith.constant 0 : index
    %c0_24 = arith.constant 0 : index
    %53 = vector.load %arg8[%c0_23, %c0_24] : memref<128x32xbf16, #tpu.memory_space<vmem>>, vector<128x32xbf16>
    tpu.vector_store %arg8[%c0_23, %c0_24], %52 {strides = array<i32>} : memref<128x32xbf16, #tpu.memory_space<vmem>>, vector<128x32xbf16>,
    return
  }
  func.func @transform_0(%arg0: i32) -> (i32, i32) {
    %c0_i32 = arith.constant 0 : i32
    %c0_i32_0 = arith.constant 0 : i32
    return %arg0, %c0_i32 : i32, i32
  }
  func.func @transform_1(%arg0: i32) -> (i32, i32) {
    %c0_i32 = arith.constant 0 : i32
    %c0_i32_0 = arith.constant 0 : i32
    %c0_i32_1 = arith.constant 0 : i32
    return %c0_i32, %c0_i32_0 : i32, i32
  }
  func.func @transform_2(%arg0: i32) -> (i32, i32) {
    %c0_i32 = arith.constant 0 : i32
    %c0_i32_0 = arith.constant 0 : i32
    %c0_i32_1 = arith.constant 0 : i32
    return %c0_i32, %c0_i32_0 : i32, i32
  }
  func.func @transform_3(%arg0: i32) -> (i32, i32) {
    %c0_i32 = arith.constant 0 : i32
    %c0_i32_0 = arith.constant 0 : i32
    %c0_i32_1 = arith.constant 0 : i32
    return %c0_i32, %c0_i32_0 : i32, i32
  }
  func.func @transform_4(%arg0: i32) -> (i32, i32) {
    %c0_i32 = arith.constant 0 : i32
    %c0_i32_0 = arith.constant 0 : i32
    %c0_i32_1 = arith.constant 0 : i32
    return %c0_i32, %c0_i32_0 : i32, i32
  }
  func.func @transform_5(%arg0: i32) -> (i32, i32) {
    %c0_i32 = arith.constant 0 : i32
    %c0_i32_0 = arith.constant 0 : i32
    %c0_i32_1 = arith.constant 0 : i32
    return %c0_i32, %c0_i32_0 : i32, i32
  }
  func.func @transform_6(%arg0: i32) -> (i32, i32) {
    %c0_i32 = arith.constant 0 : i32
    %c0_i32_0 = arith.constant 0 : i32
    %c0_i32_1 = arith.constant 0 : i32
    return %c0_i32, %c0_i32_0 : i32, i32
  }
  func.func @transform_7(%arg0: i32) -> (i32, i32) {
    %c0_i32 = arith.constant 0 : i32
    %c0_i32_0 = arith.constant 0 : i32
    return %arg0, %c0_i32 : i32, i32
  }
}

module attributes {stable_mosaic.version = 11 : i64} {
  func.func @kernel(%arg0: i32, %arg1: memref<128x32xbf16, #tpu.memory_space<vmem>>, %arg2: memref<1x32xf32, #tpu.memory_space<vmem>>, %arg3: memref<1x32xf32, #tpu.memory_space<vmem>>, %arg4: memref<128x32xf32, #tpu.memory_space<vmem>>) attributes {dimension_semantics = [#tpu.dimension_semantics<parallel>], iteration_bounds = array<i64: 1>, scalar_prefetch = 0 : i64, scratch_operands = 0 : i64, tpu.core_type = #tpu.core_type<tc>, window_params = [{transform_indices = @transform_0, window_bounds = array<i64: 128, 32>}, {pipeline_mode = #tpu.pipeline_mode<synchronous>, transform_indices = @transform_1, window_bounds = array<i64: 1, 32>}, {pipeline_mode = #tpu.pipeline_mode<synchronous>, transform_indices = @transform_2, window_bounds = array<i64: 1, 32>}, {transform_indices = @transform_3, window_bounds = array<i64: 128, 32>}]} {
    %c0 = arith.constant 0 : index
    %c0_0 = arith.constant 0 : index
    %0 = vector.load %arg1[%c0, %c0_0] : memref<128x32xbf16, #tpu.memory_space<vmem>>, vector<128x32xbf16>
    %1 = arith.extf %0 : vector<128x32xbf16> to vector<128x32xf32>
    %cst = arith.constant dense<0.000000e+00> : vector<128xf32>
    %2 = vector.multi_reduction <add>, %1, %cst [1] : vector<128x32xf32> to vector<128xf32>
    %3 = vector.shape_cast %2 : vector<128xf32> to vector<128x1xf32>
    %cst_1 = arith.constant 3.200000e+01 : f32
    %4 = vector.broadcast %cst_1 : f32 to vector<128x1xf32>
    %5 = arith.divf %3, %4 : vector<128x1xf32>
    %6 = vector.broadcast %5 : vector<128x1xf32> to vector<128x32xf32>
    %7 = arith.subf %1, %6 : vector<128x32xf32>
    %8 = arith.mulf %7, %7 : vector<128x32xf32>
    %cst_2 = arith.constant dense<0.000000e+00> : vector<128xf32>
    %9 = vector.multi_reduction <add>, %8, %cst_2 [1] : vector<128x32xf32> to vector<128xf32>
    %10 = vector.shape_cast %9 : vector<128xf32> to vector<128x1xf32>
    %cst_3 = arith.constant 3.200000e+01 : f32
    %11 = vector.broadcast %cst_3 : f32 to vector<128x1xf32>
    %12 = arith.divf %10, %11 : vector<128x1xf32>
    %13 = vector.broadcast %5 : vector<128x1xf32> to vector<128x32xf32>
    %14 = arith.subf %1, %13 : vector<128x32xf32>
    %cst_4 = arith.constant 9.99999974E-6 : f32
    %15 = vector.broadcast %cst_4 : f32 to vector<128x1xf32>
    %16 = arith.addf %12, %15 : vector<128x1xf32>
    %17 = math.rsqrt %16 : vector<128x1xf32>
    %18 = vector.broadcast %17 : vector<128x1xf32> to vector<128x32xf32>
    %19 = arith.mulf %14, %18 : vector<128x32xf32>
    %c0_5 = arith.constant 0 : index
    %c0_6 = arith.constant 0 : index
    %20 = vector.load %arg2[%c0_5, %c0_6] : memref<1x32xf32, #tpu.memory_space<vmem>>, vector<1x32xf32>
    %21 = vector.broadcast %20 : vector<1x32xf32> to vector<128x32xf32>
    %22 = arith.mulf %19, %21 : vector<128x32xf32>
    %c0_7 = arith.constant 0 : index
    %c0_8 = arith.constant 0 : index
    %23 = vector.load %arg3[%c0_7, %c0_8] : memref<1x32xf32, #tpu.memory_space<vmem>>, vector<1x32xf32>
    %24 = vector.broadcast %23 : vector<1x32xf32> to vector<128x32xf32>
    %25 = arith.addf %22, %24 : vector<128x32xf32>
    %c0_9 = arith.constant 0 : index
    %c0_10 = arith.constant 0 : index
    %26 = vector.load %arg4[%c0_9, %c0_10] : memref<128x32xf32, #tpu.memory_space<vmem>>, vector<128x32xf32>
    tpu.vector_store %arg4[%c0_9, %c0_10], %25 {strides = array<i32>} : memref<128x32xf32, #tpu.memory_space<vmem>>, vector<128x32xf32>,
    return
  }
  func.func @transform_0(%arg0: i32) -> (i32, i32) {
    %c0_i32 = arith.constant 0 : i32
    %c0_i32_0 = arith.constant 0 : i32
    return %arg0, %c0_i32 : i32, i32
  }
  func.func @transform_1(%arg0: i32) -> (i32, i32) {
    %c0_i32 = arith.constant 0 : i32
    %c0_i32_0 = arith.constant 0 : i32
    %c0_i32_1 = arith.constant 0 : i32
    return %c0_i32, %c0_i32_0 : i32, i32
  }
  func.func @transform_2(%arg0: i32) -> (i32, i32) {
    %c0_i32 = arith.constant 0 : i32
    %c0_i32_0 = arith.constant 0 : i32
    %c0_i32_1 = arith.constant 0 : i32
    return %c0_i32, %c0_i32_0 : i32, i32
  }
  func.func @transform_3(%arg0: i32) -> (i32, i32) {
    %c0_i32 = arith.constant 0 : i32
    %c0_i32_0 = arith.constant 0 : i32
    return %arg0, %c0_i32 : i32, i32
  }
}

</mosaic_0001>

<llo_original>
// kernel: cvt_stage_forward.8
$region0: #{cvt_stage_forward.8}
  #allocation0 [shape = 'u32[]', space=smem, size = 0x4, offset = 0x4, fixed_abs, tag = 'smem constant byte address 0x4 - core index']
  #allocation1 [shape = 'u32[144,128]{1,0:T(1,128)}', space=vmem, size = 0x12000, scoped, tag = 'internal scratch']
  %s0 = inlined_call_operand.vmem [shape: bf16[128,36], index: 0, kind: input, shape index: {}]
  %s1 = inlined_call_operand.vmem [shape: bf16[36,32], index: 1, kind: input, shape index: {}]
  %s2 = inlined_call_operand.vmem [shape: f32[1,32], index: 2, kind: input, shape index: {}]
  %s3 = inlined_call_operand.vmem [shape: f32[1,32], index: 3, kind: input, shape index: {}]
  %s4 = inlined_call_operand.vmem [shape: f32[1,32], index: 4, kind: input, shape index: {}]
  %s5 = inlined_call_operand.vmem [shape: bf16[128,32], index: 5, kind: output, shape index: {}]
  %s6 = sld [smem:[#allocation0]]
  $region30: #{cvt_stage_forward.8} parent=0
    _
  %s8 = ssub.s32 1, %s6
  %s9 = scalar_select 0, %s8, %s6
  // Predicated region
  $region2: #{cvt_stage_forward.8} parent=0 // pred_check
    _
  $region3: #{cvt_stage_forward.8} parent=0 // pred_check_branch
    %11 = sbr.rel (0) target = $region5
  $region4: #{cvt_stage_forward.8} parent=0 // pred_region
    _
  $region5: #{cvt_stage_forward.8} parent=0 // pred_fallthru
    _
  // Predicated region
  $region6: #{cvt_stage_forward.8} parent=0 // pred_check
    _
  $region7: #{cvt_stage_forward.8} parent=0 // pred_check_branch
    %13 = sbr.rel (0) target = $region9
  $region8: #{cvt_stage_forward.8} parent=0 // pred_region
    _
  $region9: #{cvt_stage_forward.8} parent=0 // pred_fallthru
    _
  // Predicated region
  $region10: #{cvt_stage_forward.8} parent=0 // pred_check
    _
  $region11: #{cvt_stage_forward.8} parent=0 // pred_check_branch
    %15 = sbr.rel (0) target = $region13
  $region12: #{cvt_stage_forward.8} parent=0 // pred_region
    _
  $region13: #{cvt_stage_forward.8} parent=0 // pred_fallthru
    _
  // Predicated region
  $region14: #{cvt_stage_forward.8} parent=0 // pred_check
    _
  $region15: #{cvt_stage_forward.8} parent=0 // pred_check_branch
    %17 = sbr.rel (0) target = $region17
  $region16: #{cvt_stage_forward.8} parent=0 // pred_region
    _
  $region17: #{cvt_stage_forward.8} parent=0 // pred_fallthru
    _
  // Predicated region
  $region18: #{cvt_stage_forward.8} parent=0 // pred_check
    _
  $region19: #{cvt_stage_forward.8} parent=0 // pred_check_branch
    %19 = sbr.rel (0) target = $region21
  $region20: #{cvt_stage_forward.8} parent=0 // pred_region
    _
  $region21: #{cvt_stage_forward.8} parent=0 // pred_fallthru
    _
  %v21 = vld [vmem:[%s0] sm:$0xf]
  %v22 = vld [vmem:[%s0 + $0x4] sm:$0xf]
  %v23 = vld [vmem:[%s0 + $0x8] sm:$0xf]
  %v24 = vld [vmem:[%s0 + $0xc] sm:$0xf]
  %v25 = vld [vmem:[%s0 + $0x10] sm:$0xf]
  %v26 = vld [vmem:[%s0 + $0x14] sm:$0xf]
  %v27 = vld [vmem:[%s0 + $0x18] sm:$0xf]
  %v28 = vld [vmem:[%s0 + $0x1c] sm:$0xf]
  %v29 = vld [vmem:[%s0 + $0x20] sm:$0xf]
  %v30 = vld [vmem:[%s0 + $0x24] sm:$0xf]
  %v31 = vld [vmem:[%s0 + $0x28] sm:$0xf]
  %v32 = vld [vmem:[%s0 + $0x2c] sm:$0xf]
  %v33 = vld [vmem:[%s0 + $0x30] sm:$0xf]
  %v34 = vld [vmem:[%s0 + $0x34] sm:$0xf]
  %v35 = vld [vmem:[%s0 + $0x38] sm:$0xf]
  %v36 = vld [vmem:[%s0 + $0x3c] sm:$0xf]
  %v37 = vld [vmem:[%s1] sm:$0xf]
  %v38 = vld [vmem:[%s1 + $0x4] sm:$0xf]
  %v39 = vld [vmem:[%s1 + $0x8] sm:$0xf]
  %v40 = vld [vmem:[%s1 + $0xc] sm:$0xf]
  %v41 = vld [vmem:[%s1 + $0x10] sm:$0x3]
  %v42 = vld [vmem:[%s2] sm:$0x1]
  %v44 = vlaneseq
  %v45 = vshrl.u32 %v44, 7
  %v46 = vsub.s32 0, %v45
  %v47 = vrot.slane %v42, %v46
  %v65 = vunpack.c.l.b16 %v21
  %v66 = vunpack.c.l.b16 %v22
  %v67 = vunpack.c.l.b16 %v23
  %v68 = vunpack.c.l.b16 %v24
  %v69 = vunpack.c.l.b16 %v25
  %v70 = vunpack.c.l.b16 %v26
  %v71 = vunpack.c.l.b16 %v27
  %v72 = vunpack.c.l.b16 %v28
  %v73 = vunpack.c.l.b16 %v29
  %v74 = vunpack.c.l.b16 %v30
  %v75 = vunpack.c.l.b16 %v31
  %v76 = vunpack.c.l.b16 %v32
  %v77 = vunpack.c.l.b16 %v33
  %v78 = vunpack.c.l.b16 %v34
  %v79 = vunpack.c.l.b16 %v35
  %v80 = vunpack.c.l.b16 %v36
  %v81 = vpack.c.b16 %v66, %v65
  %v82 = vpack.c.b16 %v68, %v67
  %v83 = vpack.c.b16 %v70, %v69
  %v84 = vpack.c.b16 %v72, %v71
  %v85 = vpack.c.b16 %v74, %v73
  %v86 = vpack.c.b16 %v76, %v75
  %v87 = vpack.c.b16 %v78, %v77
  %v88 = vpack.c.b16 %v80, %v79
  %v94 = vunpack.c.l.b16 %v37
  %v95 = vunpack.c.l.b16 %v38
  %v96 = vunpack.c.l.b16 %v39
  %v97 = vunpack.c.l.b16 %v40
  %v98 = vunpack.c.l.b16 %v41
  %v99 = vpack.c.b16 %v95, %v94
  %v100 = vpack.c.b16 %v97, %v96
  %v101 = vpack.c.b16 %v98, %v98
  %vm104 = vcmask 293888
  %v106 = vsel %vm104, %v81, 0
  %v109 = vsel %vm104, %v82, 0
  %v112 = vsel %vm104, %v83, 0
  %v115 = vsel %vm104, %v84, 0
  %v118 = vsel %vm104, %v85, 0
  %v121 = vsel %vm104, %v86, 0
  %v124 = vsel %vm104, %v87, 0
  %v127 = vsel %vm104, %v88, 0
  %vm129 = vcmask 1041408
  %v131 = vsel %vm129, %v101, 0
  %133 = vmatprep.subr.bf16.mxu0 0
  %134 = vmatpush1.bf16.msra.mxu0 %v99
  %135 = vmatprep.subr.bf16.mxu0 0
  %136 = vmatpush1.bf16.msra.mxu0 %v100
  %137 = vmatprep.subr.bf16.mxu0 0
  %138 = vmatpush1.bf16.msra.mxu0 %v131
  %139 = vmatprep.subr.bf16.mxu0 0
  %140 = vmatpush1.bf16.msra.mxu0 0
  %141 = vmatprep.subr.bf16.mxu0 0
  %142 = vmatpush1.bf16.msra.mxu0 0
  %143 = vmatprep.subr.bf16.mxu0 0
  %144 = vmatpush1.bf16.msra.mxu0 0
  %145 = vmatprep.subr.bf16.mxu0 0
  %146 = vmatpush1.bf16.msra.mxu0 0
  %147 = vmatprep.subr.bf16.mxu0 0
  %148 = vmatpush1.bf16.msra.mxu0 0
  %149 = vmatprep.subr.bf16.mxu0 0
  %150 = vmatpush1.bf16.msra.mxu0 0
  %151 = vmatprep.subr.bf16.mxu0 0
  %152 = vmatpush1.bf16.msra.mxu0 0
  %153 = vmatprep.subr.bf16.mxu0 0
  %154 = vmatpush1.bf16.msra.mxu0 0
  %155 = vmatprep.subr.bf16.mxu0 0
  %156 = vmatpush1.bf16.msra.mxu0 0
  %157 = vmatprep.subr.bf16.mxu0 0
  %158 = vmatpush1.bf16.msra.mxu0 0
  %159 = vmatprep.subr.bf16.mxu0 0
  %160 = vmatpush1.bf16.msra.mxu0 0
  %161 = vmatprep.subr.bf16.mxu0 0
  %162 = vmatpush1.bf16.msra.mxu0 0
  %163 = vmatprep.subr.bf16.mxu0 0
  %164 = vmatpush1.bf16.msra.mxu0 0
  %165 = vmatprep.mubr.bf16.mxu0 0
  %166 = vmatmul.mubr.bf16.gmra.mrb[0].mxu0 %v106
  %v167 = vpop.f32.mrb[0].mxu0
  %v168 = vadd.f32 %v47, %v167
  %v169 = vpop.f32.mrb[0].mxu0
  %v170 = vpop.f32.mrb[0].mxu0
  %v171 = vadd.f32 %v47, %v170
  %v172 = vpop.f32.mrb[0].mxu0
  %173 = vmatprep.mubr.bf16.mxu0 0
  %174 = vmatmul.mubr.bf16.gmra.mrb[0].mxu0 %v109
  %v175 = vpop.f32.mrb[0].mxu0
  %v176 = vadd.f32 %v47, %v175
  %v177 = vpop.f32.mrb[0].mxu0
  %v178 = vpop.f32.mrb[0].mxu0
  %v179 = vadd.f32 %v47, %v178
  %v180 = vpop.f32.mrb[0].mxu0
  %181 = vmatprep.mubr.bf16.mxu0 0
  %182 = vmatmul.mubr.bf16.gmra.mrb[0].mxu0 %v112
  %v183 = vpop.f32.mrb[0].mxu0
  %v184 = vadd.f32 %v47, %v183
  %v185 = vpop.f32.mrb[0].mxu0
  %v186 = vpop.f32.mrb[0].mxu0
  %v187 = vadd.f32 %v47, %v186
  %v188 = vpop.f32.mrb[0].mxu0
  %189 = vmatprep.mubr.bf16.mxu0 0
  %190 = vmatmul.mubr.bf16.gmra.mrb[0].mxu0 %v115
  %v191 = vpop.f32.mrb[0].mxu0
  %v192 = vadd.f32 %v47, %v191
  %v193 = vpop.f32.mrb[0].mxu0
  %v194 = vpop.f32.mrb[0].mxu0
  %v195 = vadd.f32 %v47, %v194
  %v196 = vpop.f32.mrb[0].mxu0
  %197 = vmatprep.mubr.bf16.mxu0 0
  %198 = vmatmul.mubr.bf16.gmra.mrb[0].mxu0 %v118
  %v199 = vpop.f32.mrb[0].mxu0
  %v200 = vadd.f32 %v47, %v199
  %v201 = vpop.f32.mrb[0].mxu0
  %v202 = vpop.f32.mrb[0].mxu0
  %v203 = vadd.f32 %v47, %v202
  %v204 = vpop.f32.mrb[0].mxu0
  %205 = vmatprep.mubr.bf16.mxu0 0
  %206 = vmatmul.mubr.bf16.gmra.mrb[0].mxu0 %v121
  %v207 = vpop.f32.mrb[0].mxu0
  %v208 = vadd.f32 %v47, %v207
  %v209 = vpop.f32.mrb[0].mxu0
  %v210 = vpop.f32.mrb[0].mxu0
  %v211 = vadd.f32 %v47, %v210
  %v212 = vpop.f32.mrb[0].mxu0
  %213 = vmatprep.mubr.bf16.mxu0 0
  %214 = vmatmul.mubr.bf16.gmra.mrb[0].mxu0 %v124
  %v215 = vpop.f32.mrb[0].mxu0
  %v216 = vadd.f32 %v47, %v215
  %v217 = vpop.f32.mrb[0].mxu0
  %v218 = vpop.f32.mrb[0].mxu0
  %v219 = vadd.f32 %v47, %v218
  %v220 = vpop.f32.mrb[0].mxu0
  %221 = vmatprep.mubr.bf16.mxu0 0
  %222 = vmatmul.mubr.bf16.gmra.mrb[0].mxu0 %v127
  %v223 = vpop.f32.mrb[0].mxu0
  %v224 = vadd.f32 %v47, %v223
  %v225 = vpop.f32.mrb[0].mxu0
  %v226 = vpop.f32.mrb[0].mxu0
  %v227 = vadd.f32 %v47, %v226
  %v228 = vpop.f32.mrb[0].mxu0
  %229 = vdwg.mxu0
  %vm230 = vcmask 261120
  %v231 = vsel %vm230, %v168, 0.0
  %232 = vadd.xlane.f32.xlu0 %v231
  %v233 = vpop.xlane.xlu0 %232
  %v234 = vsel %vm230, %v171, 0.0
  %235 = vadd.xlane.f32.xlu0 %v234
  %v236 = vpop.xlane.xlu0 %235
  %v237 = vsel %vm230, %v176, 0.0
  %238 = vadd.xlane.f32.xlu0 %v237
  %v239 = vpop.xlane.xlu0 %238
  %v240 = vsel %vm230, %v179, 0.0
  %241 = vadd.xlane.f32.xlu0 %v240
  %v242 = vpop.xlane.xlu0 %241
  %v243 = vsel %vm230, %v184, 0.0
  %244 = vadd.xlane.f32.xlu0 %v243
  %v245 = vpop.xlane.xlu0 %244
  %v246 = vsel %vm230, %v187, 0.0
  %247 = vadd.xlane.f32.xlu0 %v246
  %v248 = vpop.xlane.xlu0 %247
  %v249 = vsel %vm230, %v192, 0.0
  %250 = vadd.xlane.f32.xlu0 %v249
  %v251 = vpop.xlane.xlu0 %250
  %v252 = vsel %vm230, %v195, 0.0
  %253 = vadd.xlane.f32.xlu0 %v252
  %v254 = vpop.xlane.xlu0 %253
  %v255 = vsel %vm230, %v200, 0.0
  %256 = vadd.xlane.f32.xlu0 %v255
  %v257 = vpop.xlane.xlu0 %256
  %v258 = vsel %vm230, %v203, 0.0
  %259 = vadd.xlane.f32.xlu0 %v258
  %v260 = vpop.xlane.xlu0 %259
  %v261 = vsel %vm230, %v208, 0.0
  %262 = vadd.xlane.f32.xlu0 %v261
  %v263 = vpop.xlane.xlu0 %262
  %v264 = vsel %vm230, %v211, 0.0
  %265 = vadd.xlane.f32.xlu0 %v264
  %v266 = vpop.xlane.xlu0 %265
  %v267 = vsel %vm230, %v216, 0.0
  %268 = vadd.xlane.f32.xlu0 %v267
  %v269 = vpop.xlane.xlu0 %268
  %v270 = vsel %vm230, %v219, 0.0
  %271 = vadd.xlane.f32.xlu0 %v270
  %v272 = vpop.xlane.xlu0 %271
  %v273 = vsel %vm230, %v224, 0.0
  %274 = vadd.xlane.f32.xlu0 %v273
  %v275 = vpop.xlane.xlu0 %274
  %v276 = vsel %vm230, %v227, 0.0
  %277 = vadd.xlane.f32.xlu0 %v276
  %v278 = vpop.xlane.xlu0 %277
  %v279 = vrcp.pop 32.0
  %v280 = vmul.f32 %v233, %v279
  %v281 = vmul.f32 %v236, %v279
  %v282 = vmul.f32 %v239, %v279
  %v283 = vmul.f32 %v242, %v279
  %v284 = vmul.f32 %v245, %v279
  %v285 = vmul.f32 %v248, %v279
  %v286 = vmul.f32 %v251, %v279
  %v287 = vmul.f32 %v254, %v279
  %v288 = vmul.f32 %v257, %v279
  %v289 = vmul.f32 %v260, %v279
  %v290 = vmul.f32 %v263, %v279
  %v291 = vmul.f32 %v266, %v279
  %v292 = vmul.f32 %v269, %v279
  %v293 = vmul.f32 %v272, %v279
  %v294 = vmul.f32 %v275, %v279
  %v295 = vmul.f32 %v278, %v279
  %v296 = vsub.f32 %v168, %v280
  %v297 = vsub.f32 %v171, %v281
  %v298 = vsub.f32 %v176, %v282
  %v299 = vsub.f32 %v179, %v283
  %v300 = vsub.f32 %v184, %v284
  %v301 = vsub.f32 %v187, %v285
  %v302 = vsub.f32 %v192, %v286
  %v303 = vsub.f32 %v195, %v287
  %v304 = vsub.f32 %v200, %v288
  %v305 = vsub.f32 %v203, %v289
  %v306 = vsub.f32 %v208, %v290
  %v307 = vsub.f32 %v211, %v291
  %v308 = vsub.f32 %v216, %v292
  %v309 = vsub.f32 %v219, %v293
  %v310 = vsub.f32 %v224, %v294
  %v311 = vsub.f32 %v227, %v295
  %v312 = vmul.f32 %v296, %v296
  %v313 = vmul.f32 %v297, %v297
  %v314 = vmul.f32 %v298, %v298
  %v315 = vmul.f32 %v299, %v299
  %v316 = vmul.f32 %v300, %v300
  %v317 = vmul.f32 %v301, %v301
  %v318 = vmul.f32 %v302, %v302
  %v319 = vmul.f32 %v303, %v303
  %v320 = vmul.f32 %v304, %v304
  %v321 = vmul.f32 %v305, %v305
  %v322 = vmul.f32 %v306, %v306
  %v323 = vmul.f32 %v307, %v307
  %v324 = vmul.f32 %v308, %v308
  %v325 = vmul.f32 %v309, %v309
  %v326 = vmul.f32 %v310, %v310
  %v327 = vmul.f32 %v311, %v311
  %v328 = vsel %vm230, %v312, 0.0
  %329 = vadd.xlane.f32.xlu0 %v328
  %v330 = vpop.xlane.xlu0 %329
  %v331 = vsel %vm230, %v313, 0.0
  %332 = vadd.xlane.f32.xlu0 %v331
  %v333 = vpop.xlane.xlu0 %332
  %v334 = vsel %vm230, %v314, 0.0
  %335 = vadd.xlane.f32.xlu0 %v334
  %v336 = vpop.xlane.xlu0 %335
  %v337 = vsel %vm230, %v315, 0.0
  %338 = vadd.xlane.f32.xlu0 %v337
  %v339 = vpop.xlane.xlu0 %338
  %v340 = vsel %vm230, %v316, 0.0
  %341 = vadd.xlane.f32.xlu0 %v340
  %v342 = vpop.xlane.xlu0 %341
  %v343 = vsel %vm230, %v317, 0.0
  %344 = vadd.xlane.f32.xlu0 %v343
  %v345 = vpop.xlane.xlu0 %344
  %v346 = vsel %vm230, %v318, 0.0
  %347 = vadd.xlane.f32.xlu0 %v346
  %v348 = vpop.xlane.xlu0 %347
  %v349 = vsel %vm230, %v319, 0.0
  %350 = vadd.xlane.f32.xlu0 %v349
  %v351 = vpop.xlane.xlu0 %350
  %v352 = vsel %vm230, %v320, 0.0
  %353 = vadd.xlane.f32.xlu0 %v352
  %v354 = vpop.xlane.xlu0 %353
  %v355 = vsel %vm230, %v321, 0.0
  %356 = vadd.xlane.f32.xlu0 %v355
  %v357 = vpop.xlane.xlu0 %356
  %v358 = vsel %vm230, %v322, 0.0
  %359 = vadd.xlane.f32.xlu0 %v358
  %v360 = vpop.xlane.xlu0 %359
  %v361 = vsel %vm230, %v323, 0.0
  %362 = vadd.xlane.f32.xlu0 %v361
  %v363 = vpop.xlane.xlu0 %362
  %v364 = vsel %vm230, %v324, 0.0
  %365 = vadd.xlane.f32.xlu0 %v364
  %v366 = vpop.xlane.xlu0 %365
  %v367 = vsel %vm230, %v325, 0.0
  %368 = vadd.xlane.f32.xlu0 %v367
  %v369 = vpop.xlane.xlu0 %368
  %v370 = vsel %vm230, %v326, 0.0
  %371 = vadd.xlane.f32.xlu0 %v370
  %v372 = vpop.xlane.xlu0 %371
  %v373 = vsel %vm230, %v327, 0.0
  %374 = vadd.xlane.f32.xlu0 %v373
  %v375 = vpop.xlane.xlu0 %374
  %v376 = vmul.f32 %v330, %v279
  %v377 = vmul.f32 %v333, %v279
  %v378 = vmul.f32 %v336, %v279
  %v379 = vmul.f32 %v339, %v279
  %v380 = vmul.f32 %v342, %v279
  %v381 = vmul.f32 %v345, %v279
  %v382 = vmul.f32 %v348, %v279
  %v383 = vmul.f32 %v351, %v279
  %v384 = vmul.f32 %v354, %v279
  %v385 = vmul.f32 %v357, %v279
  %v386 = vmul.f32 %v360, %v279
  %v387 = vmul.f32 %v363, %v279
  %v388 = vmul.f32 %v366, %v279
  %v389 = vmul.f32 %v369, %v279
  %v390 = vmul.f32 %v372, %v279
  %v391 = vmul.f32 %v375, %v279
  %v392 = vadd.f32 %v376, 1e-05
  %v393 = vadd.f32 %v377, 1e-05
  %v394 = vadd.f32 %v378, 1e-05
  %v395 = vadd.f32 %v379, 1e-05
  %v396 = vadd.f32 %v380, 1e-05
  %v397 = vadd.f32 %v381, 1e-05
  %v398 = vadd.f32 %v382, 1e-05
  %v399 = vadd.f32 %v383, 1e-05
  %v400 = vadd.f32 %v384, 1e-05
  %v401 = vadd.f32 %v385, 1e-05
  %v402 = vadd.f32 %v386, 1e-05
  %v403 = vadd.f32 %v387, 1e-05
  %v404 = vadd.f32 %v388, 1e-05
  %v405 = vadd.f32 %v389, 1e-05
  %v406 = vadd.f32 %v390, 1e-05
  %v407 = vadd.f32 %v391, 1e-05
  %v408 = vrsqrt.pop %v392
  %v409 = vrsqrt.pop %v393
  %v410 = vrsqrt.pop %v394
  %v411 = vrsqrt.pop %v395
  %v412 = vrsqrt.pop %v396
  %v413 = vrsqrt.pop %v397
  %v414 = vrsqrt.pop %v398
  %v415 = vrsqrt.pop %v399
  %v416 = vrsqrt.pop %v400
  %v417 = vrsqrt.pop %v401
  %v418 = vrsqrt.pop %v402
  %v419 = vrsqrt.pop %v403
  %v420 = vrsqrt.pop %v404
  %v421 = vrsqrt.pop %v405
  %v422 = vrsqrt.pop %v406
  %v423 = vrsqrt.pop %v407
  %v424 = vmul.f32 %v296, %v408
  %v425 = vmul.f32 %v297, %v409
  %v426 = vmul.f32 %v298, %v410
  %v427 = vmul.f32 %v299, %v411
  %v428 = vmul.f32 %v300, %v412
  %v429 = vmul.f32 %v301, %v413
  %v430 = vmul.f32 %v302, %v414
  %v431 = vmul.f32 %v303, %v415
  %v432 = vmul.f32 %v304, %v416
  %v433 = vmul.f32 %v305, %v417
  %v434 = vmul.f32 %v306, %v418
  %v435 = vmul.f32 %v307, %v419
  %v436 = vmul.f32 %v308, %v420
  %v437 = vmul.f32 %v309, %v421
  %v438 = vmul.f32 %v310, %v422
  %v439 = vmul.f32 %v311, %v423
  %v440 = vld [vmem:[%s3] sm:$0x1]
  %v442 = vlaneseq
  %v443 = vshrl.u32 %v442, 7
  %v444 = vsub.s32 0, %v443
  %v445 = vrot.slane %v440, %v444
  %v447 = vmul.f32 %v424, %v445
  %v448 = vmul.f32 %v425, %v445
  %v449 = vmul.f32 %v426, %v445
  %v450 = vmul.f32 %v427, %v445
  %v451 = vmul.f32 %v428, %v445
  %v452 = vmul.f32 %v429, %v445
  %v453 = vmul.f32 %v430, %v445
  %v454 = vmul.f32 %v431, %v445
  %v455 = vmul.f32 %v432, %v445
  %v456 = vmul.f32 %v433, %v445
  %v457 = vmul.f32 %v434, %v445
  %v458 = vmul.f32 %v435, %v445
  %v459 = vmul.f32 %v436, %v445
  %v460 = vmul.f32 %v437, %v445
  %v461 = vmul.f32 %v438, %v445
  %v462 = vmul.f32 %v439, %v445
  %v463 = vld [vmem:[%s4] sm:$0x1]
  %v465 = vlaneseq
  %v466 = vshrl.u32 %v465, 7
  %v467 = vsub.s32 0, %v466
  %v468 = vrot.slane %v463, %v467
  %v470 = vadd.f32 %v447, %v468
  %v471 = vadd.f32 %v448, %v468
  %v472 = vadd.f32 %v449, %v468
  %v473 = vadd.f32 %v450, %v468
  %v474 = vadd.f32 %v451, %v468
  %v475 = vadd.f32 %v452, %v468
  %v476 = vadd.f32 %v453, %v468
  %v477 = vadd.f32 %v454, %v468
  %v478 = vadd.f32 %v455, %v468
  %v479 = vadd.f32 %v456, %v468
  %v480 = vadd.f32 %v457, %v468
  %v481 = vadd.f32 %v458, %v468
  %v482 = vadd.f32 %v459, %v468
  %v483 = vadd.f32 %v460, %v468
  %v484 = vadd.f32 %v461, %v468
  %v485 = vadd.f32 %v462, %v468
  %v486 = vpack.c.bf16 %v471, %v470
  %v487 = vpack.c.bf16 %v473, %v472
  %v488 = vpack.c.bf16 %v475, %v474
  %v489 = vpack.c.bf16 %v477, %v476
  %v490 = vpack.c.bf16 %v479, %v478
  %v491 = vpack.c.bf16 %v481, %v480
  %v492 = vpack.c.bf16 %v483, %v482
  %v493 = vpack.c.bf16 %v485, %v484
  %v502 = vunpack.c.l.b16 %v486
  %v503 = vunpack.c.h.b16 %v486
  %v504 = vunpack.c.l.b16 %v487
  %v505 = vunpack.c.h.b16 %v487
  %v506 = vunpack.c.l.b16 %v488
  %v507 = vunpack.c.h.b16 %v488
  %v508 = vunpack.c.l.b16 %v489
  %v509 = vunpack.c.h.b16 %v489
  %v510 = vunpack.c.l.b16 %v490
  %v511 = vunpack.c.h.b16 %v490
  %v512 = vunpack.c.l.b16 %v491
  %v513 = vunpack.c.h.b16 %v491
  %v514 = vunpack.c.l.b16 %v492
  %v515 = vunpack.c.h.b16 %v492
  %v516 = vunpack.c.l.b16 %v493
  %v517 = vunpack.c.h.b16 %v493
  %v518 = vpack.c.b16 %v502, %v502
  %v519 = vpack.c.b16 %v503, %v503
  %v520 = vpack.c.b16 %v504, %v504
  %v521 = vpack.c.b16 %v505, %v505
  %v522 = vpack.c.b16 %v506, %v506
  %v523 = vpack.c.b16 %v507, %v507
  %v524 = vpack.c.b16 %v508, %v508
  %v525 = vpack.c.b16 %v509, %v509
  %v526 = vpack.c.b16 %v510, %v510
  %v527 = vpack.c.b16 %v511, %v511
  %v528 = vpack.c.b16 %v512, %v512
  %v529 = vpack.c.b16 %v513, %v513
  %v530 = vpack.c.b16 %v514, %v514
  %v531 = vpack.c.b16 %v515, %v515
  %v532 = vpack.c.b16 %v516, %v516
  %v533 = vpack.c.b16 %v517, %v517
  %vm550 = vcmask 257024
  %551 = vst.msk [vmem:[%s5] sm:$0xf] %vm550, %v518
  %552 = vst.msk [vmem:[%s5 + $0x4] sm:$0xf] %vm550, %v519
  %553 = vst.msk [vmem:[%s5 + $0x8] sm:$0xf] %vm550, %v520
  %554 = vst.msk [vmem:[%s5 + $0xc] sm:$0xf] %vm550, %v521
  %555 = vst.msk [vmem:[%s5 + $0x10] sm:$0xf] %vm550, %v522
  %556 = vst.msk [vmem:[%s5 + $0x14] sm:$0xf] %vm550, %v523
  %557 = vst.msk [vmem:[%s5 + $0x18] sm:$0xf] %vm550, %v524
  %558 = vst.msk [vmem:[%s5 + $0x1c] sm:$0xf] %vm550, %v525
  %559 = vst.msk [vmem:[%s5 + $0x20] sm:$0xf] %vm550, %v526
  %560 = vst.msk [vmem:[%s5 + $0x24] sm:$0xf] %vm550, %v527
  %561 = vst.msk [vmem:[%s5 + $0x28] sm:$0xf] %vm550, %v528
  %562 = vst.msk [vmem:[%s5 + $0x2c] sm:$0xf] %vm550, %v529
  %563 = vst.msk [vmem:[%s5 + $0x30] sm:$0xf] %vm550, %v530
  %564 = vst.msk [vmem:[%s5 + $0x34] sm:$0xf] %vm550, %v531
  %565 = vst.msk [vmem:[%s5 + $0x38] sm:$0xf] %vm550, %v532
  %566 = vst.msk [vmem:[%s5 + $0x3c] sm:$0xf] %vm550, %v533
  // Predicated region
  $region22: #{cvt_stage_forward.8} parent=0 // pred_check
    _
  $region23: #{cvt_stage_forward.8} parent=0 // pred_check_branch
    %568 = sbr.rel (0) target = $region25
  $region24: #{cvt_stage_forward.8} parent=0 // pred_region
    _
  $region25: #{cvt_stage_forward.8} parent=0 // pred_fallthru
    _
  // Predicated region
  $region26: #{cvt_stage_forward.8} parent=0 // pred_check
    _
  $region27: #{cvt_stage_forward.8} parent=0 // pred_check_branch
    %570 = sbr.rel (0) target = $region29
  $region28: #{cvt_stage_forward.8} parent=0 // pred_region
    _
  $region29: #{cvt_stage_forward.8} parent=0 // pred_fallthru
    _

// kernel: cvt_stage_forward.10
$region0: #{cvt_stage_forward.10}
  #allocation0 [shape = 'u32[]', space=smem, size = 0x4, offset = 0x4, fixed_abs, tag = 'smem constant byte address 0x4 - core index']
  #allocation1 [shape = 'u32[144,128]{1,0:T(1,128)}', space=vmem, size = 0x12000, scoped, tag = 'internal scratch']
  %s0 = inlined_call_operand.vmem [shape: bf16[2,64,96], index: 0, kind: input, shape index: {}]
  %s1 = inlined_call_operand.vmem [shape: bf16[2,64,32], index: 1, kind: input, shape index: {}]
  %s2 = inlined_call_operand.vmem [shape: bf16[3,32,32], index: 2, kind: input, shape index: {}]
  %s3 = inlined_call_operand.vmem [shape: f32[3,1,32], index: 3, kind: input, shape index: {}]
  %s4 = inlined_call_operand.vmem [shape: bf16[32,32], index: 4, kind: input, shape index: {}]
  %s5 = inlined_call_operand.vmem [shape: f32[1,32], index: 5, kind: input, shape index: {}]
  %s6 = inlined_call_operand.vmem [shape: bf16[2,64,32], index: 6, kind: output, shape index: {}]
  %s7 = sld [smem:[#allocation0]]
  $region57: #{cvt_stage_forward.10} parent=0
    _
  %s9 = ssub.s32 1, %s7
  %s10 = scalar_select 0, %s9, %s7
  loop: start=0, step=1, limit=4
  $region2: #{cvt_stage_forward.10} parent=0 // loop_pre_header
    _
  $region3: #{cvt_stage_forward.10} parent=0 // loop_header
    %s12 = sphi 0, %s16
    %p13 = scmp.ge.s32.totalorder %s12, 4
    %s22 = sphi 0, %s24
    %s25 = sphi 0, %s22
    %s26 = sphi 0, %s25
    %s42 = sphi 0, %s26
    %s48 = sphi 0, %s50
    %s51 = sphi 0, %s48
    %s52 = sphi 0, %s51
    %s68 = sphi 0, %s52
    %s72 = sphi 0, %s72
    %s74 = sphi 0, %s72
    %s75 = sphi 0, %s74
    %s89 = sphi 0, %s75
    %s93 = sphi 0, %s93
    %s95 = sphi 0, %s93
    %s96 = sphi 0, %s95
    %s110 = sphi 0, %s96
    %s114 = sphi 0, %s114
    %s116 = sphi 0, %s114
    %s117 = sphi 0, %s116
    %s131 = sphi 0, %s117
    %s135 = sphi 0, %s135
    %s137 = sphi 0, %s135
    %s138 = sphi 0, %s137
    %s152 = sphi 0, %s138
    %s158 = sphi 0, %s160
    %s161 = sphi 0, %s158
    %s162 = sphi 0, %s161
    %s178 = sphi 0, %s162
  $region4: #{cvt_stage_forward.10} parent=0 // loop_header_branch
    %15 = sbr.rel (%p13) target = $region8
  $region5: #{cvt_stage_forward.10} parent=0 // loop_body
    %s17 = ssub.s32 %s12, 1
    %s18 = ssub.s32 %s12, 2
    %s19 = sadd.s32 %s12, 1
    %s20 = ssub.s32 %s12, %s19
    %p21 = scmp.eq.s32.totalorder %s20, 0
    %s23 = sadd.s32 %s22, 1
    %s24 = scalar_select %p21, %s22, %s23
    %p27 = pneg %p21
    %p28 = scmp.eq.s32.totalorder %s12, 1
    %p29 = por %p27, %p28
    %p30 = scmp.ne.s32.totalorder %s22, %s25
    %p31 = scmp.eq.s32.totalorder %s12, 0
    %p32 = por %p30, %p31
    %p33 = scmp.ne.s32.totalorder %s22, %s25
    %p34 = scmp.eq.s32.totalorder %s17, 1
    %p35 = por %p33, %p34
    %p36 = scmp.ne.s32.totalorder %s25, %s26
    %p37 = scmp.eq.s32.totalorder %s17, 0
    %p38 = por %p36, %p37
    %p39 = scmp.ne.s32.totalorder %s25, %s26
    %p40 = scmp.eq.s32.totalorder %s18, 1
    %p41 = por %p39, %p40
    %p43 = scmp.ne.s32.totalorder %s26, %s42
    %p44 = scmp.eq.s32.totalorder %s18, 0
    %p45 = por %p43, %p44
    %s46 = ssub.s32 %s12, %s19
    %p47 = scmp.eq.s32.totalorder %s46, 0
    %s49 = sadd.s32 %s48, 1
    %s50 = scalar_select %p47, %s48, %s49
    %p53 = pneg %p47
    %p54 = scmp.eq.s32.totalorder %s12, 1
    %p55 = por %p53, %p54
    %p56 = scmp.ne.s32.totalorder %s48, %s51
    %p57 = scmp.eq.s32.totalorder %s12, 0
    %p58 = por %p56, %p57
    %p59 = scmp.ne.s32.totalorder %s48, %s51
    %p60 = scmp.eq.s32.totalorder %s17, 1
    %p61 = por %p59, %p60
    %p62 = scmp.ne.s32.totalorder %s51, %s52
    %p63 = scmp.eq.s32.totalorder %s17, 0
    %p64 = por %p62, %p63
    %p65 = scmp.ne.s32.totalorder %s51, %s52
    %p66 = scmp.eq.s32.totalorder %s18, 1
    %p67 = por %p65, %p66
    %p69 = scmp.ne.s32.totalorder %s52, %s68
    %p70 = scmp.eq.s32.totalorder %s18, 0
    %p71 = por %p69, %p70
    %s73 = sadd.s32 %s72, 1
    %p76 = scmp.eq.s32.totalorder %s12, 1
    %p77 = scmp.ne.s32.totalorder %s72, %s74
    %p78 = scmp.eq.s32.totalorder %s12, 0
    %p79 = por %p77, %p78
    %p80 = scmp.ne.s32.totalorder %s72, %s74
    %p81 = scmp.eq.s32.totalorder %s17, 1
    %p82 = por %p80, %p81
    %p83 = scmp.ne.s32.totalorder %s74, %s75
    %p84 = scmp.eq.s32.totalorder %s17, 0
    %p85 = por %p83, %p84
    %p86 = scmp.ne.s32.totalorder %s74, %s75
    %p87 = scmp.eq.s32.totalorder %s18, 1
    %p88 = por %p86, %p87
    %p90 = scmp.ne.s32.totalorder %s75, %s89
    %p91 = scmp.eq.s32.totalorder %s18, 0
    %p92 = por %p90, %p91
    %s94 = sadd.s32 %s93, 1
    %p97 = scmp.eq.s32.totalorder %s12, 1
    %p98 = scmp.ne.s32.totalorder %s93, %s95
    %p99 = scmp.eq.s32.totalorder %s12, 0
    %p100 = por %p98, %p99
    %p101 = scmp.ne.s32.totalorder %s93, %s95
    %p102 = scmp.eq.s32.totalorder %s17, 1
    %p103 = por %p101, %p102
    %p104 = scmp.ne.s32.totalorder %s95, %s96
    %p105 = scmp.eq.s32.totalorder %s17, 0
    %p106 = por %p104, %p105
    %p107 = scmp.ne.s32.totalorder %s95, %s96
    %p108 = scmp.eq.s32.totalorder %s18, 1
    %p109 = por %p107, %p108
    %p111 = scmp.ne.s32.totalorder %s96, %s110
    %p112 = scmp.eq.s32.totalorder %s18, 0
    %p113 = por %p111, %p112
    %s115 = sadd.s32 %s114, 1
    %p118 = scmp.eq.s32.totalorder %s12, 1
    %p119 = scmp.ne.s32.totalorder %s114, %s116
    %p120 = scmp.eq.s32.totalorder %s12, 0
    %p121 = por %p119, %p120
    %p122 = scmp.ne.s32.totalorder %s114, %s116
    %p123 = scmp.eq.s32.totalorder %s17, 1
    %p124 = por %p122, %p123
    %p125 = scmp.ne.s32.totalorder %s116, %s117
    %p126 = scmp.eq.s32.totalorder %s17, 0
    %p127 = por %p125, %p126
    %p128 = scmp.ne.s32.totalorder %s116, %s117
    %p129 = scmp.eq.s32.totalorder %s18, 1
    %p130 = por %p128, %p129
    %p132 = scmp.ne.s32.totalorder %s117, %s131
    %p133 = scmp.eq.s32.totalorder %s18, 0
    %p134 = por %p132, %p133
    %s136 = sadd.s32 %s135, 1
    %p139 = scmp.eq.s32.totalorder %s12, 1
    %p140 = scmp.ne.s32.totalorder %s135, %s137
    %p141 = scmp.eq.s32.totalorder %s12, 0
    %p142 = por %p140, %p141
    %p143 = scmp.ne.s32.totalorder %s135, %s137
    %p144 = scmp.eq.s32.totalorder %s17, 1
    %p145 = por %p143, %p144
    %p146 = scmp.ne.s32.totalorder %s137, %s138
    %p147 = scmp.eq.s32.totalorder %s17, 0
    %p148 = por %p146, %p147
    %p149 = scmp.ne.s32.totalorder %s137, %s138
    %p150 = scmp.eq.s32.totalorder %s18, 1
    %p151 = por %p149, %p150
    %p153 = scmp.ne.s32.totalorder %s138, %s152
    %p154 = scmp.eq.s32.totalorder %s18, 0
    %p155 = por %p153, %p154
    %s156 = ssub.s32 %s12, %s19
    %p157 = scmp.eq.s32.totalorder %s156, 0
    %s159 = sadd.s32 %s158, 1
    %s160 = scalar_select %p157, %s158, %s159
    %p163 = pneg %p157
    %p164 = scmp.eq.s32.totalorder %s12, 1
    %p165 = por %p163, %p164
    %p166 = scmp.ne.s32.totalorder %s158, %s161
    %p167 = scmp.eq.s32.totalorder %s12, 0
    %p168 = por %p166, %p167
    %p169 = scmp.ne.s32.totalorder %s158, %s161
    %p170 = scmp.eq.s32.totalorder %s17, 1
    %p171 = por %p169, %p170
    %p172 = scmp.ne.s32.totalorder %s161, %s162
    %p173 = scmp.eq.s32.totalorder %s17, 0
    %p174 = por %p172, %p173
    %p175 = scmp.ne.s32.totalorder %s161, %s162
    %p176 = scmp.eq.s32.totalorder %s18, 1
    %p177 = por %p175, %p176
    %p179 = scmp.ne.s32.totalorder %s162, %s178
    %p180 = scmp.eq.s32.totalorder %s18, 0
    %p181 = por %p179, %p180
    %p182 = scmp.le.s32.totalorder 1, %s12
    %p183 = scmp.lt.s32.totalorder %s12, 3
    %p184 = pnand %p182, %p183
    %p185 = pneg %p184
    // Predicated region
    $region9: #{cvt_stage_forward.10} parent=5 // pred_check
      _
    $region10: #{cvt_stage_forward.10} parent=5 // pred_check_branch
      %187 = sbr.rel (%p184) target = $region12
    $region11: #{cvt_stage_forward.10} parent=5 // pred_region
      %s188 = ssub.s32 %s12, 1
      // Predicated region
      $region13: #{cvt_stage_forward.10} parent=11 // pred_check
        %p189 = pneg %p85
      $region14: #{cvt_stage_forward.10} parent=11 // pred_check_branch
        %191 = sbr.rel (%p189) target = $region16
      $region15: #{cvt_stage_forward.10} parent=11 // pred_region
        _
      $region16: #{cvt_stage_forward.10} parent=11 // pred_fallthru
        _
      // Predicated region
      $region17: #{cvt_stage_forward.10} parent=11 // pred_check
        %p192 = pneg %p106
      $region18: #{cvt_stage_forward.10} parent=11 // pred_check_branch
        %194 = sbr.rel (%p192) target = $region20
      $region19: #{cvt_stage_forward.10} parent=11 // pred_region
        _
      $region20: #{cvt_stage_forward.10} parent=11 // pred_fallthru
        _
      // Predicated region
      $region21: #{cvt_stage_forward.10} parent=11 // pred_check
        %p195 = pneg %p127
      $region22: #{cvt_stage_forward.10} parent=11 // pred_check_branch
        %197 = sbr.rel (%p195) target = $region24
      $region23: #{cvt_stage_forward.10} parent=11 // pred_region
        _
      $region24: #{cvt_stage_forward.10} parent=11 // pred_fallthru
        _
      // Predicated region
      $region25: #{cvt_stage_forward.10} parent=11 // pred_check
        %p198 = pneg %p148
      $region26: #{cvt_stage_forward.10} parent=11 // pred_check_branch
        %200 = sbr.rel (%p198) target = $region28
      $region27: #{cvt_stage_forward.10} parent=11 // pred_region
        _
      $region28: #{cvt_stage_forward.10} parent=11 // pred_fallthru
        _
    $region12: #{cvt_stage_forward.10} parent=5 // pred_fallthru
      _
    %p201 = scmp.lt.s32.totalorder %s12, 2
    // Predicated region
    $region29: #{cvt_stage_forward.10} parent=5 // pred_check
      %p202 = pneg %p201
    $region30: #{cvt_stage_forward.10} parent=5 // pred_check_branch
      %204 = sbr.rel (%p202) target = $region32
    $region31: #{cvt_stage_forward.10} parent=5 // pred_region
      // Predicated region
      $region33: #{cvt_stage_forward.10} parent=31 // pred_check
        %p205 = pneg %p32
      $region34: #{cvt_stage_forward.10} parent=31 // pred_check_branch
        %207 = sbr.rel (%p205) target = $region36
      $region35: #{cvt_stage_forward.10} parent=31 // pred_region
        %p208 = scmp.lt.s32.totalorder %s12, 1
        %s209 = scalar_select %p208, %s12, 1
        %s210 = smul.addr %s209, 8
        %s211 = smul.addr %s210, 4
        %s212 = scalar_lea.vmem %s0, %s211
      $region36: #{cvt_stage_forward.10} parent=31 // pred_fallthru
        _
      // Predicated region
      $region37: #{cvt_stage_forward.10} parent=31 // pred_check
        %p213 = pneg %p58
      $region38: #{cvt_stage_forward.10} parent=31 // pred_check_branch
        %215 = sbr.rel (%p213) target = $region40
      $region39: #{cvt_stage_forward.10} parent=31 // pred_region
        %p216 = scmp.lt.s32.totalorder %s12, 1
        %s217 = scalar_select %p216, %s12, 1
        %s218 = smul.addr %s217, 8
        %s219 = smul.addr %s218, 4
        %s220 = scalar_lea.vmem %s1, %s219
      $region40: #{cvt_stage_forward.10} parent=31 // pred_fallthru
        _
    $region32: #{cvt_stage_forward.10} parent=5 // pred_fallthru
      _
    %p221 = scmp.le.s32.totalorder 1, %s12
    %p222 = scmp.lt.s32.totalorder %s12, 3
    %p223 = pnand %p221, %p222
    %p224 = pneg %p223
    // Predicated region
    $region41: #{cvt_stage_forward.10} parent=5 // pred_check
      _
    $region42: #{cvt_stage_forward.10} parent=5 // pred_check_branch
      %226 = sbr.rel (%p223) target = $region44
    $region43: #{cvt_stage_forward.10} parent=5 // pred_region
      %s227 = ssub.s32 %s12, 1
      %p228 = scmp.lt.s32.totalorder %s17, 1
      %s229 = scalar_select %p228, %s17, 1
      %s230 = smul.addr %s229, 8
      %s231 = smul.addr %s230, 4
      %s232 = scalar_lea.vmem %s0, %s231
      %p233 = pneg %p38
      %p234 = pneg %p35
      %p235 = scmp.lt.s32.totalorder %s17, 1
      %s236 = scalar_select %p235, %s17, 1
      %s237 = smul.addr %s236, 8
      %s238 = smul.addr %s237, 4
      %s239 = scalar_lea.vmem %s1, %s238
      %p240 = pneg %p64
      %p241 = pneg %p61
      %p242 = pneg %p85
      %p243 = pneg %p82
      %p244 = pneg %p106
      %p245 = pneg %p103
      %p246 = pneg %p127
      %p247 = pneg %p124
      %p248 = pneg %p148
      %p249 = pneg %p145
      %p250 = pneg %p174
      %p251 = pneg %p171
      %p252 = scmp.lt.s32.totalorder %s17, 1
      %s253 = scalar_select %p252, %s17, 1
      %s254 = smul.addr %s253, 8
      %s255 = smul.addr %s254, 4
      %s256 = scalar_lea.vmem %s6, %s255
      %p257 = scmp.lt.s32.totalorder %s17, 1
      %s258 = scalar_select %p257, %s17, 1
      %s259 = smul.addr %s258, 8
      %s260 = smul.addr %s259, 4
      %s261 = scalar_lea.vmem %s0, %s260
      %p262 = scmp.lt.s32.totalorder %s17, 1
      %s263 = scalar_select %p262, %s17, 1
      %s264 = smul.addr %s263, 8
      %s265 = smul.addr %s264, 4
      %s266 = scalar_lea.vmem %s1, %s265
      %p267 = scmp.lt.s32.totalorder %s17, 1
      %s268 = scalar_select %p267, %s17, 1
      %s269 = smul.addr %s268, 8
      %s270 = smul.addr %s269, 4
      %s271 = scalar_lea.vmem %s6, %s270
      %v273 = vld [vmem:[%s261] sm:$0xf]
      %v274 = vld [vmem:[%s261 + $0x4] sm:$0xf]
      %v275 = vld [vmem:[%s261 + $0x8] sm:$0xf]
      %v276 = vld [vmem:[%s261 + $0xc] sm:$0xf]
      %v277 = vld [vmem:[%s261 + $0x10] sm:$0xf]
      %v278 = vld [vmem:[%s261 + $0x14] sm:$0xf]
      %v279 = vld [vmem:[%s261 + $0x18] sm:$0xf]
      %v280 = vld [vmem:[%s261 + $0x1c] sm:$0xf]
      %v281 = vld [vmem:[%s2] sm:$0xf]
      %v282 = vld [vmem:[%s2 + $0x4] sm:$0xf]
      %v283 = vld [vmem:[%s2 + $0x8] sm:$0xf]
      %v284 = vld [vmem:[%s2 + $0xc] sm:$0xf]
      %v285 = vld [vmem:[%s3] sm:$0x1]
      %v287 = vlaneseq
      %v288 = vshrl.u32 %v287, 7
      %v289 = vsub.s32 0, %v288
      %v290 = vrot.slane %v285, %v289
      %v300 = vunpack.c.l.b16 %v273
      %v301 = vunpack.c.l.b16 %v274
      %v302 = vunpack.c.l.b16 %v275
      %v303 = vunpack.c.l.b16 %v276
      %v304 = vunpack.c.l.b16 %v277
      %v305 = vunpack.c.l.b16 %v278
      %v306 = vunpack.c.l.b16 %v279
      %v307 = vunpack.c.l.b16 %v280
      %v308 = vpack.c.b16 %v301, %v300
      %v309 = vpack.c.b16 %v303, %v302
      %v310 = vpack.c.b16 %v305, %v304
      %v311 = vpack.c.b16 %v307, %v306
      %v316 = vunpack.c.l.b16 %v281
      %v317 = vunpack.c.l.b16 %v282
      %v318 = vunpack.c.l.b16 %v283
      %v319 = vunpack.c.l.b16 %v284
      %v320 = vpack.c.b16 %v317, %v316
      %v321 = vpack.c.b16 %v319, %v318
      %vm324 = vcmask 261120
      %v326 = vsel %vm324, %v308, 0
      %v329 = vsel %vm324, %v309, 0
      %v332 = vsel %vm324, %v310, 0
      %v335 = vsel %vm324, %v311, 0
      %337 = vmatprep.subr.bf16.mxu0 0
      %338 = vmatpush1.bf16.msra.mxu0 %v320
      %339 = vmatprep.subr.bf16.mxu0 0
      %340 = vmatpush1.bf16.msra.mxu0 %v321
      %341 = vmatprep.subr.bf16.mxu0 0
      %342 = vmatpush1.bf16.msra.mxu0 0
      %343 = vmatprep.subr.bf16.mxu0 0
      %344 = vmatpush1.bf16.msra.mxu0 0
      %345 = vmatprep.subr.bf16.mxu0 0
      %346 = vmatpush1.bf16.msra.mxu0 0
      %347 = vmatprep.subr.bf16.mxu0 0
      %348 = vmatpush1.bf16.msra.mxu0 0
      %349 = vmatprep.subr.bf16.mxu0 0
      %350 = vmatpush1.bf16.msra.mxu0 0
      %351 = vmatprep.subr.bf16.mxu0 0
      %352 = vmatpush1.bf16.msra.mxu0 0
      %353 = vmatprep.subr.bf16.mxu0 0
      %354 = vmatpush1.bf16.msra.mxu0 0
      %355 = vmatprep.subr.bf16.mxu0 0
      %356 = vmatpush1.bf16.msra.mxu0 0
      %357 = vmatprep.subr.bf16.mxu0 0
      %358 = vmatpush1.bf16.msra.mxu0 0
      %359 = vmatprep.subr.bf16.mxu0 0
      %360 = vmatpush1.bf16.msra.mxu0 0
      %361 = vmatprep.subr.bf16.mxu0 0
      %362 = vmatpush1.bf16.msra.mxu0 0
      %363 = vmatprep.subr.bf16.mxu0 0
      %364 = vmatpush1.bf16.msra.mxu0 0
      %365 = vmatprep.subr.bf16.mxu0 0
      %366 = vmatpush1.bf16.msra.mxu0 0
      %367 = vmatprep.subr.bf16.mxu0 0
      %368 = vmatpush1.bf16.msra.mxu0 0
      %369 = vmatprep.mubr.bf16.mxu0 0
      %370 = vmatmul.mubr.bf16.gmra.mrb[0].mxu0 %v326
      %v371 = vpop.f32.mrb[0].mxu0
      %v372 = vadd.f32 %v290, %v371
      %v373 = vpop.f32.mrb[0].mxu0
      %v374 = vpop.f32.mrb[0].mxu0
      %v375 = vadd.f32 %v290, %v374
      %v376 = vpop.f32.mrb[0].mxu0
      %377 = vmatprep.mubr.bf16.mxu0 0
      %378 = vmatmul.mubr.bf16.gmra.mrb[0].mxu0 %v329
      %v379 = vpop.f32.mrb[0].mxu0
      %v380 = vadd.f32 %v290, %v379
      %v381 = vpop.f32.mrb[0].mxu0
      %v382 = vpop.f32.mrb[0].mxu0
      %v383 = vadd.f32 %v290, %v382
      %v384 = vpop.f32.mrb[0].mxu0
      %385 = vmatprep.mubr.bf16.mxu0 0
      %386 = vmatmul.mubr.bf16.gmra.mrb[0].mxu0 %v332
      %v387 = vpop.f32.mrb[0].mxu0
      %v388 = vadd.f32 %v290, %v387
      %v389 = vpop.f32.mrb[0].mxu0
      %v390 = vpop.f32.mrb[0].mxu0
      %v391 = vadd.f32 %v290, %v390
      %v392 = vpop.f32.mrb[0].mxu0
      %393 = vmatprep.mubr.bf16.mxu0 0
      %394 = vmatmul.mubr.bf16.gmra.mrb[0].mxu0 %v335
      %v395 = vpop.f32.mrb[0].mxu0
      %v396 = vadd.f32 %v290, %v395
      %v397 = vpop.f32.mrb[0].mxu0
      %v398 = vpop.f32.mrb[0].mxu0
      %v399 = vadd.f32 %v290, %v398
      %v400 = vpop.f32.mrb[0].mxu0
      %401 = vdwg.mxu0
      %v402 = vmul.f32 %v372, 0.25
      %v403 = vmul.f32 %v375, 0.25
      %v404 = vmul.f32 %v380, 0.25
      %v405 = vmul.f32 %v383, 0.25
      %v406 = vmul.f32 %v388, 0.25
      %v407 = vmul.f32 %v391, 0.25
      %v408 = vmul.f32 %v396, 0.25
      %v409 = vmul.f32 %v399, 0.25
      %s410 = scalar_lea.vmem %s2, 16
      %v411 = vld [vmem:[%s410] sm:$0xf]
      %v412 = vld [vmem:[%s410 + $0x4] sm:$0xf]
      %v413 = vld [vmem:[%s410 + $0x8] sm:$0xf]
      %v414 = vld [vmem:[%s410 + $0xc] sm:$0xf]
      %s415 = scalar_lea.vmem %s3, 1
      %v416 = vld [vmem:[%s415] sm:$0x1]
      %v418 = vlaneseq
      %v419 = vshrl.u32 %v418, 7
      %v420 = vsub.s32 0, %v419
      %v421 = vrot.slane %v416, %v420
      %423 = vrot.lane.b32.xlu0 %v308, 96
      %v424 = vpop.permute.xlu0 %423
      %425 = vrot.lane.b32.xlu0 %v309, 96
      %v426 = vpop.permute.xlu0 %425
      %427 = vrot.lane.b32.xlu0 %v310, 96
      %v428 = vpop.permute.xlu0 %427
      %429 = vrot.lane.b32.xlu0 %v311, 96
      %v430 = vpop.permute.xlu0 %429
      %v435 = vunpack.c.l.b16 %v411
      %v436 = vunpack.c.l.b16 %v412
      %v437 = vunpack.c.l.b16 %v413
      %v438 = vunpack.c.l.b16 %v414
      %v439 = vpack.c.b16 %v436, %v435
      %v440 = vpack.c.b16 %v438, %v437
      %v444 = vsel %vm324, %v424, 0
      %v447 = vsel %vm324, %v426, 0
      %v450 = vsel %vm324, %v428, 0
      %v453 = vsel %vm324, %v430, 0
      %455 = vmatprep.subr.bf16.mxu0 0
      %456 = vmatpush1.bf16.msra.mxu0 %v439
      %457 = vmatprep.subr.bf16.mxu0 0
      %458 = vmatpush1.bf16.msra.mxu0 %v440
      %459 = vmatprep.subr.bf16.mxu0 0
      %460 = vmatpush1.bf16.msra.mxu0 0
      %461 = vmatprep.subr.bf16.mxu0 0
      %462 = vmatpush1.bf16.msra.mxu0 0
      %463 = vmatprep.subr.bf16.mxu0 0
      %464 = vmatpush1.bf16.msra.mxu0 0
      %465 = vmatprep.subr.bf16.mxu0 0
      %466 = vmatpush1.bf16.msra.mxu0 0
      %467 = vmatprep.subr.bf16.mxu0 0
      %468 = vmatpush1.bf16.msra.mxu0 0
      %469 = vmatprep.subr.bf16.mxu0 0
      %470 = vmatpush1.bf16.msra.mxu0 0
      %471 = vmatprep.subr.bf16.mxu0 0
      %472 = vmatpush1.bf16.msra.mxu0 0
      %473 = vmatprep.subr.bf16.mxu0 0
      %474 = vmatpush1.bf16.msra.mxu0 0
      %475 = vmatprep.subr.bf16.mxu0 0
      %476 = vmatpush1.bf16.msra.mxu0 0
      %477 = vmatprep.subr.bf16.mxu0 0
      %478 = vmatpush1.bf16.msra.mxu0 0
      %479 = vmatprep.subr.bf16.mxu0 0
      %480 = vmatpush1.bf16.msra.mxu0 0
      %481 = vmatprep.subr.bf16.mxu0 0
      %482 = vmatpush1.bf16.msra.mxu0 0
      %483 = vmatprep.subr.bf16.mxu0 0
      %484 = vmatpush1.bf16.msra.mxu0 0
      %485 = vmatprep.subr.bf16.mxu0 0
      %486 = vmatpush1.bf16.msra.mxu0 0
      %487 = vmatprep.mubr.bf16.mxu0 0
      %488 = vmatmul.mubr.bf16.gmra.mrb[0].mxu0 %v444
      %v489 = vpop.f32.mrb[0].mxu0
      %v490 = vadd.f32 %v421, %v489
      %v491 = vpop.f32.mrb[0].mxu0
      %v492 = vpop.f32.mrb[0].mxu0
      %v493 = vadd.f32 %v421, %v492
      %v494 = vpop.f32.mrb[0].mxu0
      %495 = vmatprep.mubr.bf16.mxu0 0
      %496 = vmatmul.mubr.bf16.gmra.mrb[0].mxu0 %v447
      %v497 = vpop.f32.mrb[0].mxu0
      %v498 = vadd.f32 %v421, %v497
      %v499 = vpop.f32.mrb[0].mxu0
      %v500 = vpop.f32.mrb[0].mxu0
      %v501 = vadd.f32 %v421, %v500
      %v502 = vpop.f32.mrb[0].mxu0
      %503 = vmatprep.mubr.bf16.mxu0 0
      %504 = vmatmul.mubr.bf16.gmra.mrb[0].mxu0 %v450
      %v505 = vpop.f32.mrb[0].mxu0
      %v506 = vadd.f32 %v421, %v505
      %v507 = vpop.f32.mrb[0].mxu0
      %v508 = vpop.f32.mrb[0].mxu0
      %v509 = vadd.f32 %v421, %v508
      %v510 = vpop.f32.mrb[0].mxu0
      %511 = vmatprep.mubr.bf16.mxu0 0
      %512 = vmatmul.mubr.bf16.gmra.mrb[0].mxu0 %v453
      %v513 = vpop.f32.mrb[0].mxu0
      %v514 = vadd.f32 %v421, %v513
      %v515 = vpop.f32.mrb[0].mxu0
      %v516 = vpop.f32.mrb[0].mxu0
      %v517 = vadd.f32 %v421, %v516
      %v518 = vpop.f32.mrb[0].mxu0
      %519 = vdwg.mxu0
      %s520 = scalar_lea.vmem %s2, 32
      %v521 = vld [vmem:[%s520] sm:$0xf]
      %v522 = vld [vmem:[%s520 + $0x4] sm:$0xf]
      %v523 = vld [vmem:[%s520 + $0x8] sm:$0xf]
      %v524 = vld [vmem:[%s520 + $0xc] sm:$0xf]
      %s525 = scalar_lea.vmem %s3, 2
      %v526 = vld [vmem:[%s525] sm:$0x1]
      %v528 = vlaneseq
      %v529 = vshrl.u32 %v528, 7
      %v530 = vsub.s32 0, %v529
      %v531 = vrot.slane %v526, %v530
      %533 = vrot.lane.b32.xlu0 %v308, 64
      %v534 = vpop.permute.xlu0 %533
      %535 = vrot.lane.b32.xlu0 %v309, 64
      %v536 = vpop.permute.xlu0 %535
      %537 = vrot.lane.b32.xlu0 %v310, 64
      %v538 = vpop.permute.xlu0 %537
      %539 = vrot.lane.b32.xlu0 %v311, 64
      %v540 = vpop.permute.xlu0 %539
      %v545 = vunpack.c.l.b16 %v521
      %v546 = vunpack.c.l.b16 %v522
      %v547 = vunpack.c.l.b16 %v523
      %v548 = vunpack.c.l.b16 %v524
      %v549 = vpack.c.b16 %v546, %v545
      %v550 = vpack.c.b16 %v548, %v547
      %v554 = vsel %vm324, %v534, 0
      %v557 = vsel %vm324, %v536, 0
      %v560 = vsel %vm324, %v538, 0
      %v563 = vsel %vm324, %v540, 0
      %565 = vmatprep.subr.bf16.mxu0 0
      %566 = vmatpush1.bf16.msra.mxu0 %v549
      %567 = vmatprep.subr.bf16.mxu0 0
      %568 = vmatpush1.bf16.msra.mxu0 %v550
      %569 = vmatprep.subr.bf16.mxu0 0
      %570 = vmatpush1.bf16.msra.mxu0 0
      %571 = vmatprep.subr.bf16.mxu0 0
      %572 = vmatpush1.bf16.msra.mxu0 0
      %573 = vmatprep.subr.bf16.mxu0 0
      %574 = vmatpush1.bf16.msra.mxu0 0
      %575 = vmatprep.subr.bf16.mxu0 0
      %576 = vmatpush1.bf16.msra.mxu0 0
      %577 = vmatprep.subr.bf16.mxu0 0
      %578 = vmatpush1.bf16.msra.mxu0 0
      %579 = vmatprep.subr.bf16.mxu0 0
      %580 = vmatpush1.bf16.msra.mxu0 0
      %581 = vmatprep.subr.bf16.mxu0 0
      %582 = vmatpush1.bf16.msra.mxu0 0
      %583 = vmatprep.subr.bf16.mxu0 0
      %584 = vmatpush1.bf16.msra.mxu0 0
      %585 = vmatprep.subr.bf16.mxu0 0
      %586 = vmatpush1.bf16.msra.mxu0 0
      %587 = vmatprep.subr.bf16.mxu0 0
      %588 = vmatpush1.bf16.msra.mxu0 0
      %589 = vmatprep.subr.bf16.mxu0 0
      %590 = vmatpush1.bf16.msra.mxu0 0
      %591 = vmatprep.subr.bf16.mxu0 0
      %592 = vmatpush1.bf16.msra.mxu0 0
      %593 = vmatprep.subr.bf16.mxu0 0
      %594 = vmatpush1.bf16.msra.mxu0 0
      %595 = vmatprep.subr.bf16.mxu0 0
      %596 = vmatpush1.bf16.msra.mxu0 0
      %597 = vmatprep.mubr.bf16.mxu0 0
      %598 = vmatmul.mubr.bf16.gmra.mrb[0].mxu0 %v554
      %v599 = vpop.f32.mrb[0].mxu0
      %v600 = vadd.f32 %v531, %v599
      %v601 = vpop.f32.mrb[0].mxu0
      %v602 = vpop.f32.mrb[0].mxu0
      %v603 = vadd.f32 %v531, %v602
      %v604 = vpop.f32.mrb[0].mxu0
      %605 = vmatprep.mubr.bf16.mxu0 0
      %606 = vmatmul.mubr.bf16.gmra.mrb[0].mxu0 %v557
      %v607 = vpop.f32.mrb[0].mxu0
      %v608 = vadd.f32 %v531, %v607
      %v609 = vpop.f32.mrb[0].mxu0
      %v610 = vpop.f32.mrb[0].mxu0
      %v611 = vadd.f32 %v531, %v610
      %v612 = vpop.f32.mrb[0].mxu0
      %613 = vmatprep.mubr.bf16.mxu0 0
      %614 = vmatmul.mubr.bf16.gmra.mrb[0].mxu0 %v560
      %v615 = vpop.f32.mrb[0].mxu0
      %v616 = vadd.f32 %v531, %v615
      %v617 = vpop.f32.mrb[0].mxu0
      %v618 = vpop.f32.mrb[0].mxu0
      %v619 = vadd.f32 %v531, %v618
      %v620 = vpop.f32.mrb[0].mxu0
      %621 = vmatprep.mubr.bf16.mxu0 0
      %622 = vmatmul.mubr.bf16.gmra.mrb[0].mxu0 %v563
      %v623 = vpop.f32.mrb[0].mxu0
      %v624 = vadd.f32 %v531, %v623
      %v625 = vpop.f32.mrb[0].mxu0
      %v626 = vpop.f32.mrb[0].mxu0
      %v627 = vadd.f32 %v531, %v626
      %v628 = vpop.f32.mrb[0].mxu0
      %629 = vdwg.mxu0
      %v630 = vpack.c.bf16 %v403, %v402
      %v631 = vpack.c.bf16 %v405, %v404
      %v632 = vpack.c.bf16 %v407, %v406
      %v633 = vpack.c.bf16 %v409, %v408
      %v634 = vpack.c.bf16 %v493, %v490
      %v635 = vpack.c.bf16 %v501, %v498
      %v636 = vpack.c.bf16 %v509, %v506
      %v637 = vpack.c.bf16 %v517, %v514
      %v638 = vpack.c.bf16 %v603, %v600
      %v639 = vpack.c.bf16 %v611, %v608
      %v640 = vpack.c.bf16 %v619, %v616
      %v641 = vpack.c.bf16 %v627, %v624
      %vm642 = vcmask 130048
      %v644 = vsel %vm642, %v630, 0
      %v647 = vsel %vm642, %v631, 0
      %v650 = vsel %vm642, %v632, 0
      %v653 = vsel %vm642, %v633, 0
      %v656 = vsel %vm642, %v634, 0
      %v659 = vsel %vm642, %v635, 0
      %v662 = vsel %vm642, %v636, 0
      %v665 = vsel %vm642, %v637, 0
      %667 = vmatprep.subr.bf16.mxu0 0
      %668 = vmatpush1.bf16.xpose.msra.mxu0 %v656
      %669 = vmatprep.subr.bf16.mxu0 0
      %670 = vmatpush1.bf16.xpose.msra.mxu0 %v659
      %671 = vmatprep.subr.bf16.mxu0 0
      %672 = vmatpush1.bf16.xpose.msra.mxu0 %v662
      %673 = vmatprep.subr.bf16.mxu0 0
      %674 = vmatpush1.bf16.xpose.msra.mxu0 %v665
      %675 = vmatprep.subr.bf16.mxu0 0
      %676 = vmatpush1.bf16.xpose.msra.mxu0 0
      %677 = vmatprep.subr.bf16.mxu0 0
      %678 = vmatpush1.bf16.xpose.msra.mxu0 0
      %679 = vmatprep.subr.bf16.mxu0 0
      %680 = vmatpush1.bf16.xpose.msra.mxu0 0
      %681 = vmatprep.subr.bf16.mxu0 0
      %682 = vmatpush1.bf16.xpose.msra.mxu0 0
      %683 = vmatprep.subr.bf16.mxu0 0
      %684 = vmatpush1.bf16.xpose.msra.mxu0 0
      %685 = vmatprep.subr.bf16.mxu0 0
      %686 = vmatpush1.bf16.xpose.msra.mxu0 0
      %687 = vmatprep.subr.bf16.mxu0 0
      %688 = vmatpush1.bf16.xpose.msra.mxu0 0
      %689 = vmatprep.subr.bf16.mxu0 0
      %690 = vmatpush1.bf16.xpose.msra.mxu0 0
      %691 = vmatprep.subr.bf16.mxu0 0
      %692 = vmatpush1.bf16.xpose.msra.mxu0 0
      %693 = vmatprep.subr.bf16.mxu0 0
      %694 = vmatpush1.bf16.xpose.msra.mxu0 0
      %695 = vmatprep.subr.bf16.mxu0 0
      %696 = vmatpush1.bf16.xpose.msra.mxu0 0
      %697 = vmatprep.subr.bf16.mxu0 0
      %698 = vmatpush1.bf16.xpose.msra.mxu0 0
      %699 = vmatprep.mubr.bf16.mxu0 0
      %700 = vmatmul.mubr.bf16.gmra.mrb[0].mxu0 %v644
      %v701 = vpop.f32.mrb[0].mxu0
      %v702 = vadd.f32 0.0, %v701
      %v703 = vpop.f32.mrb[0].mxu0
      %v704 = vpop.f32.mrb[0].mxu0
      %v705 = vadd.f32 0.0, %v704
      %v706 = vpop.f32.mrb[0].mxu0
      %707 = vmatprep.mubr.bf16.mxu0 0
      %708 = vmatmul.mubr.bf16.gmra.mrb[0].mxu0 %v647
      %v709 = vpop.f32.mrb[0].mxu0
      %v710 = vadd.f32 0.0, %v709
      %v711 = vpop.f32.mrb[0].mxu0
      %v712 = vpop.f32.mrb[0].mxu0
      %v713 = vadd.f32 0.0, %v712
      %v714 = vpop.f32.mrb[0].mxu0
      %715 = vmatprep.mubr.bf16.mxu0 0
      %716 = vmatmul.mubr.bf16.gmra.mrb[0].mxu0 %v650
      %v717 = vpop.f32.mrb[0].mxu0
      %v718 = vadd.f32 0.0, %v717
      %v719 = vpop.f32.mrb[0].mxu0
      %v720 = vpop.f32.mrb[0].mxu0
      %v721 = vadd.f32 0.0, %v720
      %v722 = vpop.f32.mrb[0].mxu0
      %723 = vmatprep.mubr.bf16.mxu0 0
      %724 = vmatmul.mubr.bf16.gmra.mrb[0].mxu0 %v653
      %v725 = vpop.f32.mrb[0].mxu0
      %v726 = vadd.f32 0.0, %v725
      %v727 = vpop.f32.mrb[0].mxu0
      %v728 = vpop.f32.mrb[0].mxu0
      %v729 = vadd.f32 0.0, %v728
      %v730 = vpop.f32.mrb[0].mxu0
      %731 = vdwg.mxu0
      %vm732 = vcmask 523264
      %v733 = vsel %vm732, %v702, -inf
      %734 = vmax.xlane.f32.xlu0 %v733
      %v735 = vpop.xlane.xlu0 %734
      %v736 = vsel %vm732, %v705, -inf
      %737 = vmax.xlane.f32.xlu0 %v736
      %v738 = vpop.xlane.xlu0 %737
      %v739 = vsel %vm732, %v710, -inf
      %740 = vmax.xlane.f32.xlu0 %v739
      %v741 = vpop.xlane.xlu0 %740
      %v742 = vsel %vm732, %v713, -inf
      %743 = vmax.xlane.f32.xlu0 %v742
      %v744 = vpop.xlane.xlu0 %743
      %v745 = vsel %vm732, %v718, -inf
      %746 = vmax.xlane.f32.xlu0 %v745
      %v747 = vpop.xlane.xlu0 %746
      %v748 = vsel %vm732, %v721, -inf
      %749 = vmax.xlane.f32.xlu0 %v748
      %v750 = vpop.xlane.xlu0 %749
      %v751 = vsel %vm732, %v726, -inf
      %752 = vmax.xlane.f32.xlu0 %v751
      %v753 = vpop.xlane.xlu0 %752
      %v754 = vsel %vm732, %v729, -inf
      %755 = vmax.xlane.f32.xlu0 %v754
      %v756 = vpop.xlane.xlu0 %755
      %v757 = vsub.f32 %v702, %v735
      %v758 = vsub.f32 %v705, %v738
      %v759 = vsub.f32 %v710, %v741
      %v760 = vsub.f32 %v713, %v744
      %v761 = vsub.f32 %v718, %v747
      %v762 = vsub.f32 %v721, %v750
      %v763 = vsub.f32 %v726, %v753
      %v764 = vsub.f32 %v729, %v756
      %v765 = vmul.f32 %v757, 1.442695
      %v766 = vpow.pop %v765
      %v767 = vmul.f32 %v758, 1.442695
      %v768 = vpow.pop %v767
      %v769 = vmul.f32 %v759, 1.442695
      %v770 = vpow.pop %v769
      %v771 = vmul.f32 %v760, 1.442695
      %v772 = vpow.pop %v771
      %v773 = vmul.f32 %v761, 1.442695
      %v774 = vpow.pop %v773
      %v775 = vmul.f32 %v762, 1.442695
      %v776 = vpow.pop %v775
      %v777 = vmul.f32 %v763, 1.442695
      %v778 = vpow.pop %v777
      %v779 = vmul.f32 %v764, 1.442695
      %v780 = vpow.pop %v779
      %v781 = vsel %vm732, %v766, 0.0
      %782 = vadd.xlane.f32.xlu0 %v781
      %v783 = vpop.xlane.xlu0 %782
      %v784 = vsel %vm732, %v768, 0.0
      %785 = vadd.xlane.f32.xlu0 %v784
      %v786 = vpop.xlane.xlu0 %785
      %v787 = vsel %vm732, %v770, 0.0
      %788 = vadd.xlane.f32.xlu0 %v787
      %v789 = vpop.xlane.xlu0 %788
      %v790 = vsel %vm732, %v772, 0.0
      %791 = vadd.xlane.f32.xlu0 %v790
      %v792 = vpop.xlane.xlu0 %791
      %v793 = vsel %vm732, %v774, 0.0
      %794 = vadd.xlane.f32.xlu0 %v793
      %v795 = vpop.xlane.xlu0 %794
      %v796 = vsel %vm732, %v776, 0.0
      %797 = vadd.xlane.f32.xlu0 %v796
      %v798 = vpop.xlane.xlu0 %797
      %v799 = vsel %vm732, %v778, 0.0
      %800 = vadd.xlane.f32.xlu0 %v799
      %v801 = vpop.xlane.xlu0 %800
      %v802 = vsel %vm732, %v780, 0.0
      %803 = vadd.xlane.f32.xlu0 %v802
      %v804 = vpop.xlane.xlu0 %803
      %v805 = vrcp.pop %v783
      %v806 = vrcp.pop %v786
      %v807 = vrcp.pop %v789
      %v808 = vrcp.pop %v792
      %v809 = vrcp.pop %v795
      %v810 = vrcp.pop %v798
      %v811 = vrcp.pop %v801
      %v812 = vrcp.pop %v804
      %v813 = vmul.f32 %v766, %v805
      %v814 = vmul.f32 %v768, %v806
      %v815 = vmul.f32 %v770, %v807
      %v816 = vmul.f32 %v772, %v808
      %v817 = vmul.f32 %v774, %v809
      %v818 = vmul.f32 %v776, %v810
      %v819 = vmul.f32 %v778, %v811
      %v820 = vmul.f32 %v780, %v812
      %v821 = vpack.c.bf16 %v814, %v813
      %v822 = vpack.c.bf16 %v816, %v815
      %v823 = vpack.c.bf16 %v818, %v817
      %v824 = vpack.c.bf16 %v820, %v819
      %v826 = vsel %vm732, %v821, 0
      %v829 = vsel %vm732, %v822, 0
      %v832 = vsel %vm732, %v823, 0
      %v835 = vsel %vm732, %v824, 0
      %837 = vmatprep.subr.bf16.mxu0 0
      %838 = vmatpush1.bf16.msra.mxu0 %v638
      %839 = vmatprep.subr.bf16.mxu0 0
      %840 = vmatpush1.bf16.msra.mxu0 %v639
      %841 = vmatprep.subr.bf16.mxu0 0
      %842 = vmatpush1.bf16.msra.mxu0 %v640
      %843 = vmatprep.subr.bf16.mxu0 0
      %844 = vmatpush1.bf16.msra.mxu0 %v641
      %845 = vmatprep.subr.bf16.mxu0 0
      %846 = vmatpush1.bf16.msra.mxu0 0
      %847 = vmatprep.subr.bf16.mxu0 0
      %848 = vmatpush1.bf16.msra.mxu0 0
      %849 = vmatprep.subr.bf16.mxu0 0
      %850 = vmatpush1.bf16.msra.mxu0 0
      %851 = vmatprep.subr.bf16.mxu0 0
      %852 = vmatpush1.bf16.msra.mxu0 0
      %853 = vmatprep.subr.bf16.mxu0 0
      %854 = vmatpush1.bf16.msra.mxu0 0
      %855 = vmatprep.subr.bf16.mxu0 0
      %856 = vmatpush1.bf16.msra.mxu0 0
      %857 = vmatprep.subr.bf16.mxu0 0
      %858 = vmatpush1.bf16.msra.mxu0 0
      %859 = vmatprep.subr.bf16.mxu0 0
      %860 = vmatpush1.bf16.msra.mxu0 0
      %861 = vmatprep.subr.bf16.mxu0 0
      %862 = vmatpush1.bf16.msra.mxu0 0
      %863 = vmatprep.subr.bf16.mxu0 0
      %864 = vmatpush1.bf16.msra.mxu0 0
      %865 = vmatprep.subr.bf16.mxu0 0
      %866 = vmatpush1.bf16.msra.mxu0 0
      %867 = vmatprep.subr.bf16.mxu0 0
      %868 = vmatpush1.bf16.msra.mxu0 0
      %869 = vmatprep.mubr.bf16.mxu0 0
      %870 = vmatmul.mubr.bf16.gmra.mrb[0].mxu0 %v826
      %v871 = vpop.f32.mrb[0].mxu0
      %v872 = vadd.f32 0.0, %v871
      %v873 = vpop.f32.mrb[0].mxu0
      %v874 = vpop.f32.mrb[0].mxu0
      %v875 = vadd.f32 0.0, %v874
      %v876 = vpop.f32.mrb[0].mxu0
      %877 = vmatprep.mubr.bf16.mxu0 0
      %878 = vmatmul.mubr.bf16.gmra.mrb[0].mxu0 %v829
      %v879 = vpop.f32.mrb[0].mxu0
      %v880 = vadd.f32 0.0, %v879
      %v881 = vpop.f32.mrb[0].mxu0
      %v882 = vpop.f32.mrb[0].mxu0
      %v883 = vadd.f32 0.0, %v882
      %v884 = vpop.f32.mrb[0].mxu0
      %885 = vmatprep.mubr.bf16.mxu0 0
      %886 = vmatmul.mubr.bf16.gmra.mrb[0].mxu0 %v832
      %v887 = vpop.f32.mrb[0].mxu0
      %v888 = vadd.f32 0.0, %v887
      %v889 = vpop.f32.mrb[0].mxu0
      %v890 = vpop.f32.mrb[0].mxu0
      %v891 = vadd.f32 0.0, %v890
      %v892 = vpop.f32.mrb[0].mxu0
      %893 = vmatprep.mubr.bf16.mxu0 0
      %894 = vmatmul.mubr.bf16.gmra.mrb[0].mxu0 %v835
      %v895 = vpop.f32.mrb[0].mxu0
      %v896 = vadd.f32 0.0, %v895
      %v897 = vpop.f32.mrb[0].mxu0
      %v898 = vpop.f32.mrb[0].mxu0
      %v899 = vadd.f32 0.0, %v898
      %v900 = vpop.f32.mrb[0].mxu0
      %901 = vdwg.mxu0
      %906 = vrot.lane.b32.xlu0 %v630, 112
      %v907 = vpop.permute.xlu0 %906
      %908 = vrot.lane.b32.xlu0 %v631, 112
      %v909 = vpop.permute.xlu0 %908
      %910 = vrot.lane.b32.xlu0 %v632, 112
      %v911 = vpop.permute.xlu0 %910
      %912 = vrot.lane.b32.xlu0 %v633, 112
      %v913 = vpop.permute.xlu0 %912
      %918 = vrot.lane.b32.xlu0 %v634, 112
      %v919 = vpop.permute.xlu0 %918
      %920 = vrot.lane.b32.xlu0 %v635, 112
      %v921 = vpop.permute.xlu0 %920
      %922 = vrot.lane.b32.xlu0 %v636, 112
      %v923 = vpop.permute.xlu0 %922
      %924 = vrot.lane.b32.xlu0 %v637, 112
      %v925 = vpop.permute.xlu0 %924
      %v927 = vsel %vm642, %v907, 0
      %v930 = vsel %vm642, %v909, 0
      %v933 = vsel %vm642, %v911, 0
      %v936 = vsel %vm642, %v913, 0
      %v939 = vsel %vm642, %v919, 0
      %v942 = vsel %vm642, %v921, 0
      %v945 = vsel %vm642, %v923, 0
      %v948 = vsel %vm642, %v925, 0
      %950 = vmatprep.subr.bf16.mxu0 0
      %951 = vmatpush1.bf16.xpose.msra.mxu0 %v939
      %952 = vmatprep.subr.bf16.mxu0 0
      %953 = vmatpush1.bf16.xpose.msra.mxu0 %v942
      %954 = vmatprep.subr.bf16.mxu0 0
      %955 = vmatpush1.bf16.xpose.msra.mxu0 %v945
      %956 = vmatprep.subr.bf16.mxu0 0
      %957 = vmatpush1.bf16.xpose.msra.mxu0 %v948
      %958 = vmatprep.subr.bf16.mxu0 0
      %959 = vmatpush1.bf16.xpose.msra.mxu0 0
      %960 = vmatprep.subr.bf16.mxu0 0
      %961 = vmatpush1.bf16.xpose.msra.mxu0 0
      %962 = vmatprep.subr.bf16.mxu0 0
      %963 = vmatpush1.bf16.xpose.msra.mxu0 0
      %964 = vmatprep.subr.bf16.mxu0 0
      %965 = vmatpush1.bf16.xpose.msra.mxu0 0
      %966 = vmatprep.subr.bf16.mxu0 0
      %967 = vmatpush1.bf16.xpose.msra.mxu0 0
      %968 = vmatprep.subr.bf16.mxu0 0
      %969 = vmatpush1.bf16.xpose.msra.mxu0 0
      %970 = vmatprep.subr.bf16.mxu0 0
      %971 = vmatpush1.bf16.xpose.msra.mxu0 0
      %972 = vmatprep.subr.bf16.mxu0 0
      %973 = vmatpush1.bf16.xpose.msra.mxu0 0
      %974 = vmatprep.subr.bf16.mxu0 0
      %975 = vmatpush1.bf16.xpose.msra.mxu0 0
      %976 = vmatprep.subr.bf16.mxu0 0
      %977 = vmatpush1.bf16.xpose.msra.mxu0 0
      %978 = vmatprep.subr.bf16.mxu0 0
      %979 = vmatpush1.bf16.xpose.msra.mxu0 0
      %980 = vmatprep.subr.bf16.mxu0 0
      %981 = vmatpush1.bf16.xpose.msra.mxu0 0
      %982 = vmatprep.mubr.bf16.mxu0 0
      %983 = vmatmul.mubr.bf16.gmra.mrb[0].mxu0 %v927
      %v984 = vpop.f32.mrb[0].mxu0
      %v985 = vadd.f32 0.0, %v984
      %v986 = vpop.f32.mrb[0].mxu0
      %v987 = vpop.f32.mrb[0].mxu0
      %v988 = vadd.f32 0.0, %v987
      %v989 = vpop.f32.mrb[0].mxu0
      %990 = vmatprep.mubr.bf16.mxu0 0
      %991 = vmatmul.mubr.bf16.gmra.mrb[0].mxu0 %v930
      %v992 = vpop.f32.mrb[0].mxu0
      %v993 = vadd.f32 0.0, %v992
      %v994 = vpop.f32.mrb[0].mxu0
      %v995 = vpop.f32.mrb[0].mxu0
      %v996 = vadd.f32 0.0, %v995
      %v997 = vpop.f32.mrb[0].mxu0
      %998 = vmatprep.mubr.bf16.mxu0 0
      %999 = vmatmul.mubr.bf16.gmra.mrb[0].mxu0 %v933
      %v1000 = vpop.f32.mrb[0].mxu0
      %v1001 = vadd.f32 0.0, %v1000
      %v1002 = vpop.f32.mrb[0].mxu0
      %v1003 = vpop.f32.mrb[0].mxu0
      %v1004 = vadd.f32 0.0, %v1003
      %v1005 = vpop.f32.mrb[0].mxu0
      %1006 = vmatprep.mubr.bf16.mxu0 0
      %1007 = vmatmul.mubr.bf16.gmra.mrb[0].mxu0 %v936
      %v1008 = vpop.f32.mrb[0].mxu0
      %v1009 = vadd.f32 0.0, %v1008
      %v1010 = vpop.f32.mrb[0].mxu0
      %v1011 = vpop.f32.mrb[0].mxu0
      %v1012 = vadd.f32 0.0, %v1011
      %v1013 = vpop.f32.mrb[0].mxu0
      %1014 = vdwg.mxu0
      %v1015 = vsel %vm732, %v985, -inf
      %1016 = vmax.xlane.f32.xlu0 %v1015
      %v1017 = vpop.xlane.xlu0 %1016
      %v1018 = vsel %vm732, %v988, -inf
      %1019 = vmax.xlane.f32.xlu0 %v1018
      %v1020 = vpop.xlane.xlu0 %1019
      %v1021 = vsel %vm732, %v993, -inf
      %1022 = vmax.xlane.f32.xlu0 %v1021
      %v1023 = vpop.xlane.xlu0 %1022
      %v1024 = vsel %vm732, %v996, -inf
      %1025 = vmax.xlane.f32.xlu0 %v1024
      %v1026 = vpop.xlane.xlu0 %1025
      %v1027 = vsel %vm732, %v1001, -inf
      %1028 = vmax.xlane.f32.xlu0 %v1027
      %v1029 = vpop.xlane.xlu0 %1028
      %v1030 = vsel %vm732, %v1004, -inf
      %1031 = vmax.xlane.f32.xlu0 %v1030
      %v1032 = vpop.xlane.xlu0 %1031
      %v1033 = vsel %vm732, %v1009, -inf
      %1034 = vmax.xlane.f32.xlu0 %v1033
      %v1035 = vpop.xlane.xlu0 %1034
      %v1036 = vsel %vm732, %v1012, -inf
      %1037 = vmax.xlane.f32.xlu0 %v1036
      %v1038 = vpop.xlane.xlu0 %1037
      %v1039 = vsub.f32 %v985, %v1017
      %v1040 = vsub.f32 %v988, %v1020
      %v1041 = vsub.f32 %v993, %v1023
      %v1042 = vsub.f32 %v996, %v1026
      %v1043 = vsub.f32 %v1001, %v1029
      %v1044 = vsub.f32 %v1004, %v1032
      %v1045 = vsub.f32 %v1009, %v1035
      %v1046 = vsub.f32 %v1012, %v1038
      %v1047 = vmul.f32 %v1039, 1.442695
      %v1048 = vpow.pop %v1047
      %v1049 = vmul.f32 %v1040, 1.442695
      %v1050 = vpow.pop %v1049
      %v1051 = vmul.f32 %v1041, 1.442695
      %v1052 = vpow.pop %v1051
      %v1053 = vmul.f32 %v1042, 1.442695
      %v1054 = vpow.pop %v1053
      %v1055 = vmul.f32 %v1043, 1.442695
      %v1056 = vpow.pop %v1055
      %v1057 = vmul.f32 %v1044, 1.442695
      %v1058 = vpow.pop %v1057
      %v1059 = vmul.f32 %v1045, 1.442695
      %v1060 = vpow.pop %v1059
      %v1061 = vmul.f32 %v1046, 1.442695
      %v1062 = vpow.pop %v1061
      %v1063 = vsel %vm732, %v1048, 0.0
      %1064 = vadd.xlane.f32.xlu0 %v1063
      %v1065 = vpop.xlane.xlu0 %1064
      %v1066 = vsel %vm732, %v1050, 0.0
      %1067 = vadd.xlane.f32.xlu0 %v1066
      %v1068 = vpop.xlane.xlu0 %1067
      %v1069 = vsel %vm732, %v1052, 0.0
      %1070 = vadd.xlane.f32.xlu0 %v1069
      %v1071 = vpop.xlane.xlu0 %1070
      %v1072 = vsel %vm732, %v1054, 0.0
      %1073 = vadd.xlane.f32.xlu0 %v1072
      %v1074 = vpop.xlane.xlu0 %1073
      %v1075 = vsel %vm732, %v1056, 0.0
      %1076 = vadd.xlane.f32.xlu0 %v1075
      %v1077 = vpop.xlane.xlu0 %1076
      %v1078 = vsel %vm732, %v1058, 0.0
      %1079 = vadd.xlane.f32.xlu0 %v1078
      %v1080 = vpop.xlane.xlu0 %1079
      %v1081 = vsel %vm732, %v1060, 0.0
      %1082 = vadd.xlane.f32.xlu0 %v1081
      %v1083 = vpop.xlane.xlu0 %1082
      %v1084 = vsel %vm732, %v1062, 0.0
      %1085 = vadd.xlane.f32.xlu0 %v1084
      %v1086 = vpop.xlane.xlu0 %1085
      %v1087 = vrcp.pop %v1065
      %v1088 = vrcp.pop %v1068
      %v1089 = vrcp.pop %v1071
      %v1090 = vrcp.pop %v1074
      %v1091 = vrcp.pop %v1077
      %v1092 = vrcp.pop %v1080
      %v1093 = vrcp.pop %v1083
      %v1094 = vrcp.pop %v1086
      %v1095 = vmul.f32 %v1048, %v1087
      %v1096 = vmul.f32 %v1050, %v1088
      %v1097 = vmul.f32 %v1052, %v1089
      %v1098 = vmul.f32 %v1054, %v1090
      %v1099 = vmul.f32 %v1056, %v1091
      %v1100 = vmul.f32 %v1058, %v1092
      %v1101 = vmul.f32 %v1060, %v1093
      %v1102 = vmul.f32 %v1062, %v1094
      %v1103 = vpack.c.bf16 %v1096, %v1095
      %v1104 = vpack.c.bf16 %v1098, %v1097
      %v1105 = vpack.c.bf16 %v1100, %v1099
      %v1106 = vpack.c.bf16 %v1102, %v1101
      %1111 = vrot.lane.b32.xlu0 %v638, 112
      %v1112 = vpop.permute.xlu0 %1111
      %1113 = vrot.lane.b32.xlu0 %v639, 112
      %v1114 = vpop.permute.xlu0 %1113
      %1115 = vrot.lane.b32.xlu0 %v640, 112
      %v1116 = vpop.permute.xlu0 %1115
      %1117 = vrot.lane.b32.xlu0 %v641, 112
      %v1118 = vpop.permute.xlu0 %1117
      %v1124 = vsel %vm732, %v1103, 0
      %v1127 = vsel %vm732, %v1104, 0
      %v1130 = vsel %vm732, %v1105, 0
      %v1133 = vsel %vm732, %v1106, 0
      %1135 = vmatprep.subr.bf16.mxu0 0
      %1136 = vmatpush1.bf16.msra.mxu0 %v1112
      %1137 = vmatprep.subr.bf16.mxu0 0
      %1138 = vmatpush1.bf16.msra.mxu0 %v1114
      %1139 = vmatprep.subr.bf16.mxu0 0
      %1140 = vmatpush1.bf16.msra.mxu0 %v1116
      %1141 = vmatprep.subr.bf16.mxu0 0
      %1142 = vmatpush1.bf16.msra.mxu0 %v1118
      %1143 = vmatprep.subr.bf16.mxu0 0
      %1144 = vmatpush1.bf16.msra.mxu0 0
      %1145 = vmatprep.subr.bf16.mxu0 0
      %1146 = vmatpush1.bf16.msra.mxu0 0
      %1147 = vmatprep.subr.bf16.mxu0 0
      %1148 = vmatpush1.bf16.msra.mxu0 0
      %1149 = vmatprep.subr.bf16.mxu0 0
      %1150 = vmatpush1.bf16.msra.mxu0 0
      %1151 = vmatprep.subr.bf16.mxu0 0
      %1152 = vmatpush1.bf16.msra.mxu0 0
      %1153 = vmatprep.subr.bf16.mxu0 0
      %1154 = vmatpush1.bf16.msra.mxu0 0
      %1155 = vmatprep.subr.bf16.mxu0 0
      %1156 = vmatpush1.bf16.msra.mxu0 0
      %1157 = vmatprep.subr.bf16.mxu0 0
      %1158 = vmatpush1.bf16.msra.mxu0 0
      %1159 = vmatprep.subr.bf16.mxu0 0
      %1160 = vmatpush1.bf16.msra.mxu0 0
      %1161 = vmatprep.subr.bf16.mxu0 0
      %1162 = vmatpush1.bf16.msra.mxu0 0
      %1163 = vmatprep.subr.bf16.mxu0 0
      %1164 = vmatpush1.bf16.msra.mxu0 0
      %1165 = vmatprep.subr.bf16.mxu0 0
      %1166 = vmatpush1.bf16.msra.mxu0 0
      %1167 = vmatprep.mubr.bf16.mxu0 0
      %1168 = vmatmul.mubr.bf16.gmra.mrb[0].mxu0 %v1124
      %v1169 = vpop.f32.mrb[0].mxu0
      %v1170 = vadd.f32 0.0, %v1169
      %v1171 = vpop.f32.mrb[0].mxu0
      %v1172 = vpop.f32.mrb[0].mxu0
      %v1173 = vadd.f32 0.0, %v1172
      %v1174 = vpop.f32.mrb[0].mxu0
      %1175 = vmatprep.mubr.bf16.mxu0 0
      %1176 = vmatmul.mubr.bf16.gmra.mrb[0].mxu0 %v1127
      %v1177 = vpop.f32.mrb[0].mxu0
      %v1178 = vadd.f32 0.0, %v1177
      %v1179 = vpop.f32.mrb[0].mxu0
      %v1180 = vpop.f32.mrb[0].mxu0
      %v1181 = vadd.f32 0.0, %v1180
      %v1182 = vpop.f32.mrb[0].mxu0
      %1183 = vmatprep.mubr.bf16.mxu0 0
      %1184 = vmatmul.mubr.bf16.gmra.mrb[0].mxu0 %v1130
      %v1185 = vpop.f32.mrb[0].mxu0
      %v1186 = vadd.f32 0.0, %v1185
      %v1187 = vpop.f32.mrb[0].mxu0
      %v1188 = vpop.f32.mrb[0].mxu0
      %v1189 = vadd.f32 0.0, %v1188
      %v1190 = vpop.f32.mrb[0].mxu0
      %1191 = vmatprep.mubr.bf16.mxu0 0
      %1192 = vmatmul.mubr.bf16.gmra.mrb[0].mxu0 %v1133
      %v1193 = vpop.f32.mrb[0].mxu0
      %v1194 = vadd.f32 0.0, %v1193
      %v1195 = vpop.f32.mrb[0].mxu0
      %v1196 = vpop.f32.mrb[0].mxu0
      %v1197 = vadd.f32 0.0, %v1196
      %v1198 = vpop.f32.mrb[0].mxu0
      %1199 = vdwg.mxu0
      %1208 = vrot.lane.b32.xlu0 %v1170, 16
      %v1209 = vpop.permute.xlu0 %1208
      %1210 = vrot.lane.b32.xlu0 %v1173, 16
      %v1211 = vpop.permute.xlu0 %1210
      %1212 = vrot.lane.b32.xlu0 %v1178, 16
      %v1213 = vpop.permute.xlu0 %1212
      %1214 = vrot.lane.b32.xlu0 %v1181, 16
      %v1215 = vpop.permute.xlu0 %1214
      %1216 = vrot.lane.b32.xlu0 %v1186, 16
      %v1217 = vpop.permute.xlu0 %1216
      %1218 = vrot.lane.b32.xlu0 %v1189, 16
      %v1219 = vpop.permute.xlu0 %1218
      %1220 = vrot.lane.b32.xlu0 %v1194, 16
      %v1221 = vpop.permute.xlu0 %1220
      %1222 = vrot.lane.b32.xlu0 %v1197, 16
      %v1223 = vpop.permute.xlu0 %1222
      %v1232 = vsel %vm642, %v872, %v1209
      %v1233 = vsel %vm642, %v875, %v1211
      %v1234 = vsel %vm642, %v880, %v1213
      %v1235 = vsel %vm642, %v883, %v1215
      %v1236 = vsel %vm642, %v888, %v1217
      %v1237 = vsel %vm642, %v891, %v1219
      %v1238 = vsel %vm642, %v896, %v1221
      %v1239 = vsel %vm642, %v899, %v1223
      %v1240 = vpack.c.bf16 %v1233, %v1232
      %v1241 = vpack.c.bf16 %v1235, %v1234
      %v1242 = vpack.c.bf16 %v1237, %v1236
      %v1243 = vpack.c.bf16 %v1239, %v1238
      %v1244 = vld [vmem:[%s4] sm:$0xf]
      %v1245 = vld [vmem:[%s4 + $0x4] sm:$0xf]
      %v1246 = vld [vmem:[%s4 + $0x8] sm:$0xf]
      %v1247 = vld [vmem:[%s4 + $0xc] sm:$0xf]
      %v1248 = vld [vmem:[%s5] sm:$0x1]
      %v1250 = vlaneseq
      %v1251 = vshrl.u32 %v1250, 7
      %v1252 = vsub.s32 0, %v1251
      %v1253 = vrot.slane %v1248, %v1252
      %v1259 = vunpack.c.l.b16 %v1244
      %v1260 = vunpack.c.l.b16 %v1245
      %v1261 = vunpack.c.l.b16 %v1246
      %v1262 = vunpack.c.l.b16 %v1247
      %v1263 = vpack.c.b16 %v1260, %v1259
      %v1264 = vpack.c.b16 %v1262, %v1261
      %v1268 = vsel %vm324, %v1240, 0
      %v1271 = vsel %vm324, %v1241, 0
      %v1274 = vsel %vm324, %v1242, 0
      %v1277 = vsel %vm324, %v1243, 0
      %1279 = vmatprep.subr.bf16.mxu0 0
      %1280 = vmatpush1.bf16.msra.mxu0 %v1263
      %1281 = vmatprep.subr.bf16.mxu0 0
      %1282 = vmatpush1.bf16.msra.mxu0 %v1264
      %1283 = vmatprep.subr.bf16.mxu0 0
      %1284 = vmatpush1.bf16.msra.mxu0 0
      %1285 = vmatprep.subr.bf16.mxu0 0
      %1286 = vmatpush1.bf16.msra.mxu0 0
      %1287 = vmatprep.subr.bf16.mxu0 0
      %1288 = vmatpush1.bf16.msra.mxu0 0
      %1289 = vmatprep.subr.bf16.mxu0 0
      %1290 = vmatpush1.bf16.msra.mxu0 0
      %1291 = vmatprep.subr.bf16.mxu0 0
      %1292 = vmatpush1.bf16.msra.mxu0 0
      %1293 = vmatprep.subr.bf16.mxu0 0
      %1294 = vmatpush1.bf16.msra.mxu0 0
      %1295 = vmatprep.subr.bf16.mxu0 0
      %1296 = vmatpush1.bf16.msra.mxu0 0
      %1297 = vmatprep.subr.bf16.mxu0 0
      %1298 = vmatpush1.bf16.msra.mxu0 0
      %1299 = vmatprep.subr.bf16.mxu0 0
      %1300 = vmatpush1.bf16.msra.mxu0 0
      %1301 = vmatprep.subr.bf16.mxu0 0
      %1302 = vmatpush1.bf16.msra.mxu0 0
      %1303 = vmatprep.subr.bf16.mxu0 0
      %1304 = vmatpush1.bf16.msra.mxu0 0
      %1305 = vmatprep.subr.bf16.mxu0 0
      %1306 = vmatpush1.bf16.msra.mxu0 0
      %1307 = vmatprep.subr.bf16.mxu0 0
      %1308 = vmatpush1.bf16.msra.mxu0 0
      %1309 = vmatprep.subr.bf16.mxu0 0
      %1310 = vmatpush1.bf16.msra.mxu0 0
      %1311 = vmatprep.mubr.bf16.mxu0 0
      %1312 = vmatmul.mubr.bf16.gmra.mrb[0].mxu0 %v1268
      %v1313 = vpop.f32.mrb[0].mxu0
      %v1314 = vadd.f32 %v1253, %v1313
      %v1315 = vpop.f32.mrb[0].mxu0
      %v1316 = vpop.f32.mrb[0].mxu0
      %v1317 = vadd.f32 %v1253, %v1316
      %v1318 = vpop.f32.mrb[0].mxu0
      %1319 = vmatprep.mubr.bf16.mxu0 0
      %1320 = vmatmul.mubr.bf16.gmra.mrb[0].mxu0 %v1271
      %v1321 = vpop.f32.mrb[0].mxu0
      %v1322 = vadd.f32 %v1253, %v1321
      %v1323 = vpop.f32.mrb[0].mxu0
      %v1324 = vpop.f32.mrb[0].mxu0
      %v1325 = vadd.f32 %v1253, %v1324
      %v1326 = vpop.f32.mrb[0].mxu0
      %1327 = vmatprep.mubr.bf16.mxu0 0
      %1328 = vmatmul.mubr.bf16.gmra.mrb[0].mxu0 %v1274
      %v1329 = vpop.f32.mrb[0].mxu0
      %v1330 = vadd.f32 %v1253, %v1329
      %v1331 = vpop.f32.mrb[0].mxu0
      %v1332 = vpop.f32.mrb[0].mxu0
      %v1333 = vadd.f32 %v1253, %v1332
      %v1334 = vpop.f32.mrb[0].mxu0
      %1335 = vmatprep.mubr.bf16.mxu0 0
      %1336 = vmatmul.mubr.bf16.gmra.mrb[0].mxu0 %v1277
      %v1337 = vpop.f32.mrb[0].mxu0
      %v1338 = vadd.f32 %v1253, %v1337
      %v1339 = vpop.f32.mrb[0].mxu0
      %v1340 = vpop.f32.mrb[0].mxu0
      %v1341 = vadd.f32 %v1253, %v1340
      %v1342 = vpop.f32.mrb[0].mxu0
      %1343 = vdwg.mxu0
      %v1344 = vld [vmem:[%s266] sm:$0xf]
      %v1345 = vld [vmem:[%s266 + $0x4] sm:$0xf]
      %v1346 = vld [vmem:[%s266 + $0x8] sm:$0xf]
      %v1347 = vld [vmem:[%s266 + $0xc] sm:$0xf]
      %v1348 = vld [vmem:[%s266 + $0x10] sm:$0xf]
      %v1349 = vld [vmem:[%s266 + $0x14] sm:$0xf]
      %v1350 = vld [vmem:[%s266 + $0x18] sm:$0xf]
      %v1351 = vld [vmem:[%s266 + $0x1c] sm:$0xf]
      %v1352 = vunpack.c.l.bf16 %v1344
      %v1353 = vunpack.c.l.bf16 %v1345
      %v1354 = vunpack.c.l.bf16 %v1346
      %v1355 = vunpack.c.l.bf16 %v1347
      %v1356 = vunpack.c.l.bf16 %v1348
      %v1357 = vunpack.c.l.bf16 %v1349
      %v1358 = vunpack.c.l.bf16 %v1350
      %v1359 = vunpack.c.l.bf16 %v1351
      %v1360 = vadd.f32 %v1314, %v1352
      %v1361 = vadd.f32 %v1317, %v1353
      %v1362 = vadd.f32 %v1322, %v1354
      %v1363 = vadd.f32 %v1325, %v1355
      %v1364 = vadd.f32 %v1330, %v1356
      %v1365 = vadd.f32 %v1333, %v1357
      %v1366 = vadd.f32 %v1338, %v1358
      %v1367 = vadd.f32 %v1341, %v1359
      %v1368 = vpack.c.bf16 %v1361, %v1360
      %v1369 = vpack.c.bf16 %v1363, %v1362
      %v1370 = vpack.c.bf16 %v1365, %v1364
      %v1371 = vpack.c.bf16 %v1367, %v1366
      %v1376 = vunpack.c.l.b16 %v1368
      %v1377 = vunpack.c.h.b16 %v1368
      %v1378 = vunpack.c.l.b16 %v1369
      %v1379 = vunpack.c.h.b16 %v1369
      %v1380 = vunpack.c.l.b16 %v1370
      %v1381 = vunpack.c.h.b16 %v1370
      %v1382 = vunpack.c.l.b16 %v1371
      %v1383 = vunpack.c.h.b16 %v1371
      %v1384 = vpack.c.b16 %v1376, %v1376
      %v1385 = vpack.c.b16 %v1377, %v1377
      %v1386 = vpack.c.b16 %v1378, %v1378
      %v1387 = vpack.c.b16 %v1379, %v1379
      %v1388 = vpack.c.b16 %v1380, %v1380
      %v1389 = vpack.c.b16 %v1381, %v1381
      %v1390 = vpack.c.b16 %v1382, %v1382
      %v1391 = vpack.c.b16 %v1383, %v1383
      %vm1400 = vcmask 257024
      %1401 = vst.msk [vmem:[%s271] sm:$0xf] %vm1400, %v1384
      %1402 = vst.msk [vmem:[%s271 + $0x4] sm:$0xf] %vm1400, %v1385
      %1403 = vst.msk [vmem:[%s271 + $0x8] sm:$0xf] %vm1400, %v1386
      %1404 = vst.msk [vmem:[%s271 + $0xc] sm:$0xf] %vm1400, %v1387
      %1405 = vst.msk [vmem:[%s271 + $0x10] sm:$0xf] %vm1400, %v1388
      %1406 = vst.msk [vmem:[%s271 + $0x14] sm:$0xf] %vm1400, %v1389
      %1407 = vst.msk [vmem:[%s271 + $0x18] sm:$0xf] %vm1400, %v1390
      %1408 = vst.msk [vmem:[%s271 + $0x1c] sm:$0xf] %vm1400, %v1391
      %p1409 = scmp.lt.s32.totalorder %s17, 1
      %s1410 = scalar_select %p1409, %s17, 1
      %s1411 = smul.addr %s1410, 8
      %s1412 = smul.addr %s1411, 4
      %s1413 = scalar_lea.vmem %s6, %s1412
      // Predicated region
      $region45: #{cvt_stage_forward.10} parent=43 // pred_check
        %p1414 = pneg %p171
      $region46: #{cvt_stage_forward.10} parent=43 // pred_check_branch
        %1416 = sbr.rel (%p1414) target = $region48
      $region47: #{cvt_stage_forward.10} parent=43 // pred_region
        _
      $region48: #{cvt_stage_forward.10} parent=43 // pred_fallthru
        _
    $region44: #{cvt_stage_forward.10} parent=5 // pred_fallthru
      _
    %p1417 = scmp.le.s32.totalorder 2, %s12
    // Predicated region
    $region49: #{cvt_stage_forward.10} parent=5 // pred_check
      %p1418 = pneg %p1417
    $region50: #{cvt_stage_forward.10} parent=5 // pred_check_branch
      %1420 = sbr.rel (%p1418) target = $region52
    $region51: #{cvt_stage_forward.10} parent=5 // pred_region
      %s1421 = ssub.s32 %s12, 2
      // Predicated region
      $region53: #{cvt_stage_forward.10} parent=51 // pred_check
        %p1422 = pneg %p177
      $region54: #{cvt_stage_forward.10} parent=51 // pred_check_branch
        %1424 = sbr.rel (%p1422) target = $region56
      $region55: #{cvt_stage_forward.10} parent=51 // pred_region
        %p1425 = scmp.lt.s32.totalorder %s18, 1
        %s1426 = scalar_select %p1425, %s18, 1
        %s1427 = smul.addr %s1426, 8
        %s1428 = smul.addr %s1427, 4
        %s1429 = scalar_lea.vmem %s6, %s1428
      $region56: #{cvt_stage_forward.10} parent=51 // pred_fallthru
        _
    $region52: #{cvt_stage_forward.10} parent=5 // pred_fallthru
      _
  $region6: #{cvt_stage_forward.10} parent=0 // loop_footer
    %s16 = sadd.s32 1, %s12
  $region7: #{cvt_stage_forward.10} parent=0 // loop_footer_branch
    %11 = sbr.rel target = $region3
  $region8: #{cvt_stage_forward.10} parent=0 // loop_exit
    _

// kernel: cvt_stage_forward.9
$region0: #{cvt_stage_forward.9}
  #allocation0 [shape = 'u32[]', space=smem, size = 0x4, offset = 0x4, fixed_abs, tag = 'smem constant byte address 0x4 - core index']
  #allocation1 [shape = 'u32[144,128]{1,0:T(1,128)}', space=vmem, size = 0x12000, scoped, tag = 'internal scratch']
  #allocation2 [shape = 'f32[10,10,32]{2,1,0:T(8,128)}', space=vmem, size = 0x14000, scoped, tag = 'scratch operand']
  %s0 = inlined_call_operand.vmem [shape: bf16[2,8,8,32], index: 0, kind: input, shape index: {}]
  %s1 = inlined_call_operand.vmem [shape: f32[1,32], index: 1, kind: input, shape index: {}]
  %s2 = inlined_call_operand.vmem [shape: f32[1,32], index: 2, kind: input, shape index: {}]
  %s3 = inlined_call_operand.vmem [shape: f32[3,9,32], index: 3, kind: input, shape index: {}]
  %s4 = inlined_call_operand.vmem [shape: f32[1,32], index: 4, kind: input, shape index: {}]
  %s5 = inlined_call_operand.vmem [shape: f32[1,32], index: 5, kind: input, shape index: {}]
  %s6 = inlined_call_operand.vmem [shape: bf16[2,8,8,96], index: 6, kind: output, shape index: {}]
  %s7 = sld [smem:[#allocation0]]
  $region57: #{cvt_stage_forward.9} parent=0
    _
  %s9 = ssub.s32 1, %s7
  %s10 = scalar_select 0, %s9, %s7
  loop: start=0, step=1, limit=4
  $region2: #{cvt_stage_forward.9} parent=0 // loop_pre_header
    _
  $region3: #{cvt_stage_forward.9} parent=0 // loop_header
    %s12 = sphi 0, %s16
    %p13 = scmp.ge.s32.totalorder %s12, 4
    %s22 = sphi 0, %s24
    %s25 = sphi 0, %s22
    %s26 = sphi 0, %s25
    %s42 = sphi 0, %s26
    %s46 = sphi 0, %s46
    %s48 = sphi 0, %s46
    %s49 = sphi 0, %s48
    %s63 = sphi 0, %s49
    %s67 = sphi 0, %s67
    %s69 = sphi 0, %s67
    %s70 = sphi 0, %s69
    %s84 = sphi 0, %s70
    %s88 = sphi 0, %s88
    %s90 = sphi 0, %s88
    %s91 = sphi 0, %s90
    %s105 = sphi 0, %s91
    %s109 = sphi 0, %s109
    %s111 = sphi 0, %s109
    %s112 = sphi 0, %s111
    %s126 = sphi 0, %s112
    %s130 = sphi 0, %s130
    %s132 = sphi 0, %s130
    %s133 = sphi 0, %s132
    %s147 = sphi 0, %s133
    %s153 = sphi 0, %s155
    %s156 = sphi 0, %s153
    %s157 = sphi 0, %s156
    %s173 = sphi 0, %s157
  $region4: #{cvt_stage_forward.9} parent=0 // loop_header_branch
    %15 = sbr.rel (%p13) target = $region8
  $region5: #{cvt_stage_forward.9} parent=0 // loop_body
    %s17 = ssub.s32 %s12, 1
    %s18 = ssub.s32 %s12, 2
    %s19 = sadd.s32 %s12, 1
    %s20 = ssub.s32 %s12, %s19
    %p21 = scmp.eq.s32.totalorder %s20, 0
    %s23 = sadd.s32 %s22, 1
    %s24 = scalar_select %p21, %s22, %s23
    %p27 = pneg %p21
    %p28 = scmp.eq.s32.totalorder %s12, 1
    %p29 = por %p27, %p28
    %p30 = scmp.ne.s32.totalorder %s22, %s25
    %p31 = scmp.eq.s32.totalorder %s12, 0
    %p32 = por %p30, %p31
    %p33 = scmp.ne.s32.totalorder %s22, %s25
    %p34 = scmp.eq.s32.totalorder %s17, 1
    %p35 = por %p33, %p34
    %p36 = scmp.ne.s32.totalorder %s25, %s26
    %p37 = scmp.eq.s32.totalorder %s17, 0
    %p38 = por %p36, %p37
    %p39 = scmp.ne.s32.totalorder %s25, %s26
    %p40 = scmp.eq.s32.totalorder %s18, 1
    %p41 = por %p39, %p40
    %p43 = scmp.ne.s32.totalorder %s26, %s42
    %p44 = scmp.eq.s32.totalorder %s18, 0
    %p45 = por %p43, %p44
    %s47 = sadd.s32 %s46, 1
    %p50 = scmp.eq.s32.totalorder %s12, 1
    %p51 = scmp.ne.s32.totalorder %s46, %s48
    %p52 = scmp.eq.s32.totalorder %s12, 0
    %p53 = por %p51, %p52
    %p54 = scmp.ne.s32.totalorder %s46, %s48
    %p55 = scmp.eq.s32.totalorder %s17, 1
    %p56 = por %p54, %p55
    %p57 = scmp.ne.s32.totalorder %s48, %s49
    %p58 = scmp.eq.s32.totalorder %s17, 0
    %p59 = por %p57, %p58
    %p60 = scmp.ne.s32.totalorder %s48, %s49
    %p61 = scmp.eq.s32.totalorder %s18, 1
    %p62 = por %p60, %p61
    %p64 = scmp.ne.s32.totalorder %s49, %s63
    %p65 = scmp.eq.s32.totalorder %s18, 0
    %p66 = por %p64, %p65
    %s68 = sadd.s32 %s67, 1
    %p71 = scmp.eq.s32.totalorder %s12, 1
    %p72 = scmp.ne.s32.totalorder %s67, %s69
    %p73 = scmp.eq.s32.totalorder %s12, 0
    %p74 = por %p72, %p73
    %p75 = scmp.ne.s32.totalorder %s67, %s69
    %p76 = scmp.eq.s32.totalorder %s17, 1
    %p77 = por %p75, %p76
    %p78 = scmp.ne.s32.totalorder %s69, %s70
    %p79 = scmp.eq.s32.totalorder %s17, 0
    %p80 = por %p78, %p79
    %p81 = scmp.ne.s32.totalorder %s69, %s70
    %p82 = scmp.eq.s32.totalorder %s18, 1
    %p83 = por %p81, %p82
    %p85 = scmp.ne.s32.totalorder %s70, %s84
    %p86 = scmp.eq.s32.totalorder %s18, 0
    %p87 = por %p85, %p86
    %s89 = sadd.s32 %s88, 1
    %p92 = scmp.eq.s32.totalorder %s12, 1
    %p93 = scmp.ne.s32.totalorder %s88, %s90
    %p94 = scmp.eq.s32.totalorder %s12, 0
    %p95 = por %p93, %p94
    %p96 = scmp.ne.s32.totalorder %s88, %s90
    %p97 = scmp.eq.s32.totalorder %s17, 1
    %p98 = por %p96, %p97
    %p99 = scmp.ne.s32.totalorder %s90, %s91
    %p100 = scmp.eq.s32.totalorder %s17, 0
    %p101 = por %p99, %p100
    %p102 = scmp.ne.s32.totalorder %s90, %s91
    %p103 = scmp.eq.s32.totalorder %s18, 1
    %p104 = por %p102, %p103
    %p106 = scmp.ne.s32.totalorder %s91, %s105
    %p107 = scmp.eq.s32.totalorder %s18, 0
    %p108 = por %p106, %p107
    %s110 = sadd.s32 %s109, 1
    %p113 = scmp.eq.s32.totalorder %s12, 1
    %p114 = scmp.ne.s32.totalorder %s109, %s111
    %p115 = scmp.eq.s32.totalorder %s12, 0
    %p116 = por %p114, %p115
    %p117 = scmp.ne.s32.totalorder %s109, %s111
    %p118 = scmp.eq.s32.totalorder %s17, 1
    %p119 = por %p117, %p118
    %p120 = scmp.ne.s32.totalorder %s111, %s112
    %p121 = scmp.eq.s32.totalorder %s17, 0
    %p122 = por %p120, %p121
    %p123 = scmp.ne.s32.totalorder %s111, %s112
    %p124 = scmp.eq.s32.totalorder %s18, 1
    %p125 = por %p123, %p124
    %p127 = scmp.ne.s32.totalorder %s112, %s126
    %p128 = scmp.eq.s32.totalorder %s18, 0
    %p129 = por %p127, %p128
    %s131 = sadd.s32 %s130, 1
    %p134 = scmp.eq.s32.totalorder %s12, 1
    %p135 = scmp.ne.s32.totalorder %s130, %s132
    %p136 = scmp.eq.s32.totalorder %s12, 0
    %p137 = por %p135, %p136
    %p138 = scmp.ne.s32.totalorder %s130, %s132
    %p139 = scmp.eq.s32.totalorder %s17, 1
    %p140 = por %p138, %p139
    %p141 = scmp.ne.s32.totalorder %s132, %s133
    %p142 = scmp.eq.s32.totalorder %s17, 0
    %p143 = por %p141, %p142
    %p144 = scmp.ne.s32.totalorder %s132, %s133
    %p145 = scmp.eq.s32.totalorder %s18, 1
    %p146 = por %p144, %p145
    %p148 = scmp.ne.s32.totalorder %s133, %s147
    %p149 = scmp.eq.s32.totalorder %s18, 0
    %p150 = por %p148, %p149
    %s151 = ssub.s32 %s12, %s19
    %p152 = scmp.eq.s32.totalorder %s151, 0
    %s154 = sadd.s32 %s153, 1
    %s155 = scalar_select %p152, %s153, %s154
    %p158 = pneg %p152
    %p159 = scmp.eq.s32.totalorder %s12, 1
    %p160 = por %p158, %p159
    %p161 = scmp.ne.s32.totalorder %s153, %s156
    %p162 = scmp.eq.s32.totalorder %s12, 0
    %p163 = por %p161, %p162
    %p164 = scmp.ne.s32.totalorder %s153, %s156
    %p165 = scmp.eq.s32.totalorder %s17, 1
    %p166 = por %p164, %p165
    %p167 = scmp.ne.s32.totalorder %s156, %s157
    %p168 = scmp.eq.s32.totalorder %s17, 0
    %p169 = por %p167, %p168
    %p170 = scmp.ne.s32.totalorder %s156, %s157
    %p171 = scmp.eq.s32.totalorder %s18, 1
    %p172 = por %p170, %p171
    %p174 = scmp.ne.s32.totalorder %s157, %s173
    %p175 = scmp.eq.s32.totalorder %s18, 0
    %p176 = por %p174, %p175
    %p177 = scmp.le.s32.totalorder 1, %s12
    %p178 = scmp.lt.s32.totalorder %s12, 3
    %p179 = pnand %p177, %p178
    %p180 = pneg %p179
    // Predicated region
    $region9: #{cvt_stage_forward.9} parent=5 // pred_check
      _
    $region10: #{cvt_stage_forward.9} parent=5 // pred_check_branch
      %182 = sbr.rel (%p179) target = $region12
    $region11: #{cvt_stage_forward.9} parent=5 // pred_region
      %s183 = ssub.s32 %s12, 1
      // Predicated region
      $region13: #{cvt_stage_forward.9} parent=11 // pred_check
        %p184 = pneg %p59
      $region14: #{cvt_stage_forward.9} parent=11 // pred_check_branch
        %186 = sbr.rel (%p184) target = $region16
      $region15: #{cvt_stage_forward.9} parent=11 // pred_region
        _
      $region16: #{cvt_stage_forward.9} parent=11 // pred_fallthru
        _
      // Predicated region
      $region17: #{cvt_stage_forward.9} parent=11 // pred_check
        %p187 = pneg %p80
      $region18: #{cvt_stage_forward.9} parent=11 // pred_check_branch
        %189 = sbr.rel (%p187) target = $region20
      $region19: #{cvt_stage_forward.9} parent=11 // pred_region
        _
      $region20: #{cvt_stage_forward.9} parent=11 // pred_fallthru
        _
      // Predicated region
      $region21: #{cvt_stage_forward.9} parent=11 // pred_check
        %p190 = pneg %p101
      $region22: #{cvt_stage_forward.9} parent=11 // pred_check_branch
        %192 = sbr.rel (%p190) target = $region24
      $region23: #{cvt_stage_forward.9} parent=11 // pred_region
        _
      $region24: #{cvt_stage_forward.9} parent=11 // pred_fallthru
        _
      // Predicated region
      $region25: #{cvt_stage_forward.9} parent=11 // pred_check
        %p193 = pneg %p122
      $region26: #{cvt_stage_forward.9} parent=11 // pred_check_branch
        %195 = sbr.rel (%p193) target = $region28
      $region27: #{cvt_stage_forward.9} parent=11 // pred_region
        _
      $region28: #{cvt_stage_forward.9} parent=11 // pred_fallthru
        _
      // Predicated region
      $region29: #{cvt_stage_forward.9} parent=11 // pred_check
        %p196 = pneg %p143
      $region30: #{cvt_stage_forward.9} parent=11 // pred_check_branch
        %198 = sbr.rel (%p196) target = $region32
      $region31: #{cvt_stage_forward.9} parent=11 // pred_region
        _
      $region32: #{cvt_stage_forward.9} parent=11 // pred_fallthru
        _
    $region12: #{cvt_stage_forward.9} parent=5 // pred_fallthru
      _
    %p199 = scmp.lt.s32.totalorder %s12, 2
    // Predicated region
    $region33: #{cvt_stage_forward.9} parent=5 // pred_check
      %p200 = pneg %p199
    $region34: #{cvt_stage_forward.9} parent=5 // pred_check_branch
      %202 = sbr.rel (%p200) target = $region36
    $region35: #{cvt_stage_forward.9} parent=5 // pred_region
      // Predicated region
      $region37: #{cvt_stage_forward.9} parent=35 // pred_check
        %p203 = pneg %p32
      $region38: #{cvt_stage_forward.9} parent=35 // pred_check_branch
        %205 = sbr.rel (%p203) target = $region40
      $region39: #{cvt_stage_forward.9} parent=35 // pred_region
        %p206 = scmp.lt.s32.totalorder %s12, 1
        %s207 = scalar_select %p206, %s12, 1
        %s208 = smul.addr %s207, 8
        %s209 = smul.addr %s208, 4
        %s210 = scalar_lea.vmem %s0, %s209
      $region40: #{cvt_stage_forward.9} parent=35 // pred_fallthru
        _
    $region36: #{cvt_stage_forward.9} parent=5 // pred_fallthru
      _
    %p211 = scmp.le.s32.totalorder 1, %s12
    %p212 = scmp.lt.s32.totalorder %s12, 3
    %p213 = pnand %p211, %p212
    %p214 = pneg %p213
    // Predicated region
    $region41: #{cvt_stage_forward.9} parent=5 // pred_check
      _
    $region42: #{cvt_stage_forward.9} parent=5 // pred_check_branch
      %216 = sbr.rel (%p213) target = $region44
    $region43: #{cvt_stage_forward.9} parent=5 // pred_region
      %s217 = ssub.s32 %s12, 1
      %p218 = scmp.lt.s32.totalorder %s17, 1
      %s219 = scalar_select %p218, %s17, 1
      %s220 = smul.addr %s219, 8
      %s221 = smul.addr %s220, 4
      %s222 = scalar_lea.vmem %s0, %s221
      %p223 = pneg %p38
      %p224 = pneg %p35
      %p225 = pneg %p59
      %p226 = pneg %p56
      %p227 = pneg %p80
      %p228 = pneg %p77
      %p229 = pneg %p101
      %p230 = pneg %p98
      %p231 = pneg %p122
      %p232 = pneg %p119
      %p233 = pneg %p143
      %p234 = pneg %p140
      %p235 = pneg %p169
      %p236 = pneg %p166
      %p237 = scmp.lt.s32.totalorder %s17, 1
      %s238 = scalar_select %p237, %s17, 1
      %s239 = smul.addr %s238, 8
      %s240 = smul.addr %s239, 4
      %s241 = scalar_lea.vmem %s6, %s240
      %p242 = scmp.lt.s32.totalorder %s17, 1
      %s243 = scalar_select %p242, %s17, 1
      %s244 = smul.addr %s243, 8
      %s245 = smul.addr %s244, 4
      %s246 = scalar_lea.vmem %s0, %s245
      %p247 = scmp.lt.s32.totalorder %s17, 1
      %s248 = scalar_select %p247, %s17, 1
      %s249 = smul.addr %s248, 8
      %s250 = smul.addr %s249, 4
      %s251 = scalar_lea.vmem %s6, %s250
      %v252 = vld [vmem:[%s246] sm:$0xf]
      %v253 = vld [vmem:[%s246 + $0x4] sm:$0xf]
      %v254 = vld [vmem:[%s246 + $0x8] sm:$0xf]
      %v255 = vld [vmem:[%s246 + $0xc] sm:$0xf]
      %v256 = vld [vmem:[%s246 + $0x10] sm:$0xf]
      %v257 = vld [vmem:[%s246 + $0x14] sm:$0xf]
      %v258 = vld [vmem:[%s246 + $0x18] sm:$0xf]
      %v259 = vld [vmem:[%s246 + $0x1c] sm:$0xf]
      %v260 = vunpack.c.l.bf16 %v252
      %v261 = vunpack.c.l.bf16 %v253
      %v262 = vunpack.c.l.bf16 %v254
      %v263 = vunpack.c.l.bf16 %v255
      %v264 = vunpack.c.l.bf16 %v256
      %v265 = vunpack.c.l.bf16 %v257
      %v266 = vunpack.c.l.bf16 %v258
      %v267 = vunpack.c.l.bf16 %v259
      %vm268 = vcmask 261120
      %v269 = vsel %vm268, %v260, 0.0
      %270 = vadd.xlane.f32.xlu0 %v269
      %v271 = vpop.xlane.xlu0 %270
      %v272 = vsel %vm268, %v261, 0.0
      %273 = vadd.xlane.f32.xlu0 %v272
      %v274 = vpop.xlane.xlu0 %273
      %v275 = vsel %vm268, %v262, 0.0
      %276 = vadd.xlane.f32.xlu0 %v275
      %v277 = vpop.xlane.xlu0 %276
      %v278 = vsel %vm268, %v263, 0.0
      %279 = vadd.xlane.f32.xlu0 %v278
      %v280 = vpop.xlane.xlu0 %279
      %v281 = vsel %vm268, %v264, 0.0
      %282 = vadd.xlane.f32.xlu0 %v281
      %v283 = vpop.xlane.xlu0 %282
      %v284 = vsel %vm268, %v265, 0.0
      %285 = vadd.xlane.f32.xlu0 %v284
      %v286 = vpop.xlane.xlu0 %285
      %v287 = vsel %vm268, %v266, 0.0
      %288 = vadd.xlane.f32.xlu0 %v287
      %v289 = vpop.xlane.xlu0 %288
      %v290 = vsel %vm268, %v267, 0.0
      %291 = vadd.xlane.f32.xlu0 %v290
      %v292 = vpop.xlane.xlu0 %291
      %v293 = vrcp.pop 32.0
      %v294 = vmul.f32 %v271, %v293
      %v295 = vmul.f32 %v274, %v293
      %v296 = vmul.f32 %v277, %v293
      %v297 = vmul.f32 %v280, %v293
      %v298 = vmul.f32 %v283, %v293
      %v299 = vmul.f32 %v286, %v293
      %v300 = vmul.f32 %v289, %v293
      %v301 = vmul.f32 %v292, %v293
      %v302 = vsub.f32 %v260, %v294
      %v303 = vsub.f32 %v261, %v295
      %v304 = vsub.f32 %v262, %v296
      %v305 = vsub.f32 %v263, %v297
      %v306 = vsub.f32 %v264, %v298
      %v307 = vsub.f32 %v265, %v299
      %v308 = vsub.f32 %v266, %v300
      %v309 = vsub.f32 %v267, %v301
      %v310 = vmul.f32 %v302, %v302
      %v311 = vmul.f32 %v303, %v303
      %v312 = vmul.f32 %v304, %v304
      %v313 = vmul.f32 %v305, %v305
      %v314 = vmul.f32 %v306, %v306
      %v315 = vmul.f32 %v307, %v307
      %v316 = vmul.f32 %v308, %v308
      %v317 = vmul.f32 %v309, %v309
      %v318 = vsel %vm268, %v310, 0.0
      %319 = vadd.xlane.f32.xlu0 %v318
      %v320 = vpop.xlane.xlu0 %319
      %v321 = vsel %vm268, %v311, 0.0
      %322 = vadd.xlane.f32.xlu0 %v321
      %v323 = vpop.xlane.xlu0 %322
      %v324 = vsel %vm268, %v312, 0.0
      %325 = vadd.xlane.f32.xlu0 %v324
      %v326 = vpop.xlane.xlu0 %325
      %v327 = vsel %vm268, %v313, 0.0
      %328 = vadd.xlane.f32.xlu0 %v327
      %v329 = vpop.xlane.xlu0 %328
      %v330 = vsel %vm268, %v314, 0.0
      %331 = vadd.xlane.f32.xlu0 %v330
      %v332 = vpop.xlane.xlu0 %331
      %v333 = vsel %vm268, %v315, 0.0
      %334 = vadd.xlane.f32.xlu0 %v333
      %v335 = vpop.xlane.xlu0 %334
      %v336 = vsel %vm268, %v316, 0.0
      %337 = vadd.xlane.f32.xlu0 %v336
      %v338 = vpop.xlane.xlu0 %337
      %v339 = vsel %vm268, %v317, 0.0
      %340 = vadd.xlane.f32.xlu0 %v339
      %v341 = vpop.xlane.xlu0 %340
      %v342 = vmul.f32 %v320, %v293
      %v343 = vmul.f32 %v323, %v293
      %v344 = vmul.f32 %v326, %v293
      %v345 = vmul.f32 %v329, %v293
      %v346 = vmul.f32 %v332, %v293
      %v347 = vmul.f32 %v335, %v293
      %v348 = vmul.f32 %v338, %v293
      %v349 = vmul.f32 %v341, %v293
      %v350 = vadd.f32 %v342, 1e-05
      %v351 = vadd.f32 %v343, 1e-05
      %v352 = vadd.f32 %v344, 1e-05
      %v353 = vadd.f32 %v345, 1e-05
      %v354 = vadd.f32 %v346, 1e-05
      %v355 = vadd.f32 %v347, 1e-05
      %v356 = vadd.f32 %v348, 1e-05
      %v357 = vadd.f32 %v349, 1e-05
      %v358 = vrsqrt.pop %v350
      %v359 = vrsqrt.pop %v351
      %v360 = vrsqrt.pop %v352
      %v361 = vrsqrt.pop %v353
      %v362 = vrsqrt.pop %v354
      %v363 = vrsqrt.pop %v355
      %v364 = vrsqrt.pop %v356
      %v365 = vrsqrt.pop %v357
      %v366 = vmul.f32 %v302, %v358
      %v367 = vmul.f32 %v303, %v359
      %v368 = vmul.f32 %v304, %v360
      %v369 = vmul.f32 %v305, %v361
      %v370 = vmul.f32 %v306, %v362
      %v371 = vmul.f32 %v307, %v363
      %v372 = vmul.f32 %v308, %v364
      %v373 = vmul.f32 %v309, %v365
      %v374 = vld [vmem:[%s1] sm:$0x1]
      %v376 = vlaneseq
      %v377 = vshrl.u32 %v376, 7
      %v378 = vsub.s32 0, %v377
      %v379 = vrot.slane %v374, %v378
      %v381 = vmul.f32 %v366, %v379
      %v382 = vmul.f32 %v367, %v379
      %v383 = vmul.f32 %v368, %v379
      %v384 = vmul.f32 %v369, %v379
      %v385 = vmul.f32 %v370, %v379
      %v386 = vmul.f32 %v371, %v379
      %v387 = vmul.f32 %v372, %v379
      %v388 = vmul.f32 %v373, %v379
      %v389 = vld [vmem:[%s2] sm:$0x1]
      %v391 = vlaneseq
      %v392 = vshrl.u32 %v391, 7
      %v393 = vsub.s32 0, %v392
      %v394 = vrot.slane %v389, %v393
      %v396 = vadd.f32 %v381, %v394
      %v397 = vadd.f32 %v382, %v394
      %v398 = vadd.f32 %v383, %v394
      %v399 = vadd.f32 %v384, %v394
      %v400 = vadd.f32 %v385, %v394
      %v401 = vadd.f32 %v386, %v394
      %v402 = vadd.f32 %v387, %v394
      %v403 = vadd.f32 %v388, %v394
      %404 = vst.msk [vmem:[#allocation2] sm:$0xff] %vm268, 0.0
      %vm405 = vcmask 254976
      %406 = vst.msk [vmem:[#allocation2 + $0x8] sm:$0x3] %vm405, 0.0
      %407 = vst.msk [vmem:[#allocation2 + $0x10] sm:$0xff] %vm268, 0.0
      %408 = vst.msk [vmem:[#allocation2 + $0x18] sm:$0x3] %vm405, 0.0
      %409 = vst.msk [vmem:[#allocation2 + $0x20] sm:$0xff] %vm268, 0.0
      %410 = vst.msk [vmem:[#allocation2 + $0x28] sm:$0x3] %vm405, 0.0
      %411 = vst.msk [vmem:[#allocation2 + $0x30] sm:$0xff] %vm268, 0.0
      %412 = vst.msk [vmem:[#allocation2 + $0x38] sm:$0x3] %vm405, 0.0
      %413 = vst.msk [vmem:[#allocation2 + $0x40] sm:$0xff] %vm268, 0.0
      %414 = vst.msk [vmem:[#allocation2 + $0x48] sm:$0x3] %vm405, 0.0
      %415 = vst.msk [vmem:[#allocation2 + $0x50] sm:$0xff] %vm268, 0.0
      %416 = vst.msk [vmem:[#allocation2 + $0x58] sm:$0x3] %vm405, 0.0
      %417 = vst.msk [vmem:[#allocation2 + $0x60] sm:$0xff] %vm268, 0.0
      %418 = vst.msk [vmem:[#allocation2 + $0x68] sm:$0x3] %vm405, 0.0
      %419 = vst.msk [vmem:[#allocation2 + $0x70] sm:$0xff] %vm268, 0.0
      %420 = vst.msk [vmem:[#allocation2 + $0x78] sm:$0x3] %vm405, 0.0
      %421 = vst.msk [vmem:[#allocation2 + $0x80] sm:$0xff] %vm268, 0.0
      %422 = vst.msk [vmem:[#allocation2 + $0x88] sm:$0x3] %vm405, 0.0
      %423 = vst.msk [vmem:[#allocation2 + $0x90] sm:$0xff] %vm268, 0.0
      %424 = vst.msk [vmem:[#allocation2 + $0x98] sm:$0x3] %vm405, 0.0
      %s425 = scalar_lea.vmem [#allocation2], 16
      %426 = vst.msk [vmem:[%s425 + $0x1] sm:$0xff] %vm268, %v396
      %427 = vst.msk [vmem:[%s425 + $0x11] sm:$0xff] %vm268, %v397
      %428 = vst.msk [vmem:[%s425 + $0x21] sm:$0xff] %vm268, %v398
      %429 = vst.msk [vmem:[%s425 + $0x31] sm:$0xff] %vm268, %v399
      %430 = vst.msk [vmem:[%s425 + $0x41] sm:$0xff] %vm268, %v400
      %431 = vst.msk [vmem:[%s425 + $0x51] sm:$0xff] %vm268, %v401
      %432 = vst.msk [vmem:[%s425 + $0x61] sm:$0xff] %vm268, %v402
      %433 = vst.msk [vmem:[%s425 + $0x71] sm:$0xff] %vm268, %v403
      %v434 = vld [vmem:[%s3] sm:$0xff]
      %v435 = vld [vmem:[%s3 + $0x8] sm:$0x1]
      %s436 = scalar_lea.vmem %s3, 16
      %v437 = vld [vmem:[%s436] sm:$0xff]
      %v438 = vld [vmem:[%s436 + $0x8] sm:$0x1]
      %s439 = scalar_lea.vmem %s3, 32
      %v440 = vld [vmem:[%s439] sm:$0xff]
      %v441 = vld [vmem:[%s439 + $0x8] sm:$0x1]
      %v442 = vld [vmem:[#allocation2] sm:$0xff]
      %v443 = vld [vmem:[#allocation2 + $0x10] sm:$0xff]
      %v444 = vld [vmem:[#allocation2 + $0x20] sm:$0xff]
      %v445 = vld [vmem:[#allocation2 + $0x30] sm:$0xff]
      %v446 = vld [vmem:[#allocation2 + $0x40] sm:$0xff]
      %v447 = vld [vmem:[#allocation2 + $0x50] sm:$0xff]
      %v448 = vld [vmem:[#allocation2 + $0x60] sm:$0xff]
      %v449 = vld [vmem:[#allocation2 + $0x70] sm:$0xff]
      %v450 = vlaneseq
      %v451 = vshrl.u32 %v450, 7
      %v452 = vsub.s32 0, %v451
      %v453 = vrot.slane %v434, %v452
      %v454 = vmul.f32 %v442, %v453
      %v455 = vmul.f32 %v443, %v453
      %v456 = vmul.f32 %v444, %v453
      %v457 = vmul.f32 %v445, %v453
      %v458 = vmul.f32 %v446, %v453
      %v459 = vmul.f32 %v447, %v453
      %v460 = vmul.f32 %v448, %v453
      %v461 = vmul.f32 %v449, %v453
      %v462 = vadd.f32 %v454, 0.0
      %v463 = vadd.f32 %v455, 0.0
      %v464 = vadd.f32 %v456, 0.0
      %v465 = vadd.f32 %v457, 0.0
      %v466 = vadd.f32 %v458, 0.0
      %v467 = vadd.f32 %v459, 0.0
      %v468 = vadd.f32 %v460, 0.0
      %v469 = vadd.f32 %v461, 0.0
      %v470 = vlaneseq
      %v471 = vshrl.u32 %v470, 7
      %v472 = vsub.s32 0, %v471
      %v473 = vrot.slane %v437, %v472
      %v474 = vmul.f32 %v442, %v473
      %v475 = vmul.f32 %v443, %v473
      %v476 = vmul.f32 %v444, %v473
      %v477 = vmul.f32 %v445, %v473
      %v478 = vmul.f32 %v446, %v473
      %v479 = vmul.f32 %v447, %v473
      %v480 = vmul.f32 %v448, %v473
      %v481 = vmul.f32 %v449, %v473
      %v482 = vadd.f32 %v474, 0.0
      %v483 = vadd.f32 %v475, 0.0
      %v484 = vadd.f32 %v476, 0.0
      %v485 = vadd.f32 %v477, 0.0
      %v486 = vadd.f32 %v478, 0.0
      %v487 = vadd.f32 %v479, 0.0
      %v488 = vadd.f32 %v480, 0.0
      %v489 = vadd.f32 %v481, 0.0
      %v490 = vlaneseq
      %v491 = vshrl.u32 %v490, 7
      %v492 = vsub.s32 0, %v491
      %v493 = vrot.slane %v440, %v492
      %v494 = vmul.f32 %v442, %v493
      %v495 = vmul.f32 %v443, %v493
      %v496 = vmul.f32 %v444, %v493
      %v497 = vmul.f32 %v445, %v493
      %v498 = vmul.f32 %v446, %v493
      %v499 = vmul.f32 %v447, %v493
      %v500 = vmul.f32 %v448, %v493
      %v501 = vmul.f32 %v449, %v493
      %v502 = vadd.f32 %v494, 0.0
      %v503 = vadd.f32 %v495, 0.0
      %v504 = vadd.f32 %v496, 0.0
      %v505 = vadd.f32 %v497, 0.0
      %v506 = vadd.f32 %v498, 0.0
      %v507 = vadd.f32 %v499, 0.0
      %v508 = vadd.f32 %v500, 0.0
      %v509 = vadd.f32 %v501, 0.0
      %v510 = vld [vmem:[#allocation2 + $0x1] sm:$0xff]
      %v511 = vld [vmem:[#allocation2 + $0x11] sm:$0xff]
      %v512 = vld [vmem:[#allocation2 + $0x21] sm:$0xff]
      %v513 = vld [vmem:[#allocation2 + $0x31] sm:$0xff]
      %v514 = vld [vmem:[#allocation2 + $0x41] sm:$0xff]
      %v515 = vld [vmem:[#allocation2 + $0x51] sm:$0xff]
      %v516 = vld [vmem:[#allocation2 + $0x61] sm:$0xff]
      %v517 = vld [vmem:[#allocation2 + $0x71] sm:$0xff]
      %v518 = vlaneseq
      %v519 = vshrl.u32 %v518, 7
      %v520 = vsub.s32 1, %v519
      %v521 = vrot.slane %v434, %v520
      %v522 = vmul.f32 %v510, %v521
      %v523 = vmul.f32 %v511, %v521
      %v524 = vmul.f32 %v512, %v521
      %v525 = vmul.f32 %v513, %v521
      %v526 = vmul.f32 %v514, %v521
      %v527 = vmul.f32 %v515, %v521
      %v528 = vmul.f32 %v516, %v521
      %v529 = vmul.f32 %v517, %v521
      %v530 = vadd.f32 %v462, %v522
      %v531 = vadd.f32 %v463, %v523
      %v532 = vadd.f32 %v464, %v524
      %v533 = vadd.f32 %v465, %v525
      %v534 = vadd.f32 %v466, %v526
      %v535 = vadd.f32 %v467, %v527
      %v536 = vadd.f32 %v468, %v528
      %v537 = vadd.f32 %v469, %v529
      %v538 = vlaneseq
      %v539 = vshrl.u32 %v538, 7
      %v540 = vsub.s32 1, %v539
      %v541 = vrot.slane %v437, %v540
      %v542 = vmul.f32 %v510, %v541
      %v543 = vmul.f32 %v511, %v541
      %v544 = vmul.f32 %v512, %v541
      %v545 = vmul.f32 %v513, %v541
      %v546 = vmul.f32 %v514, %v541
      %v547 = vmul.f32 %v515, %v541
      %v548 = vmul.f32 %v516, %v541
      %v549 = vmul.f32 %v517, %v541
      %v550 = vadd.f32 %v482, %v542
      %v551 = vadd.f32 %v483, %v543
      %v552 = vadd.f32 %v484, %v544
      %v553 = vadd.f32 %v485, %v545
      %v554 = vadd.f32 %v486, %v546
      %v555 = vadd.f32 %v487, %v547
      %v556 = vadd.f32 %v488, %v548
      %v557 = vadd.f32 %v489, %v549
      %v558 = vlaneseq
      %v559 = vshrl.u32 %v558, 7
      %v560 = vsub.s32 1, %v559
      %v561 = vrot.slane %v440, %v560
      %v562 = vmul.f32 %v510, %v561
      %v563 = vmul.f32 %v511, %v561
      %v564 = vmul.f32 %v512, %v561
      %v565 = vmul.f32 %v513, %v561
      %v566 = vmul.f32 %v514, %v561
      %v567 = vmul.f32 %v515, %v561
      %v568 = vmul.f32 %v516, %v561
      %v569 = vmul.f32 %v517, %v561
      %v570 = vadd.f32 %v502, %v562
      %v571 = vadd.f32 %v503, %v563
      %v572 = vadd.f32 %v504, %v564
      %v573 = vadd.f32 %v505, %v565
      %v574 = vadd.f32 %v506, %v566
      %v575 = vadd.f32 %v507, %v567
      %v576 = vadd.f32 %v508, %v568
      %v577 = vadd.f32 %v509, %v569
      %v578 = vld [vmem:[#allocation2 + $0x2] sm:$0xff]
      %v579 = vld [vmem:[#allocation2 + $0x12] sm:$0xff]
      %v580 = vld [vmem:[#allocation2 + $0x22] sm:$0xff]
      %v581 = vld [vmem:[#allocation2 + $0x32] sm:$0xff]
      %v582 = vld [vmem:[#allocation2 + $0x42] sm:$0xff]
      %v583 = vld [vmem:[#allocation2 + $0x52] sm:$0xff]
      %v584 = vld [vmem:[#allocation2 + $0x62] sm:$0xff]
      %v585 = vld [vmem:[#allocation2 + $0x72] sm:$0xff]
      %v586 = vlaneseq
      %v587 = vshrl.u32 %v586, 7
      %v588 = vsub.s32 2, %v587
      %v589 = vrot.slane %v434, %v588
      %v590 = vmul.f32 %v578, %v589
      %v591 = vmul.f32 %v579, %v589
      %v592 = vmul.f32 %v580, %v589
      %v593 = vmul.f32 %v581, %v589
      %v594 = vmul.f32 %v582, %v589
      %v595 = vmul.f32 %v583, %v589
      %v596 = vmul.f32 %v584, %v589
      %v597 = vmul.f32 %v585, %v589
      %v598 = vadd.f32 %v530, %v590
      %v599 = vadd.f32 %v531, %v591
      %v600 = vadd.f32 %v532, %v592
      %v601 = vadd.f32 %v533, %v593
      %v602 = vadd.f32 %v534, %v594
      %v603 = vadd.f32 %v535, %v595
      %v604 = vadd.f32 %v536, %v596
      %v605 = vadd.f32 %v537, %v597
      %v606 = vlaneseq
      %v607 = vshrl.u32 %v606, 7
      %v608 = vsub.s32 2, %v607
      %v609 = vrot.slane %v437, %v608
      %v610 = vmul.f32 %v578, %v609
      %v611 = vmul.f32 %v579, %v609
      %v612 = vmul.f32 %v580, %v609
      %v613 = vmul.f32 %v581, %v609
      %v614 = vmul.f32 %v582, %v609
      %v615 = vmul.f32 %v583, %v609
      %v616 = vmul.f32 %v584, %v609
      %v617 = vmul.f32 %v585, %v609
      %v618 = vadd.f32 %v550, %v610
      %v619 = vadd.f32 %v551, %v611
      %v620 = vadd.f32 %v552, %v612
      %v621 = vadd.f32 %v553, %v613
      %v622 = vadd.f32 %v554, %v614
      %v623 = vadd.f32 %v555, %v615
      %v624 = vadd.f32 %v556, %v616
      %v625 = vadd.f32 %v557, %v617
      %v626 = vlaneseq
      %v627 = vshrl.u32 %v626, 7
      %v628 = vsub.s32 2, %v627
      %v629 = vrot.slane %v440, %v628
      %v630 = vmul.f32 %v578, %v629
      %v631 = vmul.f32 %v579, %v629
      %v632 = vmul.f32 %v580, %v629
      %v633 = vmul.f32 %v581, %v629
      %v634 = vmul.f32 %v582, %v629
      %v635 = vmul.f32 %v583, %v629
      %v636 = vmul.f32 %v584, %v629
      %v637 = vmul.f32 %v585, %v629
      %v638 = vadd.f32 %v570, %v630
      %v639 = vadd.f32 %v571, %v631
      %v640 = vadd.f32 %v572, %v632
      %v641 = vadd.f32 %v573, %v633
      %v642 = vadd.f32 %v574, %v634
      %v643 = vadd.f32 %v575, %v635
      %v644 = vadd.f32 %v576, %v636
      %v645 = vadd.f32 %v577, %v637
      %v646 = vld [vmem:[%s425] sm:$0xff]
      %v647 = vld [vmem:[%s425 + $0x10] sm:$0xff]
      %v648 = vld [vmem:[%s425 + $0x20] sm:$0xff]
      %v649 = vld [vmem:[%s425 + $0x30] sm:$0xff]
      %v650 = vld [vmem:[%s425 + $0x40] sm:$0xff]
      %v651 = vld [vmem:[%s425 + $0x50] sm:$0xff]
      %v652 = vld [vmem:[%s425 + $0x60] sm:$0xff]
      %v653 = vld [vmem:[%s425 + $0x70] sm:$0xff]
      %v654 = vlaneseq
      %v655 = vshrl.u32 %v654, 7
      %v656 = vsub.s32 3, %v655
      %v657 = vrot.slane %v434, %v656
      %v658 = vmul.f32 %v646, %v657
      %v659 = vmul.f32 %v647, %v657
      %v660 = vmul.f32 %v648, %v657
      %v661 = vmul.f32 %v649, %v657
      %v662 = vmul.f32 %v650, %v657
      %v663 = vmul.f32 %v651, %v657
      %v664 = vmul.f32 %v652, %v657
      %v665 = vmul.f32 %v653, %v657
      %v666 = vadd.f32 %v598, %v658
      %v667 = vadd.f32 %v599, %v659
      %v668 = vadd.f32 %v600, %v660
      %v669 = vadd.f32 %v601, %v661
      %v670 = vadd.f32 %v602, %v662
      %v671 = vadd.f32 %v603, %v663
      %v672 = vadd.f32 %v604, %v664
      %v673 = vadd.f32 %v605, %v665
      %v674 = vlaneseq
      %v675 = vshrl.u32 %v674, 7
      %v676 = vsub.s32 3, %v675
      %v677 = vrot.slane %v437, %v676
      %v678 = vmul.f32 %v646, %v677
      %v679 = vmul.f32 %v647, %v677
      %v680 = vmul.f32 %v648, %v677
      %v681 = vmul.f32 %v649, %v677
      %v682 = vmul.f32 %v650, %v677
      %v683 = vmul.f32 %v651, %v677
      %v684 = vmul.f32 %v652, %v677
      %v685 = vmul.f32 %v653, %v677
      %v686 = vadd.f32 %v618, %v678
      %v687 = vadd.f32 %v619, %v679
      %v688 = vadd.f32 %v620, %v680
      %v689 = vadd.f32 %v621, %v681
      %v690 = vadd.f32 %v622, %v682
      %v691 = vadd.f32 %v623, %v683
      %v692 = vadd.f32 %v624, %v684
      %v693 = vadd.f32 %v625, %v685
      %v694 = vlaneseq
      %v695 = vshrl.u32 %v694, 7
      %v696 = vsub.s32 3, %v695
      %v697 = vrot.slane %v440, %v696
      %v698 = vmul.f32 %v646, %v697
      %v699 = vmul.f32 %v647, %v697
      %v700 = vmul.f32 %v648, %v697
      %v701 = vmul.f32 %v649, %v697
      %v702 = vmul.f32 %v650, %v697
      %v703 = vmul.f32 %v651, %v697
      %v704 = vmul.f32 %v652, %v697
      %v705 = vmul.f32 %v653, %v697
      %v706 = vadd.f32 %v638, %v698
      %v707 = vadd.f32 %v639, %v699
      %v708 = vadd.f32 %v640, %v700
      %v709 = vadd.f32 %v641, %v701
      %v710 = vadd.f32 %v642, %v702
      %v711 = vadd.f32 %v643, %v703
      %v712 = vadd.f32 %v644, %v704
      %v713 = vadd.f32 %v645, %v705
      %v714 = vld [vmem:[%s425 + $0x1] sm:$0xff]
      %v715 = vld [vmem:[%s425 + $0x11] sm:$0xff]
      %v716 = vld [vmem:[%s425 + $0x21] sm:$0xff]
      %v717 = vld [vmem:[%s425 + $0x31] sm:$0xff]
      %v718 = vld [vmem:[%s425 + $0x41] sm:$0xff]
      %v719 = vld [vmem:[%s425 + $0x51] sm:$0xff]
      %v720 = vld [vmem:[%s425 + $0x61] sm:$0xff]
      %v721 = vld [vmem:[%s425 + $0x71] sm:$0xff]
      %v722 = vlaneseq
      %v723 = vshrl.u32 %v722, 7
      %v724 = vsub.s32 4, %v723
      %v725 = vrot.slane %v434, %v724
      %v726 = vmul.f32 %v714, %v725
      %v727 = vmul.f32 %v715, %v725
      %v728 = vmul.f32 %v716, %v725
      %v729 = vmul.f32 %v717, %v725
      %v730 = vmul.f32 %v718, %v725
      %v731 = vmul.f32 %v719, %v725
      %v732 = vmul.f32 %v720, %v725
      %v733 = vmul.f32 %v721, %v725
      %v734 = vadd.f32 %v666, %v726
      %v735 = vadd.f32 %v667, %v727
      %v736 = vadd.f32 %v668, %v728
      %v737 = vadd.f32 %v669, %v729
      %v738 = vadd.f32 %v670, %v730
      %v739 = vadd.f32 %v671, %v731
      %v740 = vadd.f32 %v672, %v732
      %v741 = vadd.f32 %v673, %v733
      %v742 = vlaneseq
      %v743 = vshrl.u32 %v742, 7
      %v744 = vsub.s32 4, %v743
      %v745 = vrot.slane %v437, %v744
      %v746 = vmul.f32 %v714, %v745
      %v747 = vmul.f32 %v715, %v745
      %v748 = vmul.f32 %v716, %v745
      %v749 = vmul.f32 %v717, %v745
      %v750 = vmul.f32 %v718, %v745
      %v751 = vmul.f32 %v719, %v745
      %v752 = vmul.f32 %v720, %v745
      %v753 = vmul.f32 %v721, %v745
      %v754 = vadd.f32 %v686, %v746
      %v755 = vadd.f32 %v687, %v747
      %v756 = vadd.f32 %v688, %v748
      %v757 = vadd.f32 %v689, %v749
      %v758 = vadd.f32 %v690, %v750
      %v759 = vadd.f32 %v691, %v751
      %v760 = vadd.f32 %v692, %v752
      %v761 = vadd.f32 %v693, %v753
      %v762 = vlaneseq
      %v763 = vshrl.u32 %v762, 7
      %v764 = vsub.s32 4, %v763
      %v765 = vrot.slane %v440, %v764
      %v766 = vmul.f32 %v714, %v765
      %v767 = vmul.f32 %v715, %v765
      %v768 = vmul.f32 %v716, %v765
      %v769 = vmul.f32 %v717, %v765
      %v770 = vmul.f32 %v718, %v765
      %v771 = vmul.f32 %v719, %v765
      %v772 = vmul.f32 %v720, %v765
      %v773 = vmul.f32 %v721, %v765
      %v774 = vadd.f32 %v706, %v766
      %v775 = vadd.f32 %v707, %v767
      %v776 = vadd.f32 %v708, %v768
      %v777 = vadd.f32 %v709, %v769
      %v778 = vadd.f32 %v710, %v770
      %v779 = vadd.f32 %v711, %v771
      %v780 = vadd.f32 %v712, %v772
      %v781 = vadd.f32 %v713, %v773
      %v782 = vld [vmem:[%s425 + $0x2] sm:$0xff]
      %v783 = vld [vmem:[%s425 + $0x12] sm:$0xff]
      %v784 = vld [vmem:[%s425 + $0x22] sm:$0xff]
      %v785 = vld [vmem:[%s425 + $0x32] sm:$0xff]
      %v786 = vld [vmem:[%s425 + $0x42] sm:$0xff]
      %v787 = vld [vmem:[%s425 + $0x52] sm:$0xff]
      %v788 = vld [vmem:[%s425 + $0x62] sm:$0xff]
      %v789 = vld [vmem:[%s425 + $0x72] sm:$0xff]
      %v790 = vlaneseq
      %v791 = vshrl.u32 %v790, 7
      %v792 = vsub.s32 5, %v791
      %v793 = vrot.slane %v434, %v792
      %v794 = vmul.f32 %v782, %v793
      %v795 = vmul.f32 %v783, %v793
      %v796 = vmul.f32 %v784, %v793
      %v797 = vmul.f32 %v785, %v793
      %v798 = vmul.f32 %v786, %v793
      %v799 = vmul.f32 %v787, %v793
      %v800 = vmul.f32 %v788, %v793
      %v801 = vmul.f32 %v789, %v793
      %v802 = vadd.f32 %v734, %v794
      %v803 = vadd.f32 %v735, %v795
      %v804 = vadd.f32 %v736, %v796
      %v805 = vadd.f32 %v737, %v797
      %v806 = vadd.f32 %v738, %v798
      %v807 = vadd.f32 %v739, %v799
      %v808 = vadd.f32 %v740, %v800
      %v809 = vadd.f32 %v741, %v801
      %v810 = vlaneseq
      %v811 = vshrl.u32 %v810, 7
      %v812 = vsub.s32 5, %v811
      %v813 = vrot.slane %v437, %v812
      %v814 = vmul.f32 %v782, %v813
      %v815 = vmul.f32 %v783, %v813
      %v816 = vmul.f32 %v784, %v813
      %v817 = vmul.f32 %v785, %v813
      %v818 = vmul.f32 %v786, %v813
      %v819 = vmul.f32 %v787, %v813
      %v820 = vmul.f32 %v788, %v813
      %v821 = vmul.f32 %v789, %v813
      %v822 = vadd.f32 %v754, %v814
      %v823 = vadd.f32 %v755, %v815
      %v824 = vadd.f32 %v756, %v816
      %v825 = vadd.f32 %v757, %v817
      %v826 = vadd.f32 %v758, %v818
      %v827 = vadd.f32 %v759, %v819
      %v828 = vadd.f32 %v760, %v820
      %v829 = vadd.f32 %v761, %v821
      %v830 = vlaneseq
      %v831 = vshrl.u32 %v830, 7
      %v832 = vsub.s32 5, %v831
      %v833 = vrot.slane %v440, %v832
      %v834 = vmul.f32 %v782, %v833
      %v835 = vmul.f32 %v783, %v833
      %v836 = vmul.f32 %v784, %v833
      %v837 = vmul.f32 %v785, %v833
      %v838 = vmul.f32 %v786, %v833
      %v839 = vmul.f32 %v787, %v833
      %v840 = vmul.f32 %v788, %v833
      %v841 = vmul.f32 %v789, %v833
      %v842 = vadd.f32 %v774, %v834
      %v843 = vadd.f32 %v775, %v835
      %v844 = vadd.f32 %v776, %v836
      %v845 = vadd.f32 %v777, %v837
      %v846 = vadd.f32 %v778, %v838
      %v847 = vadd.f32 %v779, %v839
      %v848 = vadd.f32 %v780, %v840
      %v849 = vadd.f32 %v781, %v841
      %s850 = scalar_lea.vmem [#allocation2], 32
      %v851 = vld [vmem:[%s850] sm:$0xff]
      %v852 = vld [vmem:[%s850 + $0x10] sm:$0xff]
      %v853 = vld [vmem:[%s850 + $0x20] sm:$0xff]
      %v854 = vld [vmem:[%s850 + $0x30] sm:$0xff]
      %v855 = vld [vmem:[%s850 + $0x40] sm:$0xff]
      %v856 = vld [vmem:[%s850 + $0x50] sm:$0xff]
      %v857 = vld [vmem:[%s850 + $0x60] sm:$0xff]
      %v858 = vld [vmem:[%s850 + $0x70] sm:$0xff]
      %v859 = vlaneseq
      %v860 = vshrl.u32 %v859, 7
      %v861 = vsub.s32 6, %v860
      %v862 = vrot.slane %v434, %v861
      %v863 = vmul.f32 %v851, %v862
      %v864 = vmul.f32 %v852, %v862
      %v865 = vmul.f32 %v853, %v862
      %v866 = vmul.f32 %v854, %v862
      %v867 = vmul.f32 %v855, %v862
      %v868 = vmul.f32 %v856, %v862
      %v869 = vmul.f32 %v857, %v862
      %v870 = vmul.f32 %v858, %v862
      %v871 = vadd.f32 %v802, %v863
      %v872 = vadd.f32 %v803, %v864
      %v873 = vadd.f32 %v804, %v865
      %v874 = vadd.f32 %v805, %v866
      %v875 = vadd.f32 %v806, %v867
      %v876 = vadd.f32 %v807, %v868
      %v877 = vadd.f32 %v808, %v869
      %v878 = vadd.f32 %v809, %v870
      %v879 = vlaneseq
      %v880 = vshrl.u32 %v879, 7
      %v881 = vsub.s32 6, %v880
      %v882 = vrot.slane %v437, %v881
      %v883 = vmul.f32 %v851, %v882
      %v884 = vmul.f32 %v852, %v882
      %v885 = vmul.f32 %v853, %v882
      %v886 = vmul.f32 %v854, %v882
      %v887 = vmul.f32 %v855, %v882
      %v888 = vmul.f32 %v856, %v882
      %v889 = vmul.f32 %v857, %v882
      %v890 = vmul.f32 %v858, %v882
      %v891 = vadd.f32 %v822, %v883
      %v892 = vadd.f32 %v823, %v884
      %v893 = vadd.f32 %v824, %v885
      %v894 = vadd.f32 %v825, %v886
      %v895 = vadd.f32 %v826, %v887
      %v896 = vadd.f32 %v827, %v888
      %v897 = vadd.f32 %v828, %v889
      %v898 = vadd.f32 %v829, %v890
      %v899 = vlaneseq
      %v900 = vshrl.u32 %v899, 7
      %v901 = vsub.s32 6, %v900
      %v902 = vrot.slane %v440, %v901
      %v903 = vmul.f32 %v851, %v902
      %v904 = vmul.f32 %v852, %v902
      %v905 = vmul.f32 %v853, %v902
      %v906 = vmul.f32 %v854, %v902
      %v907 = vmul.f32 %v855, %v902
      %v908 = vmul.f32 %v856, %v902
      %v909 = vmul.f32 %v857, %v902
      %v910 = vmul.f32 %v858, %v902
      %v911 = vadd.f32 %v842, %v903
      %v912 = vadd.f32 %v843, %v904
      %v913 = vadd.f32 %v844, %v905
      %v914 = vadd.f32 %v845, %v906
      %v915 = vadd.f32 %v846, %v907
      %v916 = vadd.f32 %v847, %v908
      %v917 = vadd.f32 %v848, %v909
      %v918 = vadd.f32 %v849, %v910
      %v919 = vld [vmem:[%s850 + $0x1] sm:$0xff]
      %v920 = vld [vmem:[%s850 + $0x11] sm:$0xff]
      %v921 = vld [vmem:[%s850 + $0x21] sm:$0xff]
      %v922 = vld [vmem:[%s850 + $0x31] sm:$0xff]
      %v923 = vld [vmem:[%s850 + $0x41] sm:$0xff]
      %v924 = vld [vmem:[%s850 + $0x51] sm:$0xff]
      %v925 = vld [vmem:[%s850 + $0x61] sm:$0xff]
      %v926 = vld [vmem:[%s850 + $0x71] sm:$0xff]
      %v927 = vlaneseq
      %v928 = vshrl.u32 %v927, 7
      %v929 = vsub.s32 7, %v928
      %v930 = vrot.slane %v434, %v929
      %v931 = vmul.f32 %v919, %v930
      %v932 = vmul.f32 %v920, %v930
      %v933 = vmul.f32 %v921, %v930
      %v934 = vmul.f32 %v922, %v930
      %v935 = vmul.f32 %v923, %v930
      %v936 = vmul.f32 %v924, %v930
      %v937 = vmul.f32 %v925, %v930
      %v938 = vmul.f32 %v926, %v930
      %v939 = vadd.f32 %v871, %v931
      %v940 = vadd.f32 %v872, %v932
      %v941 = vadd.f32 %v873, %v933
      %v942 = vadd.f32 %v874, %v934
      %v943 = vadd.f32 %v875, %v935
      %v944 = vadd.f32 %v876, %v936
      %v945 = vadd.f32 %v877, %v937
      %v946 = vadd.f32 %v878, %v938
      %v947 = vlaneseq
      %v948 = vshrl.u32 %v947, 7
      %v949 = vsub.s32 7, %v948
      %v950 = vrot.slane %v437, %v949
      %v951 = vmul.f32 %v919, %v950
      %v952 = vmul.f32 %v920, %v950
      %v953 = vmul.f32 %v921, %v950
      %v954 = vmul.f32 %v922, %v950
      %v955 = vmul.f32 %v923, %v950
      %v956 = vmul.f32 %v924, %v950
      %v957 = vmul.f32 %v925, %v950
      %v958 = vmul.f32 %v926, %v950
      %v959 = vadd.f32 %v891, %v951
      %v960 = vadd.f32 %v892, %v952
      %v961 = vadd.f32 %v893, %v953
      %v962 = vadd.f32 %v894, %v954
      %v963 = vadd.f32 %v895, %v955
      %v964 = vadd.f32 %v896, %v956
      %v965 = vadd.f32 %v897, %v957
      %v966 = vadd.f32 %v898, %v958
      %v967 = vlaneseq
      %v968 = vshrl.u32 %v967, 7
      %v969 = vsub.s32 7, %v968
      %v970 = vrot.slane %v440, %v969
      %v971 = vmul.f32 %v919, %v970
      %v972 = vmul.f32 %v920, %v970
      %v973 = vmul.f32 %v921, %v970
      %v974 = vmul.f32 %v922, %v970
      %v975 = vmul.f32 %v923, %v970
      %v976 = vmul.f32 %v924, %v970
      %v977 = vmul.f32 %v925, %v970
      %v978 = vmul.f32 %v926, %v970
      %v979 = vadd.f32 %v911, %v971
      %v980 = vadd.f32 %v912, %v972
      %v981 = vadd.f32 %v913, %v973
      %v982 = vadd.f32 %v914, %v974
      %v983 = vadd.f32 %v915, %v975
      %v984 = vadd.f32 %v916, %v976
      %v985 = vadd.f32 %v917, %v977
      %v986 = vadd.f32 %v918, %v978
      %v987 = vld [vmem:[%s850 + $0x2] sm:$0xff]
      %v988 = vld [vmem:[%s850 + $0x12] sm:$0xff]
      %v989 = vld [vmem:[%s850 + $0x22] sm:$0xff]
      %v990 = vld [vmem:[%s850 + $0x32] sm:$0xff]
      %v991 = vld [vmem:[%s850 + $0x42] sm:$0xff]
      %v992 = vld [vmem:[%s850 + $0x52] sm:$0xff]
      %v993 = vld [vmem:[%s850 + $0x62] sm:$0xff]
      %v994 = vld [vmem:[%s850 + $0x72] sm:$0xff]
      %v995 = vlaneseq
      %v996 = vshrl.u32 %v995, 7
      %v997 = vsub.s32 0, %v996
      %v998 = vrot.slane %v435, %v997
      %v999 = vmul.f32 %v987, %v998
      %v1000 = vmul.f32 %v988, %v998
      %v1001 = vmul.f32 %v989, %v998
      %v1002 = vmul.f32 %v990, %v998
      %v1003 = vmul.f32 %v991, %v998
      %v1004 = vmul.f32 %v992, %v998
      %v1005 = vmul.f32 %v993, %v998
      %v1006 = vmul.f32 %v994, %v998
      %v1007 = vadd.f32 %v939, %v999
      %v1008 = vadd.f32 %v940, %v1000
      %v1009 = vadd.f32 %v941, %v1001
      %v1010 = vadd.f32 %v942, %v1002
      %v1011 = vadd.f32 %v943, %v1003
      %v1012 = vadd.f32 %v944, %v1004
      %v1013 = vadd.f32 %v945, %v1005
      %v1014 = vadd.f32 %v946, %v1006
      %v1015 = vlaneseq
      %v1016 = vshrl.u32 %v1015, 7
      %v1017 = vsub.s32 0, %v1016
      %v1018 = vrot.slane %v438, %v1017
      %v1019 = vmul.f32 %v987, %v1018
      %v1020 = vmul.f32 %v988, %v1018
      %v1021 = vmul.f32 %v989, %v1018
      %v1022 = vmul.f32 %v990, %v1018
      %v1023 = vmul.f32 %v991, %v1018
      %v1024 = vmul.f32 %v992, %v1018
      %v1025 = vmul.f32 %v993, %v1018
      %v1026 = vmul.f32 %v994, %v1018
      %v1027 = vadd.f32 %v959, %v1019
      %v1028 = vadd.f32 %v960, %v1020
      %v1029 = vadd.f32 %v961, %v1021
      %v1030 = vadd.f32 %v962, %v1022
      %v1031 = vadd.f32 %v963, %v1023
      %v1032 = vadd.f32 %v964, %v1024
      %v1033 = vadd.f32 %v965, %v1025
      %v1034 = vadd.f32 %v966, %v1026
      %v1035 = vlaneseq
      %v1036 = vshrl.u32 %v1035, 7
      %v1037 = vsub.s32 0, %v1036
      %v1038 = vrot.slane %v441, %v1037
      %v1039 = vmul.f32 %v987, %v1038
      %v1040 = vmul.f32 %v988, %v1038
      %v1041 = vmul.f32 %v989, %v1038
      %v1042 = vmul.f32 %v990, %v1038
      %v1043 = vmul.f32 %v991, %v1038
      %v1044 = vmul.f32 %v992, %v1038
      %v1045 = vmul.f32 %v993, %v1038
      %v1046 = vmul.f32 %v994, %v1038
      %v1047 = vadd.f32 %v979, %v1039
      %v1048 = vadd.f32 %v980, %v1040
      %v1049 = vadd.f32 %v981, %v1041
      %v1050 = vadd.f32 %v982, %v1042
      %v1051 = vadd.f32 %v983, %v1043
      %v1052 = vadd.f32 %v984, %v1044
      %v1053 = vadd.f32 %v985, %v1045
      %v1054 = vadd.f32 %v986, %v1046
      %v1055 = vld [vmem:[%s4] sm:$0x1]
      %v1056 = vld [vmem:[%s5] sm:$0x1]
      %v1058 = vlaneseq
      %v1059 = vshrl.u32 %v1058, 7
      %v1060 = vsub.s32 0, %v1059
      %v1061 = vrot.slane %v1055, %v1060
      %v1063 = vmul.f32 %v1007, %v1061
      %v1064 = vmul.f32 %v1008, %v1061
      %v1065 = vmul.f32 %v1009, %v1061
      %v1066 = vmul.f32 %v1010, %v1061
      %v1067 = vmul.f32 %v1011, %v1061
      %v1068 = vmul.f32 %v1012, %v1061
      %v1069 = vmul.f32 %v1013, %v1061
      %v1070 = vmul.f32 %v1014, %v1061
      %v1072 = vlaneseq
      %v1073 = vshrl.u32 %v1072, 7
      %v1074 = vsub.s32 0, %v1073
      %v1075 = vrot.slane %v1056, %v1074
      %v1077 = vadd.f32 %v1063, %v1075
      %v1078 = vadd.f32 %v1064, %v1075
      %v1079 = vadd.f32 %v1065, %v1075
      %v1080 = vadd.f32 %v1066, %v1075
      %v1081 = vadd.f32 %v1067, %v1075
      %v1082 = vadd.f32 %v1068, %v1075
      %v1083 = vadd.f32 %v1069, %v1075
      %v1084 = vadd.f32 %v1070, %v1075
      %v1085 = vmul.f32 %v1027, %v1061
      %v1086 = vmul.f32 %v1028, %v1061
      %v1087 = vmul.f32 %v1029, %v1061
      %v1088 = vmul.f32 %v1030, %v1061
      %v1089 = vmul.f32 %v1031, %v1061
      %v1090 = vmul.f32 %v1032, %v1061
      %v1091 = vmul.f32 %v1033, %v1061
      %v1092 = vmul.f32 %v1034, %v1061
      %v1093 = vadd.f32 %v1085, %v1075
      %v1094 = vadd.f32 %v1086, %v1075
      %v1095 = vadd.f32 %v1087, %v1075
      %v1096 = vadd.f32 %v1088, %v1075
      %v1097 = vadd.f32 %v1089, %v1075
      %v1098 = vadd.f32 %v1090, %v1075
      %v1099 = vadd.f32 %v1091, %v1075
      %v1100 = vadd.f32 %v1092, %v1075
      %v1101 = vmul.f32 %v1047, %v1061
      %v1102 = vmul.f32 %v1048, %v1061
      %v1103 = vmul.f32 %v1049, %v1061
      %v1104 = vmul.f32 %v1050, %v1061
      %v1105 = vmul.f32 %v1051, %v1061
      %v1106 = vmul.f32 %v1052, %v1061
      %v1107 = vmul.f32 %v1053, %v1061
      %v1108 = vmul.f32 %v1054, %v1061
      %v1109 = vadd.f32 %v1101, %v1075
      %v1110 = vadd.f32 %v1102, %v1075
      %v1111 = vadd.f32 %v1103, %v1075
      %v1112 = vadd.f32 %v1104, %v1075
      %v1113 = vadd.f32 %v1105, %v1075
      %v1114 = vadd.f32 %v1106, %v1075
      %v1115 = vadd.f32 %v1107, %v1075
      %v1116 = vadd.f32 %v1108, %v1075
      %1125 = vrot.lane.b32.xlu0 %v1093, 32
      %v1126 = vpop.permute.xlu0 %1125
      %1127 = vrot.lane.b32.xlu0 %v1094, 32
      %v1128 = vpop.permute.xlu0 %1127
      %1129 = vrot.lane.b32.xlu0 %v1095, 32
      %v1130 = vpop.permute.xlu0 %1129
      %1131 = vrot.lane.b32.xlu0 %v1096, 32
      %v1132 = vpop.permute.xlu0 %1131
      %1133 = vrot.lane.b32.xlu0 %v1097, 32
      %v1134 = vpop.permute.xlu0 %1133
      %1135 = vrot.lane.b32.xlu0 %v1098, 32
      %v1136 = vpop.permute.xlu0 %1135
      %1137 = vrot.lane.b32.xlu0 %v1099, 32
      %v1138 = vpop.permute.xlu0 %1137
      %1139 = vrot.lane.b32.xlu0 %v1100, 32
      %v1140 = vpop.permute.xlu0 %1139
      %1157 = vrot.lane.b32.xlu0 %v1109, 64
      %v1158 = vpop.permute.xlu0 %1157
      %1159 = vrot.lane.b32.xlu0 %v1110, 64
      %v1160 = vpop.permute.xlu0 %1159
      %1161 = vrot.lane.b32.xlu0 %v1111, 64
      %v1162 = vpop.permute.xlu0 %1161
      %1163 = vrot.lane.b32.xlu0 %v1112, 64
      %v1164 = vpop.permute.xlu0 %1163
      %1165 = vrot.lane.b32.xlu0 %v1113, 64
      %v1166 = vpop.permute.xlu0 %1165
      %1167 = vrot.lane.b32.xlu0 %v1114, 64
      %v1168 = vpop.permute.xlu0 %1167
      %1169 = vrot.lane.b32.xlu0 %v1115, 64
      %v1170 = vpop.permute.xlu0 %1169
      %1171 = vrot.lane.b32.xlu0 %v1116, 64
      %v1172 = vpop.permute.xlu0 %1171
      %v1181 = vsel %vm268, %v1077, %v1126
      %v1182 = vsel %vm268, %v1078, %v1128
      %v1183 = vsel %vm268, %v1079, %v1130
      %v1184 = vsel %vm268, %v1080, %v1132
      %v1185 = vsel %vm268, %v1081, %v1134
      %v1186 = vsel %vm268, %v1082, %v1136
      %v1187 = vsel %vm268, %v1083, %v1138
      %v1188 = vsel %vm268, %v1084, %v1140
      %vm1189 = vcmask 523264
      %v1190 = vsel %vm1189, %v1181, %v1158
      %v1191 = vsel %vm1189, %v1182, %v1160
      %v1192 = vsel %vm1189, %v1183, %v1162
      %v1193 = vsel %vm1189, %v1184, %v1164
      %v1194 = vsel %vm1189, %v1185, %v1166
      %v1195 = vsel %vm1189, %v1186, %v1168
      %v1196 = vsel %vm1189, %v1187, %v1170
      %v1197 = vsel %vm1189, %v1188, %v1172
      %v1198 = vpack.c.bf16 %v1190, %v1190
      %v1199 = vpack.c.bf16 %v1191, %v1191
      %v1200 = vpack.c.bf16 %v1192, %v1192
      %v1201 = vpack.c.bf16 %v1193, %v1193
      %v1202 = vpack.c.bf16 %v1194, %v1194
      %v1203 = vpack.c.bf16 %v1195, %v1195
      %v1204 = vpack.c.bf16 %v1196, %v1196
      %v1205 = vpack.c.bf16 %v1197, %v1197
      %vm1206 = vcmask 781312
      %1207 = vst.msk [vmem:[%s251] sm:$0xf] %vm1206, %v1198
      %1208 = vst.msk [vmem:[%s251 + $0x4] sm:$0xf] %vm1206, %v1199
      %1209 = vst.msk [vmem:[%s251 + $0x8] sm:$0xf] %vm1206, %v1200
      %1210 = vst.msk [vmem:[%s251 + $0xc] sm:$0xf] %vm1206, %v1201
      %1211 = vst.msk [vmem:[%s251 + $0x10] sm:$0xf] %vm1206, %v1202
      %1212 = vst.msk [vmem:[%s251 + $0x14] sm:$0xf] %vm1206, %v1203
      %1213 = vst.msk [vmem:[%s251 + $0x18] sm:$0xf] %vm1206, %v1204
      %1214 = vst.msk [vmem:[%s251 + $0x1c] sm:$0xf] %vm1206, %v1205
      %p1215 = scmp.lt.s32.totalorder %s17, 1
      %s1216 = scalar_select %p1215, %s17, 1
      %s1217 = smul.addr %s1216, 8
      %s1218 = smul.addr %s1217, 4
      %s1219 = scalar_lea.vmem %s6, %s1218
      // Predicated region
      $region45: #{cvt_stage_forward.9} parent=43 // pred_check
        %p1220 = pneg %p166
      $region46: #{cvt_stage_forward.9} parent=43 // pred_check_branch
        %1222 = sbr.rel (%p1220) target = $region48
      $region47: #{cvt_stage_forward.9} parent=43 // pred_region
        _
      $region48: #{cvt_stage_forward.9} parent=43 // pred_fallthru
        _
    $region44: #{cvt_stage_forward.9} parent=5 // pred_fallthru
      _
    %p1223 = scmp.le.s32.totalorder 2, %s12
    // Predicated region
    $region49: #{cvt_stage_forward.9} parent=5 // pred_check
      %p1224 = pneg %p1223
    $region50: #{cvt_stage_forward.9} parent=5 // pred_check_branch
      %1226 = sbr.rel (%p1224) target = $region52
    $region51: #{cvt_stage_forward.9} parent=5 // pred_region
      %s1227 = ssub.s32 %s12, 2
      // Predicated region
      $region53: #{cvt_stage_forward.9} parent=51 // pred_check
        %p1228 = pneg %p172
      $region54: #{cvt_stage_forward.9} parent=51 // pred_check_branch
        %1230 = sbr.rel (%p1228) target = $region56
      $region55: #{cvt_stage_forward.9} parent=51 // pred_region
        %p1231 = scmp.lt.s32.totalorder %s18, 1
        %s1232 = scalar_select %p1231, %s18, 1
        %s1233 = smul.addr %s1232, 8
        %s1234 = smul.addr %s1233, 4
        %s1235 = scalar_lea.vmem %s6, %s1234
      $region56: #{cvt_stage_forward.9} parent=51 // pred_fallthru
        _
    $region52: #{cvt_stage_forward.9} parent=5 // pred_fallthru
      _
  $region6: #{cvt_stage_forward.9} parent=0 // loop_footer
    %s16 = sadd.s32 1, %s12
  $region7: #{cvt_stage_forward.9} parent=0 // loop_footer_branch
    %11 = sbr.rel target = $region3
  $region8: #{cvt_stage_forward.9} parent=0 // loop_exit
    _

// kernel: cvt_stage_forward.11
$region0: #{cvt_stage_forward.11}
  #allocation0 [shape = 'u32[]', space=smem, size = 0x4, offset = 0x4, fixed_abs, tag = 'smem constant byte address 0x4 - core index']
  #allocation1 [shape = 'u32[144,128]{1,0:T(1,128)}', space=vmem, size = 0x12000, scoped, tag = 'internal scratch']
  %s0 = inlined_call_operand.vmem [shape: bf16[128,32], index: 0, kind: input, shape index: {}]
  %s1 = inlined_call_operand.vmem [shape: f32[1,32], index: 1, kind: input, shape index: {}]
  %s2 = inlined_call_operand.vmem [shape: f32[1,32], index: 2, kind: input, shape index: {}]
  %s3 = inlined_call_operand.vmem [shape: bf16[32,128], index: 3, kind: input, shape index: {}]
  %s4 = inlined_call_operand.vmem [shape: f32[1,128], index: 4, kind: input, shape index: {}]
  %s5 = inlined_call_operand.vmem [shape: bf16[128,32], index: 5, kind: input, shape index: {}]
  %s6 = inlined_call_operand.vmem [shape: f32[1,32], index: 6, kind: input, shape index: {}]
  %s7 = inlined_call_operand.vmem [shape: bf16[128,32], index: 7, kind: output, shape index: {}]
  %s8 = sld [smem:[#allocation0]]
  $region38: #{cvt_stage_forward.11} parent=0
    _
  %s10 = ssub.s32 1, %s8
  %s11 = scalar_select 0, %s10, %s8
  // Predicated region
  $region2: #{cvt_stage_forward.11} parent=0 // pred_check
    _
  $region3: #{cvt_stage_forward.11} parent=0 // pred_check_branch
    %13 = sbr.rel (0) target = $region5
  $region4: #{cvt_stage_forward.11} parent=0 // pred_region
    _
  $region5: #{cvt_stage_forward.11} parent=0 // pred_fallthru
    _
  // Predicated region
  $region6: #{cvt_stage_forward.11} parent=0 // pred_check
    _
  $region7: #{cvt_stage_forward.11} parent=0 // pred_check_branch
    %15 = sbr.rel (0) target = $region9
  $region8: #{cvt_stage_forward.11} parent=0 // pred_region
    _
  $region9: #{cvt_stage_forward.11} parent=0 // pred_fallthru
    _
  // Predicated region
  $region10: #{cvt_stage_forward.11} parent=0 // pred_check
    _
  $region11: #{cvt_stage_forward.11} parent=0 // pred_check_branch
    %17 = sbr.rel (0) target = $region13
  $region12: #{cvt_stage_forward.11} parent=0 // pred_region
    _
  $region13: #{cvt_stage_forward.11} parent=0 // pred_fallthru
    _
  // Predicated region
  $region14: #{cvt_stage_forward.11} parent=0 // pred_check
    _
  $region15: #{cvt_stage_forward.11} parent=0 // pred_check_branch
    %19 = sbr.rel (0) target = $region17
  $region16: #{cvt_stage_forward.11} parent=0 // pred_region
    _
  $region17: #{cvt_stage_forward.11} parent=0 // pred_fallthru
    _
  // Predicated region
  $region18: #{cvt_stage_forward.11} parent=0 // pred_check
    _
  $region19: #{cvt_stage_forward.11} parent=0 // pred_check_branch
    %21 = sbr.rel (0) target = $region21
  $region20: #{cvt_stage_forward.11} parent=0 // pred_region
    _
  $region21: #{cvt_stage_forward.11} parent=0 // pred_fallthru
    _
  // Predicated region
  $region22: #{cvt_stage_forward.11} parent=0 // pred_check
    _
  $region23: #{cvt_stage_forward.11} parent=0 // pred_check_branch
    %23 = sbr.rel (0) target = $region25
  $region24: #{cvt_stage_forward.11} parent=0 // pred_region
    _
  $region25: #{cvt_stage_forward.11} parent=0 // pred_fallthru
    _
  // Predicated region
  $region26: #{cvt_stage_forward.11} parent=0 // pred_check
    _
  $region27: #{cvt_stage_forward.11} parent=0 // pred_check_branch
    %25 = sbr.rel (0) target = $region29
  $region28: #{cvt_stage_forward.11} parent=0 // pred_region
    _
  $region29: #{cvt_stage_forward.11} parent=0 // pred_fallthru
    _
  %v27 = vld [vmem:[%s0] sm:$0xf]
  %v28 = vld [vmem:[%s0 + $0x4] sm:$0xf]
  %v29 = vld [vmem:[%s0 + $0x8] sm:$0xf]
  %v30 = vld [vmem:[%s0 + $0xc] sm:$0xf]
  %v31 = vld [vmem:[%s0 + $0x10] sm:$0xf]
  %v32 = vld [vmem:[%s0 + $0x14] sm:$0xf]
  %v33 = vld [vmem:[%s0 + $0x18] sm:$0xf]
  %v34 = vld [vmem:[%s0 + $0x1c] sm:$0xf]
  %v35 = vld [vmem:[%s0 + $0x20] sm:$0xf]
  %v36 = vld [vmem:[%s0 + $0x24] sm:$0xf]
  %v37 = vld [vmem:[%s0 + $0x28] sm:$0xf]
  %v38 = vld [vmem:[%s0 + $0x2c] sm:$0xf]
  %v39 = vld [vmem:[%s0 + $0x30] sm:$0xf]
  %v40 = vld [vmem:[%s0 + $0x34] sm:$0xf]
  %v41 = vld [vmem:[%s0 + $0x38] sm:$0xf]
  %v42 = vld [vmem:[%s0 + $0x3c] sm:$0xf]
  %v43 = vunpack.c.l.bf16 %v27
  %v44 = vunpack.c.l.bf16 %v28
  %v45 = vunpack.c.l.bf16 %v29
  %v46 = vunpack.c.l.bf16 %v30
  %v47 = vunpack.c.l.bf16 %v31
  %v48 = vunpack.c.l.bf16 %v32
  %v49 = vunpack.c.l.bf16 %v33
  %v50 = vunpack.c.l.bf16 %v34
  %v51 = vunpack.c.l.bf16 %v35
  %v52 = vunpack.c.l.bf16 %v36
  %v53 = vunpack.c.l.bf16 %v37
  %v54 = vunpack.c.l.bf16 %v38
  %v55 = vunpack.c.l.bf16 %v39
  %v56 = vunpack.c.l.bf16 %v40
  %v57 = vunpack.c.l.bf16 %v41
  %v58 = vunpack.c.l.bf16 %v42
  %vm59 = vcmask 261120
  %v60 = vsel %vm59, %v43, 0.0
  %61 = vadd.xlane.f32.xlu0 %v60
  %v62 = vpop.xlane.xlu0 %61
  %v63 = vsel %vm59, %v44, 0.0
  %64 = vadd.xlane.f32.xlu0 %v63
  %v65 = vpop.xlane.xlu0 %64
  %v66 = vsel %vm59, %v45, 0.0
  %67 = vadd.xlane.f32.xlu0 %v66
  %v68 = vpop.xlane.xlu0 %67
  %v69 = vsel %vm59, %v46, 0.0
  %70 = vadd.xlane.f32.xlu0 %v69
  %v71 = vpop.xlane.xlu0 %70
  %v72 = vsel %vm59, %v47, 0.0
  %73 = vadd.xlane.f32.xlu0 %v72
  %v74 = vpop.xlane.xlu0 %73
  %v75 = vsel %vm59, %v48, 0.0
  %76 = vadd.xlane.f32.xlu0 %v75
  %v77 = vpop.xlane.xlu0 %76
  %v78 = vsel %vm59, %v49, 0.0
  %79 = vadd.xlane.f32.xlu0 %v78
  %v80 = vpop.xlane.xlu0 %79
  %v81 = vsel %vm59, %v50, 0.0
  %82 = vadd.xlane.f32.xlu0 %v81
  %v83 = vpop.xlane.xlu0 %82
  %v84 = vsel %vm59, %v51, 0.0
  %85 = vadd.xlane.f32.xlu0 %v84
  %v86 = vpop.xlane.xlu0 %85
  %v87 = vsel %vm59, %v52, 0.0
  %88 = vadd.xlane.f32.xlu0 %v87
  %v89 = vpop.xlane.xlu0 %88
  %v90 = vsel %vm59, %v53, 0.0
  %91 = vadd.xlane.f32.xlu0 %v90
  %v92 = vpop.xlane.xlu0 %91
  %v93 = vsel %vm59, %v54, 0.0
  %94 = vadd.xlane.f32.xlu0 %v93
  %v95 = vpop.xlane.xlu0 %94
  %v96 = vsel %vm59, %v55, 0.0
  %97 = vadd.xlane.f32.xlu0 %v96
  %v98 = vpop.xlane.xlu0 %97
  %v99 = vsel %vm59, %v56, 0.0
  %100 = vadd.xlane.f32.xlu0 %v99
  %v101 = vpop.xlane.xlu0 %100
  %v102 = vsel %vm59, %v57, 0.0
  %103 = vadd.xlane.f32.xlu0 %v102
  %v104 = vpop.xlane.xlu0 %103
  %v105 = vsel %vm59, %v58, 0.0
  %106 = vadd.xlane.f32.xlu0 %v105
  %v107 = vpop.xlane.xlu0 %106
  %v108 = vrcp.pop 32.0
  %v109 = vmul.f32 %v62, %v108
  %v110 = vmul.f32 %v65, %v108
  %v111 = vmul.f32 %v68, %v108
  %v112 = vmul.f32 %v71, %v108
  %v113 = vmul.f32 %v74, %v108
  %v114 = vmul.f32 %v77, %v108
  %v115 = vmul.f32 %v80, %v108
  %v116 = vmul.f32 %v83, %v108
  %v117 = vmul.f32 %v86, %v108
  %v118 = vmul.f32 %v89, %v108
  %v119 = vmul.f32 %v92, %v108
  %v120 = vmul.f32 %v95, %v108
  %v121 = vmul.f32 %v98, %v108
  %v122 = vmul.f32 %v101, %v108
  %v123 = vmul.f32 %v104, %v108
  %v124 = vmul.f32 %v107, %v108
  %v125 = vsub.f32 %v43, %v109
  %v126 = vsub.f32 %v44, %v110
  %v127 = vsub.f32 %v45, %v111
  %v128 = vsub.f32 %v46, %v112
  %v129 = vsub.f32 %v47, %v113
  %v130 = vsub.f32 %v48, %v114
  %v131 = vsub.f32 %v49, %v115
  %v132 = vsub.f32 %v50, %v116
  %v133 = vsub.f32 %v51, %v117
  %v134 = vsub.f32 %v52, %v118
  %v135 = vsub.f32 %v53, %v119
  %v136 = vsub.f32 %v54, %v120
  %v137 = vsub.f32 %v55, %v121
  %v138 = vsub.f32 %v56, %v122
  %v139 = vsub.f32 %v57, %v123
  %v140 = vsub.f32 %v58, %v124
  %v141 = vmul.f32 %v125, %v125
  %v142 = vmul.f32 %v126, %v126
  %v143 = vmul.f32 %v127, %v127
  %v144 = vmul.f32 %v128, %v128
  %v145 = vmul.f32 %v129, %v129
  %v146 = vmul.f32 %v130, %v130
  %v147 = vmul.f32 %v131, %v131
  %v148 = vmul.f32 %v132, %v132
  %v149 = vmul.f32 %v133, %v133
  %v150 = vmul.f32 %v134, %v134
  %v151 = vmul.f32 %v135, %v135
  %v152 = vmul.f32 %v136, %v136
  %v153 = vmul.f32 %v137, %v137
  %v154 = vmul.f32 %v138, %v138
  %v155 = vmul.f32 %v139, %v139
  %v156 = vmul.f32 %v140, %v140
  %v157 = vsel %vm59, %v141, 0.0
  %158 = vadd.xlane.f32.xlu0 %v157
  %v159 = vpop.xlane.xlu0 %158
  %v160 = vsel %vm59, %v142, 0.0
  %161 = vadd.xlane.f32.xlu0 %v160
  %v162 = vpop.xlane.xlu0 %161
  %v163 = vsel %vm59, %v143, 0.0
  %164 = vadd.xlane.f32.xlu0 %v163
  %v165 = vpop.xlane.xlu0 %164
  %v166 = vsel %vm59, %v144, 0.0
  %167 = vadd.xlane.f32.xlu0 %v166
  %v168 = vpop.xlane.xlu0 %167
  %v169 = vsel %vm59, %v145, 0.0
  %170 = vadd.xlane.f32.xlu0 %v169
  %v171 = vpop.xlane.xlu0 %170
  %v172 = vsel %vm59, %v146, 0.0
  %173 = vadd.xlane.f32.xlu0 %v172
  %v174 = vpop.xlane.xlu0 %173
  %v175 = vsel %vm59, %v147, 0.0
  %176 = vadd.xlane.f32.xlu0 %v175
  %v177 = vpop.xlane.xlu0 %176
  %v178 = vsel %vm59, %v148, 0.0
  %179 = vadd.xlane.f32.xlu0 %v178
  %v180 = vpop.xlane.xlu0 %179
  %v181 = vsel %vm59, %v149, 0.0
  %182 = vadd.xlane.f32.xlu0 %v181
  %v183 = vpop.xlane.xlu0 %182
  %v184 = vsel %vm59, %v150, 0.0
  %185 = vadd.xlane.f32.xlu0 %v184
  %v186 = vpop.xlane.xlu0 %185
  %v187 = vsel %vm59, %v151, 0.0
  %188 = vadd.xlane.f32.xlu0 %v187
  %v189 = vpop.xlane.xlu0 %188
  %v190 = vsel %vm59, %v152, 0.0
  %191 = vadd.xlane.f32.xlu0 %v190
  %v192 = vpop.xlane.xlu0 %191
  %v193 = vsel %vm59, %v153, 0.0
  %194 = vadd.xlane.f32.xlu0 %v193
  %v195 = vpop.xlane.xlu0 %194
  %v196 = vsel %vm59, %v154, 0.0
  %197 = vadd.xlane.f32.xlu0 %v196
  %v198 = vpop.xlane.xlu0 %197
  %v199 = vsel %vm59, %v155, 0.0
  %200 = vadd.xlane.f32.xlu0 %v199
  %v201 = vpop.xlane.xlu0 %200
  %v202 = vsel %vm59, %v156, 0.0
  %203 = vadd.xlane.f32.xlu0 %v202
  %v204 = vpop.xlane.xlu0 %203
  %v205 = vmul.f32 %v159, %v108
  %v206 = vmul.f32 %v162, %v108
  %v207 = vmul.f32 %v165, %v108
  %v208 = vmul.f32 %v168, %v108
  %v209 = vmul.f32 %v171, %v108
  %v210 = vmul.f32 %v174, %v108
  %v211 = vmul.f32 %v177, %v108
  %v212 = vmul.f32 %v180, %v108
  %v213 = vmul.f32 %v183, %v108
  %v214 = vmul.f32 %v186, %v108
  %v215 = vmul.f32 %v189, %v108
  %v216 = vmul.f32 %v192, %v108
  %v217 = vmul.f32 %v195, %v108
  %v218 = vmul.f32 %v198, %v108
  %v219 = vmul.f32 %v201, %v108
  %v220 = vmul.f32 %v204, %v108
  %v221 = vadd.f32 %v205, 1e-05
  %v222 = vadd.f32 %v206, 1e-05
  %v223 = vadd.f32 %v207, 1e-05
  %v224 = vadd.f32 %v208, 1e-05
  %v225 = vadd.f32 %v209, 1e-05
  %v226 = vadd.f32 %v210, 1e-05
  %v227 = vadd.f32 %v211, 1e-05
  %v228 = vadd.f32 %v212, 1e-05
  %v229 = vadd.f32 %v213, 1e-05
  %v230 = vadd.f32 %v214, 1e-05
  %v231 = vadd.f32 %v215, 1e-05
  %v232 = vadd.f32 %v216, 1e-05
  %v233 = vadd.f32 %v217, 1e-05
  %v234 = vadd.f32 %v218, 1e-05
  %v235 = vadd.f32 %v219, 1e-05
  %v236 = vadd.f32 %v220, 1e-05
  %v237 = vrsqrt.pop %v221
  %v238 = vrsqrt.pop %v222
  %v239 = vrsqrt.pop %v223
  %v240 = vrsqrt.pop %v224
  %v241 = vrsqrt.pop %v225
  %v242 = vrsqrt.pop %v226
  %v243 = vrsqrt.pop %v227
  %v244 = vrsqrt.pop %v228
  %v245 = vrsqrt.pop %v229
  %v246 = vrsqrt.pop %v230
  %v247 = vrsqrt.pop %v231
  %v248 = vrsqrt.pop %v232
  %v249 = vrsqrt.pop %v233
  %v250 = vrsqrt.pop %v234
  %v251 = vrsqrt.pop %v235
  %v252 = vrsqrt.pop %v236
  %v253 = vmul.f32 %v125, %v237
  %v254 = vmul.f32 %v126, %v238
  %v255 = vmul.f32 %v127, %v239
  %v256 = vmul.f32 %v128, %v240
  %v257 = vmul.f32 %v129, %v241
  %v258 = vmul.f32 %v130, %v242
  %v259 = vmul.f32 %v131, %v243
  %v260 = vmul.f32 %v132, %v244
  %v261 = vmul.f32 %v133, %v245
  %v262 = vmul.f32 %v134, %v246
  %v263 = vmul.f32 %v135, %v247
  %v264 = vmul.f32 %v136, %v248
  %v265 = vmul.f32 %v137, %v249
  %v266 = vmul.f32 %v138, %v250
  %v267 = vmul.f32 %v139, %v251
  %v268 = vmul.f32 %v140, %v252
  %v269 = vld [vmem:[%s1] sm:$0x1]
  %v271 = vlaneseq
  %v272 = vshrl.u32 %v271, 7
  %v273 = vsub.s32 0, %v272
  %v274 = vrot.slane %v269, %v273
  %v276 = vmul.f32 %v253, %v274
  %v277 = vmul.f32 %v254, %v274
  %v278 = vmul.f32 %v255, %v274
  %v279 = vmul.f32 %v256, %v274
  %v280 = vmul.f32 %v257, %v274
  %v281 = vmul.f32 %v258, %v274
  %v282 = vmul.f32 %v259, %v274
  %v283 = vmul.f32 %v260, %v274
  %v284 = vmul.f32 %v261, %v274
  %v285 = vmul.f32 %v262, %v274
  %v286 = vmul.f32 %v263, %v274
  %v287 = vmul.f32 %v264, %v274
  %v288 = vmul.f32 %v265, %v274
  %v289 = vmul.f32 %v266, %v274
  %v290 = vmul.f32 %v267, %v274
  %v291 = vmul.f32 %v268, %v274
  %v292 = vld [vmem:[%s2] sm:$0x1]
  %v294 = vlaneseq
  %v295 = vshrl.u32 %v294, 7
  %v296 = vsub.s32 0, %v295
  %v297 = vrot.slane %v292, %v296
  %v299 = vadd.f32 %v276, %v297
  %v300 = vadd.f32 %v277, %v297
  %v301 = vadd.f32 %v278, %v297
  %v302 = vadd.f32 %v279, %v297
  %v303 = vadd.f32 %v280, %v297
  %v304 = vadd.f32 %v281, %v297
  %v305 = vadd.f32 %v282, %v297
  %v306 = vadd.f32 %v283, %v297
  %v307 = vadd.f32 %v284, %v297
  %v308 = vadd.f32 %v285, %v297
  %v309 = vadd.f32 %v286, %v297
  %v310 = vadd.f32 %v287, %v297
  %v311 = vadd.f32 %v288, %v297
  %v312 = vadd.f32 %v289, %v297
  %v313 = vadd.f32 %v290, %v297
  %v314 = vadd.f32 %v291, %v297
  %v315 = vpack.c.bf16 %v300, %v299
  %v316 = vpack.c.bf16 %v302, %v301
  %v317 = vpack.c.bf16 %v304, %v303
  %v318 = vpack.c.bf16 %v306, %v305
  %v319 = vpack.c.bf16 %v308, %v307
  %v320 = vpack.c.bf16 %v310, %v309
  %v321 = vpack.c.bf16 %v312, %v311
  %v322 = vpack.c.bf16 %v314, %v313
  %v323 = vld [vmem:[%s3] sm:$0xf]
  %v324 = vld [vmem:[%s3 + $0x4] sm:$0xf]
  %v325 = vld [vmem:[%s3 + $0x8] sm:$0xf]
  %v326 = vld [vmem:[%s3 + $0xc] sm:$0xf]
  %v327 = vld [vmem:[%s4] sm:$0x1]
  %v329 = vlaneseq
  %v330 = vshrl.u32 %v329, 7
  %v331 = vsub.s32 0, %v330
  %v332 = vrot.slane %v327, %v331
  %v338 = vunpack.c.l.b16 %v323
  %v339 = vunpack.c.l.b16 %v324
  %v340 = vunpack.c.l.b16 %v325
  %v341 = vunpack.c.l.b16 %v326
  %v342 = vpack.c.b16 %v339, %v338
  %v343 = vpack.c.b16 %v341, %v340
  %v347 = vsel %vm59, %v315, 0
  %v350 = vsel %vm59, %v316, 0
  %v353 = vsel %vm59, %v317, 0
  %v356 = vsel %vm59, %v318, 0
  %v359 = vsel %vm59, %v319, 0
  %v362 = vsel %vm59, %v320, 0
  %v365 = vsel %vm59, %v321, 0
  %v368 = vsel %vm59, %v322, 0
  %370 = vmatprep.subr.bf16.mxu0 0
  %371 = vmatpush1.bf16.msra.mxu0 %v342
  %372 = vmatprep.subr.bf16.mxu0 0
  %373 = vmatpush1.bf16.msra.mxu0 %v343
  %374 = vmatprep.subr.bf16.mxu0 0
  %375 = vmatpush1.bf16.msra.mxu0 0
  %376 = vmatprep.subr.bf16.mxu0 0
  %377 = vmatpush1.bf16.msra.mxu0 0
  %378 = vmatprep.subr.bf16.mxu0 0
  %379 = vmatpush1.bf16.msra.mxu0 0
  %380 = vmatprep.subr.bf16.mxu0 0
  %381 = vmatpush1.bf16.msra.mxu0 0
  %382 = vmatprep.subr.bf16.mxu0 0
  %383 = vmatpush1.bf16.msra.mxu0 0
  %384 = vmatprep.subr.bf16.mxu0 0
  %385 = vmatpush1.bf16.msra.mxu0 0
  %386 = vmatprep.subr.bf16.mxu0 0
  %387 = vmatpush1.bf16.msra.mxu0 0
  %388 = vmatprep.subr.bf16.mxu0 0
  %389 = vmatpush1.bf16.msra.mxu0 0
  %390 = vmatprep.subr.bf16.mxu0 0
  %391 = vmatpush1.bf16.msra.mxu0 0
  %392 = vmatprep.subr.bf16.mxu0 0
  %393 = vmatpush1.bf16.msra.mxu0 0
  %394 = vmatprep.subr.bf16.mxu0 0
  %395 = vmatpush1.bf16.msra.mxu0 0
  %396 = vmatprep.subr.bf16.mxu0 0
  %397 = vmatpush1.bf16.msra.mxu0 0
  %398 = vmatprep.subr.bf16.mxu0 0
  %399 = vmatpush1.bf16.msra.mxu0 0
  %400 = vmatprep.subr.bf16.mxu0 0
  %401 = vmatpush1.bf16.msra.mxu0 0
  %402 = vmatprep.mubr.bf16.mxu0 0
  %403 = vmatmul.mubr.bf16.gmra.mrb[0].mxu0 %v347
  %v404 = vpop.f32.mrb[0].mxu0
  %v405 = vadd.f32 %v332, %v404
  %v406 = vpop.f32.mrb[0].mxu0
  %v407 = vpop.f32.mrb[0].mxu0
  %v408 = vadd.f32 %v332, %v407
  %v409 = vpop.f32.mrb[0].mxu0
  %410 = vmatprep.mubr.bf16.mxu0 0
  %411 = vmatmul.mubr.bf16.gmra.mrb[0].mxu0 %v350
  %v412 = vpop.f32.mrb[0].mxu0
  %v413 = vadd.f32 %v332, %v412
  %v414 = vpop.f32.mrb[0].mxu0
  %v415 = vpop.f32.mrb[0].mxu0
  %v416 = vadd.f32 %v332, %v415
  %v417 = vpop.f32.mrb[0].mxu0
  %418 = vmatprep.mubr.bf16.mxu0 0
  %419 = vmatmul.mubr.bf16.gmra.mrb[0].mxu0 %v353
  %v420 = vpop.f32.mrb[0].mxu0
  %v421 = vadd.f32 %v332, %v420
  %v422 = vpop.f32.mrb[0].mxu0
  %v423 = vpop.f32.mrb[0].mxu0
  %v424 = vadd.f32 %v332, %v423
  %v425 = vpop.f32.mrb[0].mxu0
  %426 = vmatprep.mubr.bf16.mxu0 0
  %427 = vmatmul.mubr.bf16.gmra.mrb[0].mxu0 %v356
  %v428 = vpop.f32.mrb[0].mxu0
  %v429 = vadd.f32 %v332, %v428
  %v430 = vpop.f32.mrb[0].mxu0
  %v431 = vpop.f32.mrb[0].mxu0
  %v432 = vadd.f32 %v332, %v431
  %v433 = vpop.f32.mrb[0].mxu0
  %434 = vmatprep.mubr.bf16.mxu0 0
  %435 = vmatmul.mubr.bf16.gmra.mrb[0].mxu0 %v359
  %v436 = vpop.f32.mrb[0].mxu0
  %v437 = vadd.f32 %v332, %v436
  %v438 = vpop.f32.mrb[0].mxu0
  %v439 = vpop.f32.mrb[0].mxu0
  %v440 = vadd.f32 %v332, %v439
  %v441 = vpop.f32.mrb[0].mxu0
  %442 = vmatprep.mubr.bf16.mxu0 0
  %443 = vmatmul.mubr.bf16.gmra.mrb[0].mxu0 %v362
  %v444 = vpop.f32.mrb[0].mxu0
  %v445 = vadd.f32 %v332, %v444
  %v446 = vpop.f32.mrb[0].mxu0
  %v447 = vpop.f32.mrb[0].mxu0
  %v448 = vadd.f32 %v332, %v447
  %v449 = vpop.f32.mrb[0].mxu0
  %450 = vmatprep.mubr.bf16.mxu0 0
  %451 = vmatmul.mubr.bf16.gmra.mrb[0].mxu0 %v365
  %v452 = vpop.f32.mrb[0].mxu0
  %v453 = vadd.f32 %v332, %v452
  %v454 = vpop.f32.mrb[0].mxu0
  %v455 = vpop.f32.mrb[0].mxu0
  %v456 = vadd.f32 %v332, %v455
  %v457 = vpop.f32.mrb[0].mxu0
  %458 = vmatprep.mubr.bf16.mxu0 0
  %459 = vmatmul.mubr.bf16.gmra.mrb[0].mxu0 %v368
  %v460 = vpop.f32.mrb[0].mxu0
  %v461 = vadd.f32 %v332, %v460
  %v462 = vpop.f32.mrb[0].mxu0
  %v463 = vpop.f32.mrb[0].mxu0
  %v464 = vadd.f32 %v332, %v463
  %v465 = vpop.f32.mrb[0].mxu0
  %466 = vdwg.mxu0
  %v467 = vmul.f32 %v405, 0.5
  %v468 = vmul.f32 %v408, 0.5
  %v469 = vmul.f32 %v413, 0.5
  %v470 = vmul.f32 %v416, 0.5
  %v471 = vmul.f32 %v421, 0.5
  %v472 = vmul.f32 %v424, 0.5
  %v473 = vmul.f32 %v429, 0.5
  %v474 = vmul.f32 %v432, 0.5
  %v475 = vmul.f32 %v437, 0.5
  %v476 = vmul.f32 %v440, 0.5
  %v477 = vmul.f32 %v445, 0.5
  %v478 = vmul.f32 %v448, 0.5
  %v479 = vmul.f32 %v453, 0.5
  %v480 = vmul.f32 %v456, 0.5
  %v481 = vmul.f32 %v461, 0.5
  %v482 = vmul.f32 %v464, 0.5
  %v483 = vmul.f32 %v405, 0.044715
  %v484 = vmul.f32 %v408, 0.044715
  %v485 = vmul.f32 %v413, 0.044715
  %v486 = vmul.f32 %v416, 0.044715
  %v487 = vmul.f32 %v421, 0.044715
  %v488 = vmul.f32 %v424, 0.044715
  %v489 = vmul.f32 %v429, 0.044715
  %v490 = vmul.f32 %v432, 0.044715
  %v491 = vmul.f32 %v437, 0.044715
  %v492 = vmul.f32 %v440, 0.044715
  %v493 = vmul.f32 %v445, 0.044715
  %v494 = vmul.f32 %v448, 0.044715
  %v495 = vmul.f32 %v453, 0.044715
  %v496 = vmul.f32 %v456, 0.044715
  %v497 = vmul.f32 %v461, 0.044715
  %v498 = vmul.f32 %v464, 0.044715
  %v499 = vmul.f32 %v483, %v405
  %v500 = vmul.f32 %v484, %v408
  %v501 = vmul.f32 %v485, %v413
  %v502 = vmul.f32 %v486, %v416
  %v503 = vmul.f32 %v487, %v421
  %v504 = vmul.f32 %v488, %v424
  %v505 = vmul.f32 %v489, %v429
  %v506 = vmul.f32 %v490, %v432
  %v507 = vmul.f32 %v491, %v437
  %v508 = vmul.f32 %v492, %v440
  %v509 = vmul.f32 %v493, %v445
  %v510 = vmul.f32 %v494, %v448
  %v511 = vmul.f32 %v495, %v453
  %v512 = vmul.f32 %v496, %v456
  %v513 = vmul.f32 %v497, %v461
  %v514 = vmul.f32 %v498, %v464
  %v515 = vmul.f32 %v499, %v405
  %v516 = vmul.f32 %v500, %v408
  %v517 = vmul.f32 %v501, %v413
  %v518 = vmul.f32 %v502, %v416
  %v519 = vmul.f32 %v503, %v421
  %v520 = vmul.f32 %v504, %v424
  %v521 = vmul.f32 %v505, %v429
  %v522 = vmul.f32 %v506, %v432
  %v523 = vmul.f32 %v507, %v437
  %v524 = vmul.f32 %v508, %v440
  %v525 = vmul.f32 %v509, %v445
  %v526 = vmul.f32 %v510, %v448
  %v527 = vmul.f32 %v511, %v453
  %v528 = vmul.f32 %v512, %v456
  %v529 = vmul.f32 %v513, %v461
  %v530 = vmul.f32 %v514, %v464
  %v531 = vadd.f32 %v405, %v515
  %v532 = vadd.f32 %v408, %v516
  %v533 = vadd.f32 %v413, %v517
  %v534 = vadd.f32 %v416, %v518
  %v535 = vadd.f32 %v421, %v519
  %v536 = vadd.f32 %v424, %v520
  %v537 = vadd.f32 %v429, %v521
  %v538 = vadd.f32 %v432, %v522
  %v539 = vadd.f32 %v437, %v523
  %v540 = vadd.f32 %v440, %v524
  %v541 = vadd.f32 %v445, %v525
  %v542 = vadd.f32 %v448, %v526
  %v543 = vadd.f32 %v453, %v527
  %v544 = vadd.f32 %v456, %v528
  %v545 = vadd.f32 %v461, %v529
  %v546 = vadd.f32 %v464, %v530
  %v547 = vmul.f32 %v531, 0.7978846
  %v548 = vmul.f32 %v532, 0.7978846
  %v549 = vmul.f32 %v533, 0.7978846
  %v550 = vmul.f32 %v534, 0.7978846
  %v551 = vmul.f32 %v535, 0.7978846
  %v552 = vmul.f32 %v536, 0.7978846
  %v553 = vmul.f32 %v537, 0.7978846
  %v554 = vmul.f32 %v538, 0.7978846
  %v555 = vmul.f32 %v539, 0.7978846
  %v556 = vmul.f32 %v540, 0.7978846
  %v557 = vmul.f32 %v541, 0.7978846
  %v558 = vmul.f32 %v542, 0.7978846
  %v559 = vmul.f32 %v543, 0.7978846
  %v560 = vmul.f32 %v544, 0.7978846
  %v561 = vmul.f32 %v545, 0.7978846
  %v562 = vmul.f32 %v546, 0.7978846
  %v563 = vtanh.pop %v547
  %v564 = vtanh.pop %v548
  %v565 = vtanh.pop %v549
  %v566 = vtanh.pop %v550
  %v567 = vtanh.pop %v551
  %v568 = vtanh.pop %v552
  %v569 = vtanh.pop %v553
  %v570 = vtanh.pop %v554
  %v571 = vtanh.pop %v555
  %v572 = vtanh.pop %v556
  %v573 = vtanh.pop %v557
  %v574 = vtanh.pop %v558
  %v575 = vtanh.pop %v559
  %v576 = vtanh.pop %v560
  %v577 = vtanh.pop %v561
  %v578 = vtanh.pop %v562
  %v579 = vadd.f32 %v563, 1.0
  %v580 = vadd.f32 %v564, 1.0
  %v581 = vadd.f32 %v565, 1.0
  %v582 = vadd.f32 %v566, 1.0
  %v583 = vadd.f32 %v567, 1.0
  %v584 = vadd.f32 %v568, 1.0
  %v585 = vadd.f32 %v569, 1.0
  %v586 = vadd.f32 %v570, 1.0
  %v587 = vadd.f32 %v571, 1.0
  %v588 = vadd.f32 %v572, 1.0
  %v589 = vadd.f32 %v573, 1.0
  %v590 = vadd.f32 %v574, 1.0
  %v591 = vadd.f32 %v575, 1.0
  %v592 = vadd.f32 %v576, 1.0
  %v593 = vadd.f32 %v577, 1.0
  %v594 = vadd.f32 %v578, 1.0
  %v595 = vmul.f32 %v467, %v579
  %v596 = vmul.f32 %v468, %v580
  %v597 = vmul.f32 %v469, %v581
  %v598 = vmul.f32 %v470, %v582
  %v599 = vmul.f32 %v471, %v583
  %v600 = vmul.f32 %v472, %v584
  %v601 = vmul.f32 %v473, %v585
  %v602 = vmul.f32 %v474, %v586
  %v603 = vmul.f32 %v475, %v587
  %v604 = vmul.f32 %v476, %v588
  %v605 = vmul.f32 %v477, %v589
  %v606 = vmul.f32 %v478, %v590
  %v607 = vmul.f32 %v479, %v591
  %v608 = vmul.f32 %v480, %v592
  %v609 = vmul.f32 %v481, %v593
  %v610 = vmul.f32 %v482, %v594
  %v611 = vpack.c.bf16 %v596, %v595
  %v612 = vpack.c.bf16 %v598, %v597
  %v613 = vpack.c.bf16 %v600, %v599
  %v614 = vpack.c.bf16 %v602, %v601
  %v615 = vpack.c.bf16 %v604, %v603
  %v616 = vpack.c.bf16 %v606, %v605
  %v617 = vpack.c.bf16 %v608, %v607
  %v618 = vpack.c.bf16 %v610, %v609
  %v619 = vld [vmem:[%s5] sm:$0xf]
  %v620 = vld [vmem:[%s5 + $0x4] sm:$0xf]
  %v621 = vld [vmem:[%s5 + $0x8] sm:$0xf]
  %v622 = vld [vmem:[%s5 + $0xc] sm:$0xf]
  %v623 = vld [vmem:[%s5 + $0x10] sm:$0xf]
  %v624 = vld [vmem:[%s5 + $0x14] sm:$0xf]
  %v625 = vld [vmem:[%s5 + $0x18] sm:$0xf]
  %v626 = vld [vmem:[%s5 + $0x1c] sm:$0xf]
  %v627 = vld [vmem:[%s5 + $0x20] sm:$0xf]
  %v628 = vld [vmem:[%s5 + $0x24] sm:$0xf]
  %v629 = vld [vmem:[%s5 + $0x28] sm:$0xf]
  %v630 = vld [vmem:[%s5 + $0x2c] sm:$0xf]
  %v631 = vld [vmem:[%s5 + $0x30] sm:$0xf]
  %v632 = vld [vmem:[%s5 + $0x34] sm:$0xf]
  %v633 = vld [vmem:[%s5 + $0x38] sm:$0xf]
  %v634 = vld [vmem:[%s5 + $0x3c] sm:$0xf]
  %v635 = vld [vmem:[%s6] sm:$0x1]
  %v637 = vlaneseq
  %v638 = vshrl.u32 %v637, 7
  %v639 = vsub.s32 0, %v638
  %v640 = vrot.slane %v635, %v639
  %v658 = vunpack.c.l.b16 %v619
  %v659 = vunpack.c.l.b16 %v620
  %v660 = vunpack.c.l.b16 %v621
  %v661 = vunpack.c.l.b16 %v622
  %v662 = vunpack.c.l.b16 %v623
  %v663 = vunpack.c.l.b16 %v624
  %v664 = vunpack.c.l.b16 %v625
  %v665 = vunpack.c.l.b16 %v626
  %v666 = vunpack.c.l.b16 %v627
  %v667 = vunpack.c.l.b16 %v628
  %v668 = vunpack.c.l.b16 %v629
  %v669 = vunpack.c.l.b16 %v630
  %v670 = vunpack.c.l.b16 %v631
  %v671 = vunpack.c.l.b16 %v632
  %v672 = vunpack.c.l.b16 %v633
  %v673 = vunpack.c.l.b16 %v634
  %v674 = vpack.c.b16 %v659, %v658
  %v675 = vpack.c.b16 %v661, %v660
  %v676 = vpack.c.b16 %v663, %v662
  %v677 = vpack.c.b16 %v665, %v664
  %v678 = vpack.c.b16 %v667, %v666
  %v679 = vpack.c.b16 %v669, %v668
  %v680 = vpack.c.b16 %v671, %v670
  %v681 = vpack.c.b16 %v673, %v672
  %690 = vmatprep.subr.bf16.mxu0 0
  %691 = vmatpush1.bf16.msra.mxu0 %v674
  %692 = vmatprep.subr.bf16.mxu0 0
  %693 = vmatpush1.bf16.msra.mxu0 %v675
  %694 = vmatprep.subr.bf16.mxu0 0
  %695 = vmatpush1.bf16.msra.mxu0 %v676
  %696 = vmatprep.subr.bf16.mxu0 0
  %697 = vmatpush1.bf16.msra.mxu0 %v677
  %698 = vmatprep.subr.bf16.mxu0 0
  %699 = vmatpush1.bf16.msra.mxu0 %v678
  %700 = vmatprep.subr.bf16.mxu0 0
  %701 = vmatpush1.bf16.msra.mxu0 %v679
  %702 = vmatprep.subr.bf16.mxu0 0
  %703 = vmatpush1.bf16.msra.mxu0 %v680
  %704 = vmatprep.subr.bf16.mxu0 0
  %705 = vmatpush1.bf16.msra.mxu0 %v681
  %706 = vmatprep.subr.bf16.mxu0 0
  %707 = vmatpush1.bf16.msra.mxu0 0
  %708 = vmatprep.subr.bf16.mxu0 0
  %709 = vmatpush1.bf16.msra.mxu0 0
  %710 = vmatprep.subr.bf16.mxu0 0
  %711 = vmatpush1.bf16.msra.mxu0 0
  %712 = vmatprep.subr.bf16.mxu0 0
  %713 = vmatpush1.bf16.msra.mxu0 0
  %714 = vmatprep.subr.bf16.mxu0 0
  %715 = vmatpush1.bf16.msra.mxu0 0
  %716 = vmatprep.subr.bf16.mxu0 0
  %717 = vmatpush1.bf16.msra.mxu0 0
  %718 = vmatprep.subr.bf16.mxu0 0
  %719 = vmatpush1.bf16.msra.mxu0 0
  %720 = vmatprep.subr.bf16.mxu0 0
  %721 = vmatpush1.bf16.msra.mxu0 0
  %722 = vmatprep.mubr.bf16.mxu0 0
  %723 = vmatmul.mubr.bf16.gmra.mrb[0].mxu0 %v611
  %v724 = vpop.f32.mrb[0].mxu0
  %v725 = vadd.f32 %v640, %v724
  %v726 = vpop.f32.mrb[0].mxu0
  %v727 = vpop.f32.mrb[0].mxu0
  %v728 = vadd.f32 %v640, %v727
  %v729 = vpop.f32.mrb[0].mxu0
  %730 = vmatprep.mubr.bf16.mxu0 0
  %731 = vmatmul.mubr.bf16.gmra.mrb[0].mxu0 %v612
  %v732 = vpop.f32.mrb[0].mxu0
  %v733 = vadd.f32 %v640, %v732
  %v734 = vpop.f32.mrb[0].mxu0
  %v735 = vpop.f32.mrb[0].mxu0
  %v736 = vadd.f32 %v640, %v735
  %v737 = vpop.f32.mrb[0].mxu0
  %738 = vmatprep.mubr.bf16.mxu0 0
  %739 = vmatmul.mubr.bf16.gmra.mrb[0].mxu0 %v613
  %v740 = vpop.f32.mrb[0].mxu0
  %v741 = vadd.f32 %v640, %v740
  %v742 = vpop.f32.mrb[0].mxu0
  %v743 = vpop.f32.mrb[0].mxu0
  %v744 = vadd.f32 %v640, %v743
  %v745 = vpop.f32.mrb[0].mxu0
  %746 = vmatprep.mubr.bf16.mxu0 0
  %747 = vmatmul.mubr.bf16.gmra.mrb[0].mxu0 %v614
  %v748 = vpop.f32.mrb[0].mxu0
  %v749 = vadd.f32 %v640, %v748
  %v750 = vpop.f32.mrb[0].mxu0
  %v751 = vpop.f32.mrb[0].mxu0
  %v752 = vadd.f32 %v640, %v751
  %v753 = vpop.f32.mrb[0].mxu0
  %754 = vmatprep.mubr.bf16.mxu0 0
  %755 = vmatmul.mubr.bf16.gmra.mrb[0].mxu0 %v615
  %v756 = vpop.f32.mrb[0].mxu0
  %v757 = vadd.f32 %v640, %v756
  %v758 = vpop.f32.mrb[0].mxu0
  %v759 = vpop.f32.mrb[0].mxu0
  %v760 = vadd.f32 %v640, %v759
  %v761 = vpop.f32.mrb[0].mxu0
  %762 = vmatprep.mubr.bf16.mxu0 0
  %763 = vmatmul.mubr.bf16.gmra.mrb[0].mxu0 %v616
  %v764 = vpop.f32.mrb[0].mxu0
  %v765 = vadd.f32 %v640, %v764
  %v766 = vpop.f32.mrb[0].mxu0
  %v767 = vpop.f32.mrb[0].mxu0
  %v768 = vadd.f32 %v640, %v767
  %v769 = vpop.f32.mrb[0].mxu0
  %770 = vmatprep.mubr.bf16.mxu0 0
  %771 = vmatmul.mubr.bf16.gmra.mrb[0].mxu0 %v617
  %v772 = vpop.f32.mrb[0].mxu0
  %v773 = vadd.f32 %v640, %v772
  %v774 = vpop.f32.mrb[0].mxu0
  %v775 = vpop.f32.mrb[0].mxu0
  %v776 = vadd.f32 %v640, %v775
  %v777 = vpop.f32.mrb[0].mxu0
  %778 = vmatprep.mubr.bf16.mxu0 0
  %779 = vmatmul.mubr.bf16.gmra.mrb[0].mxu0 %v618
  %v780 = vpop.f32.mrb[0].mxu0
  %v781 = vadd.f32 %v640, %v780
  %v782 = vpop.f32.mrb[0].mxu0
  %v783 = vpop.f32.mrb[0].mxu0
  %v784 = vadd.f32 %v640, %v783
  %v785 = vpop.f32.mrb[0].mxu0
  %786 = vdwg.mxu0
  %v787 = vadd.f32 %v725, %v43
  %v788 = vadd.f32 %v728, %v44
  %v789 = vadd.f32 %v733, %v45
  %v790 = vadd.f32 %v736, %v46
  %v791 = vadd.f32 %v741, %v47
  %v792 = vadd.f32 %v744, %v48
  %v793 = vadd.f32 %v749, %v49
  %v794 = vadd.f32 %v752, %v50
  %v795 = vadd.f32 %v757, %v51
  %v796 = vadd.f32 %v760, %v52
  %v797 = vadd.f32 %v765, %v53
  %v798 = vadd.f32 %v768, %v54
  %v799 = vadd.f32 %v773, %v55
  %v800 = vadd.f32 %v776, %v56
  %v801 = vadd.f32 %v781, %v57
  %v802 = vadd.f32 %v784, %v58
  %v803 = vpack.c.bf16 %v788, %v787
  %v804 = vpack.c.bf16 %v790, %v789
  %v805 = vpack.c.bf16 %v792, %v791
  %v806 = vpack.c.bf16 %v794, %v793
  %v807 = vpack.c.bf16 %v796, %v795
  %v808 = vpack.c.bf16 %v798, %v797
  %v809 = vpack.c.bf16 %v800, %v799
  %v810 = vpack.c.bf16 %v802, %v801
  %v819 = vunpack.c.l.b16 %v803
  %v820 = vunpack.c.h.b16 %v803
  %v821 = vunpack.c.l.b16 %v804
  %v822 = vunpack.c.h.b16 %v804
  %v823 = vunpack.c.l.b16 %v805
  %v824 = vunpack.c.h.b16 %v805
  %v825 = vunpack.c.l.b16 %v806
  %v826 = vunpack.c.h.b16 %v806
  %v827 = vunpack.c.l.b16 %v807
  %v828 = vunpack.c.h.b16 %v807
  %v829 = vunpack.c.l.b16 %v808
  %v830 = vunpack.c.h.b16 %v808
  %v831 = vunpack.c.l.b16 %v809
  %v832 = vunpack.c.h.b16 %v809
  %v833 = vunpack.c.l.b16 %v810
  %v834 = vunpack.c.h.b16 %v810
  %v835 = vpack.c.b16 %v819, %v819
  %v836 = vpack.c.b16 %v820, %v820
  %v837 = vpack.c.b16 %v821, %v821
  %v838 = vpack.c.b16 %v822, %v822
  %v839 = vpack.c.b16 %v823, %v823
  %v840 = vpack.c.b16 %v824, %v824
  %v841 = vpack.c.b16 %v825, %v825
  %v842 = vpack.c.b16 %v826, %v826
  %v843 = vpack.c.b16 %v827, %v827
  %v844 = vpack.c.b16 %v828, %v828
  %v845 = vpack.c.b16 %v829, %v829
  %v846 = vpack.c.b16 %v830, %v830
  %v847 = vpack.c.b16 %v831, %v831
  %v848 = vpack.c.b16 %v832, %v832
  %v849 = vpack.c.b16 %v833, %v833
  %v850 = vpack.c.b16 %v834, %v834
  %vm867 = vcmask 257024
  %868 = vst.msk [vmem:[%s7] sm:$0xf] %vm867, %v835
  %869 = vst.msk [vmem:[%s7 + $0x4] sm:$0xf] %vm867, %v836
  %870 = vst.msk [vmem:[%s7 + $0x8] sm:$0xf] %vm867, %v837
  %871 = vst.msk [vmem:[%s7 + $0xc] sm:$0xf] %vm867, %v838
  %872 = vst.msk [vmem:[%s7 + $0x10] sm:$0xf] %vm867, %v839
  %873 = vst.msk [vmem:[%s7 + $0x14] sm:$0xf] %vm867, %v840
  %874 = vst.msk [vmem:[%s7 + $0x18] sm:$0xf] %vm867, %v841
  %875 = vst.msk [vmem:[%s7 + $0x1c] sm:$0xf] %vm867, %v842
  %876 = vst.msk [vmem:[%s7 + $0x20] sm:$0xf] %vm867, %v843
  %877 = vst.msk [vmem:[%s7 + $0x24] sm:$0xf] %vm867, %v844
  %878 = vst.msk [vmem:[%s7 + $0x28] sm:$0xf] %vm867, %v845
  %879 = vst.msk [vmem:[%s7 + $0x2c] sm:$0xf] %vm867, %v846
  %880 = vst.msk [vmem:[%s7 + $0x30] sm:$0xf] %vm867, %v847
  %881 = vst.msk [vmem:[%s7 + $0x34] sm:$0xf] %vm867, %v848
  %882 = vst.msk [vmem:[%s7 + $0x38] sm:$0xf] %vm867, %v849
  %883 = vst.msk [vmem:[%s7 + $0x3c] sm:$0xf] %vm867, %v850
  // Predicated region
  $region30: #{cvt_stage_forward.11} parent=0 // pred_check
    _
  $region31: #{cvt_stage_forward.11} parent=0 // pred_check_branch
    %885 = sbr.rel (0) target = $region33
  $region32: #{cvt_stage_forward.11} parent=0 // pred_region
    _
  $region33: #{cvt_stage_forward.11} parent=0 // pred_fallthru
    _
  // Predicated region
  $region34: #{cvt_stage_forward.11} parent=0 // pred_check
    _
  $region35: #{cvt_stage_forward.11} parent=0 // pred_check_branch
    %887 = sbr.rel (0) target = $region37
  $region36: #{cvt_stage_forward.11} parent=0 // pred_region
    _
  $region37: #{cvt_stage_forward.11} parent=0 // pred_fallthru
    _

// kernel: cvt_stage_forward.15
$region0: #{cvt_stage_forward.15}
  #allocation0 [shape = 'u32[]', space=smem, size = 0x4, offset = 0x4, fixed_abs, tag = 'smem constant byte address 0x4 - core index']
  #allocation1 [shape = 'u32[144,128]{1,0:T(1,128)}', space=vmem, size = 0x12000, scoped, tag = 'internal scratch']
  %s0 = inlined_call_operand.vmem [shape: bf16[128,32], index: 0, kind: input, shape index: {}]
  %s1 = inlined_call_operand.vmem [shape: f32[1,32], index: 1, kind: input, shape index: {}]
  %s2 = inlined_call_operand.vmem [shape: f32[1,32], index: 2, kind: input, shape index: {}]
  %s3 = inlined_call_operand.vmem [shape: f32[128,32], index: 3, kind: output, shape index: {}]
  %s4 = sld [smem:[#allocation0]]
  $region22: #{cvt_stage_forward.15} parent=0
    _
  %s6 = ssub.s32 1, %s4
  %s7 = scalar_select 0, %s6, %s4
  // Predicated region
  $region2: #{cvt_stage_forward.15} parent=0 // pred_check
    _
  $region3: #{cvt_stage_forward.15} parent=0 // pred_check_branch
    %9 = sbr.rel (0) target = $region5
  $region4: #{cvt_stage_forward.15} parent=0 // pred_region
    _
  $region5: #{cvt_stage_forward.15} parent=0 // pred_fallthru
    _
  // Predicated region
  $region6: #{cvt_stage_forward.15} parent=0 // pred_check
    _
  $region7: #{cvt_stage_forward.15} parent=0 // pred_check_branch
    %11 = sbr.rel (0) target = $region9
  $region8: #{cvt_stage_forward.15} parent=0 // pred_region
    _
  $region9: #{cvt_stage_forward.15} parent=0 // pred_fallthru
    _
  // Predicated region
  $region10: #{cvt_stage_forward.15} parent=0 // pred_check
    _
  $region11: #{cvt_stage_forward.15} parent=0 // pred_check_branch
    %13 = sbr.rel (0) target = $region13
  $region12: #{cvt_stage_forward.15} parent=0 // pred_region
    _
  $region13: #{cvt_stage_forward.15} parent=0 // pred_fallthru
    _
  %v14 = vld [vmem:[%s0] sm:$0xf]
  %v15 = vld [vmem:[%s0 + $0x4] sm:$0xf]
  %v16 = vld [vmem:[%s0 + $0x8] sm:$0xf]
  %v17 = vld [vmem:[%s0 + $0xc] sm:$0xf]
  %v18 = vld [vmem:[%s0 + $0x10] sm:$0xf]
  %v19 = vld [vmem:[%s0 + $0x14] sm:$0xf]
  %v20 = vld [vmem:[%s0 + $0x18] sm:$0xf]
  %v21 = vld [vmem:[%s0 + $0x1c] sm:$0xf]
  %v22 = vld [vmem:[%s0 + $0x20] sm:$0xf]
  %v23 = vld [vmem:[%s0 + $0x24] sm:$0xf]
  %v24 = vld [vmem:[%s0 + $0x28] sm:$0xf]
  %v25 = vld [vmem:[%s0 + $0x2c] sm:$0xf]
  %v26 = vld [vmem:[%s0 + $0x30] sm:$0xf]
  %v27 = vld [vmem:[%s0 + $0x34] sm:$0xf]
  %v28 = vld [vmem:[%s0 + $0x38] sm:$0xf]
  %v29 = vld [vmem:[%s0 + $0x3c] sm:$0xf]
  %v30 = vunpack.c.l.bf16 %v14
  %v31 = vunpack.c.l.bf16 %v15
  %v32 = vunpack.c.l.bf16 %v16
  %v33 = vunpack.c.l.bf16 %v17
  %v34 = vunpack.c.l.bf16 %v18
  %v35 = vunpack.c.l.bf16 %v19
  %v36 = vunpack.c.l.bf16 %v20
  %v37 = vunpack.c.l.bf16 %v21
  %v38 = vunpack.c.l.bf16 %v22
  %v39 = vunpack.c.l.bf16 %v23
  %v40 = vunpack.c.l.bf16 %v24
  %v41 = vunpack.c.l.bf16 %v25
  %v42 = vunpack.c.l.bf16 %v26
  %v43 = vunpack.c.l.bf16 %v27
  %v44 = vunpack.c.l.bf16 %v28
  %v45 = vunpack.c.l.bf16 %v29
  %vm46 = vcmask 261120
  %v47 = vsel %vm46, %v30, 0.0
  %48 = vadd.xlane.f32.xlu0 %v47
  %v49 = vpop.xlane.xlu0 %48
  %v50 = vsel %vm46, %v31, 0.0
  %51 = vadd.xlane.f32.xlu0 %v50
  %v52 = vpop.xlane.xlu0 %51
  %v53 = vsel %vm46, %v32, 0.0
  %54 = vadd.xlane.f32.xlu0 %v53
  %v55 = vpop.xlane.xlu0 %54
  %v56 = vsel %vm46, %v33, 0.0
  %57 = vadd.xlane.f32.xlu0 %v56
  %v58 = vpop.xlane.xlu0 %57
  %v59 = vsel %vm46, %v34, 0.0
  %60 = vadd.xlane.f32.xlu0 %v59
  %v61 = vpop.xlane.xlu0 %60
  %v62 = vsel %vm46, %v35, 0.0
  %63 = vadd.xlane.f32.xlu0 %v62
  %v64 = vpop.xlane.xlu0 %63
  %v65 = vsel %vm46, %v36, 0.0
  %66 = vadd.xlane.f32.xlu0 %v65
  %v67 = vpop.xlane.xlu0 %66
  %v68 = vsel %vm46, %v37, 0.0
  %69 = vadd.xlane.f32.xlu0 %v68
  %v70 = vpop.xlane.xlu0 %69
  %v71 = vsel %vm46, %v38, 0.0
  %72 = vadd.xlane.f32.xlu0 %v71
  %v73 = vpop.xlane.xlu0 %72
  %v74 = vsel %vm46, %v39, 0.0
  %75 = vadd.xlane.f32.xlu0 %v74
  %v76 = vpop.xlane.xlu0 %75
  %v77 = vsel %vm46, %v40, 0.0
  %78 = vadd.xlane.f32.xlu0 %v77
  %v79 = vpop.xlane.xlu0 %78
  %v80 = vsel %vm46, %v41, 0.0
  %81 = vadd.xlane.f32.xlu0 %v80
  %v82 = vpop.xlane.xlu0 %81
  %v83 = vsel %vm46, %v42, 0.0
  %84 = vadd.xlane.f32.xlu0 %v83
  %v85 = vpop.xlane.xlu0 %84
  %v86 = vsel %vm46, %v43, 0.0
  %87 = vadd.xlane.f32.xlu0 %v86
  %v88 = vpop.xlane.xlu0 %87
  %v89 = vsel %vm46, %v44, 0.0
  %90 = vadd.xlane.f32.xlu0 %v89
  %v91 = vpop.xlane.xlu0 %90
  %v92 = vsel %vm46, %v45, 0.0
  %93 = vadd.xlane.f32.xlu0 %v92
  %v94 = vpop.xlane.xlu0 %93
  %v95 = vrcp.pop 32.0
  %v96 = vmul.f32 %v49, %v95
  %v97 = vmul.f32 %v52, %v95
  %v98 = vmul.f32 %v55, %v95
  %v99 = vmul.f32 %v58, %v95
  %v100 = vmul.f32 %v61, %v95
  %v101 = vmul.f32 %v64, %v95
  %v102 = vmul.f32 %v67, %v95
  %v103 = vmul.f32 %v70, %v95
  %v104 = vmul.f32 %v73, %v95
  %v105 = vmul.f32 %v76, %v95
  %v106 = vmul.f32 %v79, %v95
  %v107 = vmul.f32 %v82, %v95
  %v108 = vmul.f32 %v85, %v95
  %v109 = vmul.f32 %v88, %v95
  %v110 = vmul.f32 %v91, %v95
  %v111 = vmul.f32 %v94, %v95
  %v112 = vsub.f32 %v30, %v96
  %v113 = vsub.f32 %v31, %v97
  %v114 = vsub.f32 %v32, %v98
  %v115 = vsub.f32 %v33, %v99
  %v116 = vsub.f32 %v34, %v100
  %v117 = vsub.f32 %v35, %v101
  %v118 = vsub.f32 %v36, %v102
  %v119 = vsub.f32 %v37, %v103
  %v120 = vsub.f32 %v38, %v104
  %v121 = vsub.f32 %v39, %v105
  %v122 = vsub.f32 %v40, %v106
  %v123 = vsub.f32 %v41, %v107
  %v124 = vsub.f32 %v42, %v108
  %v125 = vsub.f32 %v43, %v109
  %v126 = vsub.f32 %v44, %v110
  %v127 = vsub.f32 %v45, %v111
  %v128 = vmul.f32 %v112, %v112
  %v129 = vmul.f32 %v113, %v113
  %v130 = vmul.f32 %v114, %v114
  %v131 = vmul.f32 %v115, %v115
  %v132 = vmul.f32 %v116, %v116
  %v133 = vmul.f32 %v117, %v117
  %v134 = vmul.f32 %v118, %v118
  %v135 = vmul.f32 %v119, %v119
  %v136 = vmul.f32 %v120, %v120
  %v137 = vmul.f32 %v121, %v121
  %v138 = vmul.f32 %v122, %v122
  %v139 = vmul.f32 %v123, %v123
  %v140 = vmul.f32 %v124, %v124
  %v141 = vmul.f32 %v125, %v125
  %v142 = vmul.f32 %v126, %v126
  %v143 = vmul.f32 %v127, %v127
  %v144 = vsel %vm46, %v128, 0.0
  %145 = vadd.xlane.f32.xlu0 %v144
  %v146 = vpop.xlane.xlu0 %145
  %v147 = vsel %vm46, %v129, 0.0
  %148 = vadd.xlane.f32.xlu0 %v147
  %v149 = vpop.xlane.xlu0 %148
  %v150 = vsel %vm46, %v130, 0.0
  %151 = vadd.xlane.f32.xlu0 %v150
  %v152 = vpop.xlane.xlu0 %151
  %v153 = vsel %vm46, %v131, 0.0
  %154 = vadd.xlane.f32.xlu0 %v153
  %v155 = vpop.xlane.xlu0 %154
  %v156 = vsel %vm46, %v132, 0.0
  %157 = vadd.xlane.f32.xlu0 %v156
  %v158 = vpop.xlane.xlu0 %157
  %v159 = vsel %vm46, %v133, 0.0
  %160 = vadd.xlane.f32.xlu0 %v159
  %v161 = vpop.xlane.xlu0 %160
  %v162 = vsel %vm46, %v134, 0.0
  %163 = vadd.xlane.f32.xlu0 %v162
  %v164 = vpop.xlane.xlu0 %163
  %v165 = vsel %vm46, %v135, 0.0
  %166 = vadd.xlane.f32.xlu0 %v165
  %v167 = vpop.xlane.xlu0 %166
  %v168 = vsel %vm46, %v136, 0.0
  %169 = vadd.xlane.f32.xlu0 %v168
  %v170 = vpop.xlane.xlu0 %169
  %v171 = vsel %vm46, %v137, 0.0
  %172 = vadd.xlane.f32.xlu0 %v171
  %v173 = vpop.xlane.xlu0 %172
  %v174 = vsel %vm46, %v138, 0.0
  %175 = vadd.xlane.f32.xlu0 %v174
  %v176 = vpop.xlane.xlu0 %175
  %v177 = vsel %vm46, %v139, 0.0
  %178 = vadd.xlane.f32.xlu0 %v177
  %v179 = vpop.xlane.xlu0 %178
  %v180 = vsel %vm46, %v140, 0.0
  %181 = vadd.xlane.f32.xlu0 %v180
  %v182 = vpop.xlane.xlu0 %181
  %v183 = vsel %vm46, %v141, 0.0
  %184 = vadd.xlane.f32.xlu0 %v183
  %v185 = vpop.xlane.xlu0 %184
  %v186 = vsel %vm46, %v142, 0.0
  %187 = vadd.xlane.f32.xlu0 %v186
  %v188 = vpop.xlane.xlu0 %187
  %v189 = vsel %vm46, %v143, 0.0
  %190 = vadd.xlane.f32.xlu0 %v189
  %v191 = vpop.xlane.xlu0 %190
  %v192 = vmul.f32 %v146, %v95
  %v193 = vmul.f32 %v149, %v95
  %v194 = vmul.f32 %v152, %v95
  %v195 = vmul.f32 %v155, %v95
  %v196 = vmul.f32 %v158, %v95
  %v197 = vmul.f32 %v161, %v95
  %v198 = vmul.f32 %v164, %v95
  %v199 = vmul.f32 %v167, %v95
  %v200 = vmul.f32 %v170, %v95
  %v201 = vmul.f32 %v173, %v95
  %v202 = vmul.f32 %v176, %v95
  %v203 = vmul.f32 %v179, %v95
  %v204 = vmul.f32 %v182, %v95
  %v205 = vmul.f32 %v185, %v95
  %v206 = vmul.f32 %v188, %v95
  %v207 = vmul.f32 %v191, %v95
  %v208 = vadd.f32 %v192, 1e-05
  %v209 = vadd.f32 %v193, 1e-05
  %v210 = vadd.f32 %v194, 1e-05
  %v211 = vadd.f32 %v195, 1e-05
  %v212 = vadd.f32 %v196, 1e-05
  %v213 = vadd.f32 %v197, 1e-05
  %v214 = vadd.f32 %v198, 1e-05
  %v215 = vadd.f32 %v199, 1e-05
  %v216 = vadd.f32 %v200, 1e-05
  %v217 = vadd.f32 %v201, 1e-05
  %v218 = vadd.f32 %v202, 1e-05
  %v219 = vadd.f32 %v203, 1e-05
  %v220 = vadd.f32 %v204, 1e-05
  %v221 = vadd.f32 %v205, 1e-05
  %v222 = vadd.f32 %v206, 1e-05
  %v223 = vadd.f32 %v207, 1e-05
  %v224 = vrsqrt.pop %v208
  %v225 = vrsqrt.pop %v209
  %v226 = vrsqrt.pop %v210
  %v227 = vrsqrt.pop %v211
  %v228 = vrsqrt.pop %v212
  %v229 = vrsqrt.pop %v213
  %v230 = vrsqrt.pop %v214
  %v231 = vrsqrt.pop %v215
  %v232 = vrsqrt.pop %v216
  %v233 = vrsqrt.pop %v217
  %v234 = vrsqrt.pop %v218
  %v235 = vrsqrt.pop %v219
  %v236 = vrsqrt.pop %v220
  %v237 = vrsqrt.pop %v221
  %v238 = vrsqrt.pop %v222
  %v239 = vrsqrt.pop %v223
  %v240 = vmul.f32 %v112, %v224
  %v241 = vmul.f32 %v113, %v225
  %v242 = vmul.f32 %v114, %v226
  %v243 = vmul.f32 %v115, %v227
  %v244 = vmul.f32 %v116, %v228
  %v245 = vmul.f32 %v117, %v229
  %v246 = vmul.f32 %v118, %v230
  %v247 = vmul.f32 %v119, %v231
  %v248 = vmul.f32 %v120, %v232
  %v249 = vmul.f32 %v121, %v233
  %v250 = vmul.f32 %v122, %v234
  %v251 = vmul.f32 %v123, %v235
  %v252 = vmul.f32 %v124, %v236
  %v253 = vmul.f32 %v125, %v237
  %v254 = vmul.f32 %v126, %v238
  %v255 = vmul.f32 %v127, %v239
  %v256 = vld [vmem:[%s1] sm:$0x1]
  %v258 = vlaneseq
  %v259 = vshrl.u32 %v258, 7
  %v260 = vsub.s32 0, %v259
  %v261 = vrot.slane %v256, %v260
  %v263 = vmul.f32 %v240, %v261
  %v264 = vmul.f32 %v241, %v261
  %v265 = vmul.f32 %v242, %v261
  %v266 = vmul.f32 %v243, %v261
  %v267 = vmul.f32 %v244, %v261
  %v268 = vmul.f32 %v245, %v261
  %v269 = vmul.f32 %v246, %v261
  %v270 = vmul.f32 %v247, %v261
  %v271 = vmul.f32 %v248, %v261
  %v272 = vmul.f32 %v249, %v261
  %v273 = vmul.f32 %v250, %v261
  %v274 = vmul.f32 %v251, %v261
  %v275 = vmul.f32 %v252, %v261
  %v276 = vmul.f32 %v253, %v261
  %v277 = vmul.f32 %v254, %v261
  %v278 = vmul.f32 %v255, %v261
  %v279 = vld [vmem:[%s2] sm:$0x1]
  %v281 = vlaneseq
  %v282 = vshrl.u32 %v281, 7
  %v283 = vsub.s32 0, %v282
  %v284 = vrot.slane %v279, %v283
  %v286 = vadd.f32 %v263, %v284
  %v287 = vadd.f32 %v264, %v284
  %v288 = vadd.f32 %v265, %v284
  %v289 = vadd.f32 %v266, %v284
  %v290 = vadd.f32 %v267, %v284
  %v291 = vadd.f32 %v268, %v284
  %v292 = vadd.f32 %v269, %v284
  %v293 = vadd.f32 %v270, %v284
  %v294 = vadd.f32 %v271, %v284
  %v295 = vadd.f32 %v272, %v284
  %v296 = vadd.f32 %v273, %v284
  %v297 = vadd.f32 %v274, %v284
  %v298 = vadd.f32 %v275, %v284
  %v299 = vadd.f32 %v276, %v284
  %v300 = vadd.f32 %v277, %v284
  %v301 = vadd.f32 %v278, %v284
  %302 = vst.msk [vmem:[%s3] sm:$0xff] %vm46, %v286
  %303 = vst.msk [vmem:[%s3 + $0x8] sm:$0xff] %vm46, %v287
  %304 = vst.msk [vmem:[%s3 + $0x10] sm:$0xff] %vm46, %v288
  %305 = vst.msk [vmem:[%s3 + $0x18] sm:$0xff] %vm46, %v289
  %306 = vst.msk [vmem:[%s3 + $0x20] sm:$0xff] %vm46, %v290
  %307 = vst.msk [vmem:[%s3 + $0x28] sm:$0xff] %vm46, %v291
  %308 = vst.msk [vmem:[%s3 + $0x30] sm:$0xff] %vm46, %v292
  %309 = vst.msk [vmem:[%s3 + $0x38] sm:$0xff] %vm46, %v293
  %310 = vst.msk [vmem:[%s3 + $0x40] sm:$0xff] %vm46, %v294
  %311 = vst.msk [vmem:[%s3 + $0x48] sm:$0xff] %vm46, %v295
  %312 = vst.msk [vmem:[%s3 + $0x50] sm:$0xff] %vm46, %v296
  %313 = vst.msk [vmem:[%s3 + $0x58] sm:$0xff] %vm46, %v297
  %314 = vst.msk [vmem:[%s3 + $0x60] sm:$0xff] %vm46, %v298
  %315 = vst.msk [vmem:[%s3 + $0x68] sm:$0xff] %vm46, %v299
  %316 = vst.msk [vmem:[%s3 + $0x70] sm:$0xff] %vm46, %v300
  %317 = vst.msk [vmem:[%s3 + $0x78] sm:$0xff] %vm46, %v301
  // Predicated region
  $region14: #{cvt_stage_forward.15} parent=0 // pred_check
    _
  $region15: #{cvt_stage_forward.15} parent=0 // pred_check_branch
    %319 = sbr.rel (0) target = $region17
  $region16: #{cvt_stage_forward.15} parent=0 // pred_region
    _
  $region17: #{cvt_stage_forward.15} parent=0 // pred_fallthru
    _
  // Predicated region
  $region18: #{cvt_stage_forward.15} parent=0 // pred_check
    _
  $region19: #{cvt_stage_forward.15} parent=0 // pred_check_branch
    %321 = sbr.rel (0) target = $region21
  $region20: #{cvt_stage_forward.15} parent=0 // pred_region
    _
  $region21: #{cvt_stage_forward.15} parent=0 // pred_fallthru
    _

</llo_original>
